<compile_context>
chip_gen: v7x
topology: tpu7x:2x2x1
jax: 0.10.0
libtpu: 0.0.40
codegen_flags: <defaults>
</compile_context>

<pallas_src>
import math
from functools import partial

import jax
import jax.numpy as jnp
from jax.experimental import pallas as pl
from jax.experimental.pallas import tpu as pltpu

LN_EPS = 1e-6   # norm_layer = partial(nn.LayerNorm, eps=1e-6)
NEG_INF = -1e30


def _round_up(x, m):
    return ((x + m - 1) // m) * m


# ---------------------------------------------------------------------------
# in-kernel helpers (f32 math)
# ---------------------------------------------------------------------------
def _layer_norm(x, g, b, eps=LN_EPS):
    mu = jnp.mean(x, axis=-1, keepdims=True)
    var = jnp.mean((x - mu) ** 2, axis=-1, keepdims=True)
    return (x - mu) * jax.lax.rsqrt(var + eps) * g + b


def _gelu_exact(x):
    # nn.GELU() default = exact erf formulation
    return 0.5 * x * (1.0 + jax.lax.erf(x * (1.0 / math.sqrt(2.0))))


# ---------------------------------------------------------------------------
# Pallas kernels
# ---------------------------------------------------------------------------
def embed_tokens_kernel(p_ref, w_ref, b_ref, cls_ref, pos_ref, o_ref):
    """Patch embedding + bias + pos-embed + cls token + zero padding.

    p_ref:   (1, P, K)   bf16 patches for one batch element
    w_ref:   (K, D)      bf16 patch-projection weight
    b_ref:   (1, D)      f32  patch-projection bias
    cls_ref: (1, D)      f32  cls token
    pos_ref: (P+1, D)    f32  positional embedding (row 0 = cls position)
    o_ref:   (1, Np, D)  bf16 padded token output (Np >= P+1, mult of 16)
    """
    P = p_ref.shape[1]
    D = w_ref.shape[1]
    n_pad = o_ref.shape[1]

    emb = jnp.dot(p_ref[0], w_ref[...], preferred_element_type=jnp.float32)
    emb = emb + b_ref[...] + pos_ref[1:, :]                 # (P, D) f32
    cls_row = cls_ref[...] + pos_ref[0:1, :]                # (1, D) f32

    parts = [cls_row, emb]
    if n_pad > P + 1:
        parts.append(jnp.zeros((n_pad - P - 1, D), jnp.float32))
    full = jnp.concatenate(parts, axis=0)                   # (Np, D) f32
    o_ref[0] = full.astype(o_ref.dtype)                     # single aligned store


def block_kernel(
    x_ref,
    g1_ref, b1_ref,
    qw_ref, qb_ref, kw_ref, kb_ref, vw_ref, vb_ref,
    pw_ref, pb_ref,
    g2_ref, b2_ref,
    f1w_ref, f1b_ref, f2w_ref, f2b_ref,
    gf_ref, bf_ref,
    o_ref,
    ctx_scr,
    *, num_heads, n_valid, apply_final_norm,
):
    """One transformer Block (LN->MHA->res->LN->MLP->res), optionally fused
    with the final encoder LayerNorm. x block: (Bt, Np, D) bf16."""
    Bt, Np, D = x_ref.shape
    dh = D // num_heads
    M = Bt * Np

    x = x_ref[...].reshape(M, D).astype(jnp.float32)        # f32 residual stream

    # ---- attention branch ----
    h1 = _layer_norm(x, g1_ref[...], b1_ref[...])
    h1b = h1.astype(jnp.bfloat16)

    # full-width QKV projections (best MXU fill); scale pre-folded into Q.
    q = (jnp.dot(h1b, qw_ref[...], preferred_element_type=jnp.float32)
         + qb_ref[...]).astype(jnp.bfloat16)
    k = (jnp.dot(h1b, kw_ref[...], preferred_element_type=jnp.float32)
         + kb_ref[...]).astype(jnp.bfloat16)
    v = (jnp.dot(h1b, vw_ref[...], preferred_element_type=jnp.float32)
         + vb_ref[...]).astype(jnp.bfloat16)

    if n_valid < Np:
        col = jax.lax.broadcasted_iota(jnp.int32, (Np, Np), 1)
        key_mask = col < n_valid
    else:
        key_mask = None

    # per-sample, per-head attention; contexts staged head-by-head into a
    # (M, D) bf16 VMEM scratch, then a single full-depth output projection.
    # TODO(synk): process heads in 128-lane pairs / fori_loop for large H.
    for bt in range(Bt):
        r0 = bt * Np
        for h in range(num_heads):
            c0 = h * dh
            qh = q[r0:r0 + Np, c0:c0 + dh]
            kh = k[r0:r0 + Np, c0:c0 + dh]
            vh = v[r0:r0 + Np, c0:c0 + dh]
            s = jnp.einsum("nd,md->nm", qh, kh,
                           preferred_element_type=jnp.float32)    # (Np, Np) f32
            if key_mask is not None:
                s = jnp.where(key_mask, s, NEG_INF)
            m = jnp.max(s, axis=-1, keepdims=True)
            e = jnp.exp(s - m)
            # approx reciprocal on the EUP slot; ~1e-3 rel error vs exact softmax.
            p = e * pl.reciprocal(jnp.sum(e, axis=-1, keepdims=True), approx=True)
            ctx = jnp.dot(p.astype(jnp.bfloat16), vh,
                          preferred_element_type=jnp.float32)      # (Np, dh)
            ctx_scr[r0:r0 + Np, c0:c0 + dh] = ctx.astype(jnp.bfloat16)

    attn_out = (jnp.dot(ctx_scr[...], pw_ref[...],
                        preferred_element_type=jnp.float32) + pb_ref[...])
    x = x + attn_out                                         # residual 1 (f32)

    # ---- MLP branch ----
    h2 = _layer_norm(x, g2_ref[...], b2_ref[...])
    hid = (jnp.dot(h2.astype(jnp.bfloat16), f1w_ref[...],
                   preferred_element_type=jnp.float32) + f1b_ref[...])
    hid = _gelu_exact(hid)
    mlp = (jnp.dot(hid.astype(jnp.bfloat16), f2w_ref[...],
                   preferred_element_type=jnp.float32) + f2b_ref[...])
    x = x + mlp                                              # residual 2 (f32)

    if apply_final_norm:                                     # fused encoder norm
        x = _layer_norm(x, gf_ref[...], bf_ref[...])

    o_ref[...] = x.reshape(Bt, Np, D).astype(o_ref.dtype)    # bf16 handoff


# ---------------------------------------------------------------------------
# specs / wrappers
# ---------------------------------------------------------------------------
def _weight_spec(arr):
    """Grid-invariant (resident) operand: constant index_map, single buffer."""
    nd = arr.ndim
    idx = lambda b, _nd=nd: (0,) * _nd
    try:
        return pl.BlockSpec(arr.shape, idx, pipeline_mode=pl.Buffered(1))
    except Exception:   # older jax without pipeline_mode / Buffered
        return pl.BlockSpec(arr.shape, idx)


_VMEM_CAP = None


def _vmem_cap_bytes():
    global _VMEM_CAP
    if _VMEM_CAP is None:
        try:
            _VMEM_CAP = int(pltpu.get_tpu_info().vmem_capacity_bytes * 0.85)
        except Exception:
            _VMEM_CAP = 48 << 20   # safe on every generation (v7x: 64 MiB/TC)
    return _VMEM_CAP


def _block_vmem_limit(Bt, Np, D, Hd, wts):
    M = Bt * Np
    io_bytes = 2 * (2 * M * D * 2)                    # in+out bf16 blocks, dbl-buffered
    w_bytes = sum(int(w.size) * w.dtype.itemsize for w in wts)   # Buffered(1): x1
    inter = M * (6 * D + Hd) * 4 + 2 * Np * Np * 4 + M * D * 2   # f32 temps + ctx scratch
    est = io_bytes + w_bytes + inter + (4 << 20)
    return int(min(max(est, 16 << 20), _vmem_cap_bytes()))


def _pick_bt(B):
    """Samples per grid step. Bigger Bt amortizes MXU weight loads, but keep
    >= 2 grid steps when possible so both v7x TensorCores stay fed."""
    if B <= 1:
        return 1
    for bt in (4, 2, 1):
        if B % bt == 0 and B // bt >= 2:
            return bt
    return 1


def run_embed_tokens(patches, w_bf16, bias, cls_tok, pos, n_pad):
    B, P, K = patches.shape
    D = w_bf16.shape[1]
    return pl.pallas_call(
        embed_tokens_kernel,
        out_shape=jax.ShapeDtypeStruct((B, n_pad, D), jnp.bfloat16),
        grid=(B,),
        in_specs=[
            pl.BlockSpec((1, P, K), lambda b: (b, 0, 0)),
            _weight_spec(w_bf16),
            _weight_spec(bias),
            _weight_spec(cls_tok),
            _weight_spec(pos),
        ],
        out_specs=pl.BlockSpec((1, n_pad, D), lambda b: (b, 0, 0)),
        compiler_params=pltpu.CompilerParams(
            dimension_semantics=("parallel",)),
    )(patches, w_bf16, bias, cls_tok, pos)


def run_block(x, wts, num_heads, n_valid, apply_final_norm, Bt):
    B, Np, D = x.shape
    Hd = wts[12].shape[1]                     # fc1_w: (D, Hd)
    x_spec = pl.BlockSpec((Bt, Np, D), lambda b: (b, 0, 0))
    kern = partial(block_kernel, num_heads=num_heads, n_valid=n_valid,
                   apply_final_norm=apply_final_norm)
    return pl.pallas_call(
        kern,
        out_shape=jax.ShapeDtypeStruct(x.shape, x.dtype),
        grid=(B // Bt,),
        in_specs=[x_spec] + [_weight_spec(w) for w in wts],
        out_specs=x_spec,
        scratch_shapes=[pltpu.VMEM((Bt * Np, D), jnp.bfloat16)],   # per-head ctx
        compiler_params=pltpu.CompilerParams(
            dimension_semantics=("parallel",),
            vmem_limit_bytes=_block_vmem_limit(Bt, Np, D, Hd, wts),
        ),
    )(x, *wts)


# ---------------------------------------------------------------------------
# one-time (outside jit) weight preparation
# ---------------------------------------------------------------------------
def prepare_vit_params(params, cfg):
    """Split QKV, fold the attention scale into Q, cast matmul weights to bf16
    (biases / LN params stay f32). Run ONCE at model-load time, not per step."""
    D = cfg["embed_dim"]
    nh = cfg["num_heads"]
    dh = D // nh
    scale = dh ** -0.5

    blocks = []
    for blk in params["blocks"]:
        qkv_w = blk["qkv_w"]                 # (D, 3D), (in, out) layout
        qkv_b = blk["qkv_b"]                 # (1, 3D)
        qw = (qkv_w[:, :D] * scale).astype(jnp.bfloat16)
        kw = qkv_w[:, D:2 * D].astype(jnp.bfloat16)
        vw = qkv_w[:, 2 * D:].astype(jnp.bfloat16)
        qb = qkv_b[:, :D] * scale
        kb = qkv_b[:, D:2 * D]
        vb = qkv_b[:, 2 * D:]
        blocks.append([
            blk["ln1_g"], blk["ln1_b"],
            qw, qb, kw, kb, vw, vb,
            blk["proj_w"].astype(jnp.bfloat16), blk["proj_b"],
            blk["ln2_g"], blk["ln2_b"],
            blk["fc1_w"].astype(jnp.bfloat16), blk["fc1_b"],
            blk["fc2_w"].astype(jnp.bfloat16), blk["fc2_b"],
            params["norm_g"], params["norm_b"],
        ])
    return {
        "patch_w": params["patch_w"].astype(jnp.bfloat16),
        "patch_b": params["patch_b"],
        "cls_token": params["cls_token"].reshape(1, D),
        "pos_embed": params["pos_embed"].reshape(-1, D),
        "blocks": blocks,
    }


# ---------------------------------------------------------------------------
# VisionTransformer forward (encoder only, mask_ratio=None)
# ---------------------------------------------------------------------------
def vit_forward(x_img, prepared, cfg):
    B, C, H, W = x_img.shape
    ps = cfg["patch_size"]
    D = cfg["embed_dim"]
    gh, gw = H // ps, W // ps
    P = gh * gw
    N = P + 1
    n_pad = max(_round_up(N, 16), 16)       # mult of 16: bf16 sublane packing

    # patch extraction (glue): matches Conv2d(kernel=stride=p) weight layout
    # (D, C, p, p) flattened to C*p*p.
    patches = (
        x_img.reshape(B, C, gh, ps, gw, ps)
        .transpose(0, 2, 4, 1, 3, 5)
        .reshape(B, P, C * ps * ps)
    ).astype(jnp.bfloat16)

    x = run_embed_tokens(
        patches,
        prepared["patch_w"],
        prepared["patch_b"],
        prepared["cls_token"],
        prepared["pos_embed"],
        n_pad,
    )                                       # (B, n_pad, D) bf16

    Bt = _pick_bt(B)
    depth = len(prepared["blocks"])
    for i, wts in enumerate(prepared["blocks"]):
        x = run_block(x, wts, cfg["num_heads"], n_valid=N,
                      apply_final_norm=(i == depth - 1), Bt=Bt)

    return x[:, :N, :].astype(jnp.float32)  # drop padded token rows


# ---------------------------------------------------------------------------
# deterministic synthetic parameter init (PyTorch-equivalent layout)
# ---------------------------------------------------------------------------
def make_params(key, cfg):
    C = cfg["in_chans"]
    p = cfg["patch_size"]
    D = cfg["embed_dim"]
    Hd = int(D * cfg["mlp_ratio"])
    P = (cfg["img_size"] // p) ** 2
    K = C * p * p

    ks = iter(jax.random.split(key, 64))
    nrm = lambda shape, s=0.02: s * jax.random.normal(next(ks), shape, jnp.float32)

    params = {
        "patch_w": nrm((K, D), 1.0 / math.sqrt(K)),       # xavier-ish
        "patch_b": jnp.zeros((1, D), jnp.float32),
        "cls_token": nrm((1, 1, D)),
        "pos_embed": nrm((1, P + 1, D)),
        "norm_g": jnp.ones((1, D), jnp.float32),
        "norm_b": jnp.zeros((1, D), jnp.float32),
        "blocks": [],
    }
    for _ in range(cfg["depth"]):
        blk = {
            "ln1_g": jnp.ones((1, D), jnp.float32),
            "ln1_b": jnp.zeros((1, D), jnp.float32),
            "qkv_w": nrm((D, 3 * D)),                     # stored as (in, out)
            "qkv_b": jnp.zeros((1, 3 * D), jnp.float32),  # qkv_bias=True
            "proj_w": nrm((D, D)),
            "proj_b": jnp.zeros((1, D), jnp.float32),
            "ln2_g": jnp.ones((1, D), jnp.float32),
            "ln2_b": jnp.zeros((1, D), jnp.float32),
            "fc1_w": nrm((D, Hd)),
            "fc1_b": jnp.zeros((1, Hd), jnp.float32),
            "fc2_w": nrm((Hd, D)),
            "fc2_b": jnp.zeros((1, D), jnp.float32),
        }
        params["blocks"].append(blk)
    return params


if __name__ == "__main__":
    cfg = dict(
        img_size=16,
        patch_size=8,
        in_chans=3,
        embed_dim=64,
        depth=2,
        num_heads=4,
        mlp_ratio=4.0,
    )
    key = jax.random.PRNGKey(0)
    k_img, k_par = jax.random.split(key)
    x_img = jax.random.normal(k_img, (2, 3, 16, 16), jnp.float32)  # NCHW
    params = make_params(k_par, cfg)
    prepared = prepare_vit_params(params, cfg)   # one-time, outside the jitted step

    fwd = jax.jit(lambda img, p: vit_forward(img, p, cfg))
    out = fwd(x_img, prepared)                   # (B, num_patches+1, embed_dim)
    jax.block_until_ready(out)
    assert out.shape == (2, 5, 64), out.shape
    print("KERNEL_OK")
</pallas_src>

<mosaic_0001>
module attributes {stable_mosaic.version = 11 : i64} {
  func.func @embed_tokens_kernel(%arg0: i32, %arg1: memref<1x4x192xbf16, #tpu.memory_space<vmem>>, %arg2: memref<192x64xbf16, #tpu.memory_space<vmem>>, %arg3: memref<1x64xf32, #tpu.memory_space<vmem>>, %arg4: memref<1x64xf32, #tpu.memory_space<vmem>>, %arg5: memref<5x64xf32, #tpu.memory_space<vmem>>, %arg6: memref<1x16x64xbf16, #tpu.memory_space<vmem>>) attributes {dimension_semantics = [#tpu.dimension_semantics<parallel>], iteration_bounds = array<i64: 2>, scalar_prefetch = 0 : i64, scratch_operands = 0 : i64, tpu.core_type = #tpu.core_type<tc>, window_params = [{transform_indices = @transform_0, window_bounds = array<i64: 1, 4, 192>}, {pipeline_mode = #tpu.pipeline_mode<synchronous>, transform_indices = @transform_1, window_bounds = array<i64: 192, 64>}, {pipeline_mode = #tpu.pipeline_mode<synchronous>, transform_indices = @transform_2, window_bounds = array<i64: 1, 64>}, {pipeline_mode = #tpu.pipeline_mode<synchronous>, transform_indices = @transform_3, window_bounds = array<i64: 1, 64>}, {pipeline_mode = #tpu.pipeline_mode<synchronous>, transform_indices = @transform_4, window_bounds = array<i64: 5, 64>}, {transform_indices = @transform_5, window_bounds = array<i64: 1, 16, 64>}]} {
    %c0 = arith.constant 0 : index
    %c0_0 = arith.constant 0 : index
    %c0_1 = arith.constant 0 : index
    %0 = vector.load %arg1[%c0, %c0_0, %c0_1] : memref<1x4x192xbf16, #tpu.memory_space<vmem>>, vector<1x4x192xbf16>
    %1 = vector.shape_cast %0 : vector<1x4x192xbf16> to vector<4x192xbf16>
    %c0_2 = arith.constant 0 : index
    %c0_3 = arith.constant 0 : index
    %2 = vector.load %arg2[%c0_2, %c0_3] : memref<192x64xbf16, #tpu.memory_space<vmem>>, vector<192x64xbf16>
    %cst = arith.constant dense<0.000000e+00> : vector<4x64xf32>
    %3 = tpu.matmul %1, %2, %cst {dimension_numbers = #tpu.dot_dimension_numbers<[1], [0], [0], [1], [0, 0, 1, 1], [], []>} : vector<4x192xbf16>, vector<192x64xbf16>, vector<4x64xf32> -> vector<4x64xf32>
    %c0_4 = arith.constant 0 : index
    %c0_5 = arith.constant 0 : index
    %4 = vector.load %arg3[%c0_4, %c0_5] : memref<1x64xf32, #tpu.memory_space<vmem>>, vector<1x64xf32>
    %5 = vector.broadcast %4 : vector<1x64xf32> to vector<4x64xf32>
    %6 = arith.addf %3, %5 : vector<4x64xf32>
    %c1 = arith.constant 1 : index
    %c0_6 = arith.constant 0 : index
    %7 = vector.load %arg5[%c1, %c0_6] : memref<5x64xf32, #tpu.memory_space<vmem>>, vector<4x64xf32>
    %8 = arith.addf %6, %7 : vector<4x64xf32>
    %c0_7 = arith.constant 0 : index
    %c0_8 = arith.constant 0 : index
    %9 = vector.load %arg4[%c0_7, %c0_8] : memref<1x64xf32, #tpu.memory_space<vmem>>, vector<1x64xf32>
    %c0_9 = arith.constant 0 : index
    %c0_10 = arith.constant 0 : index
    %10 = vector.load %arg5[%c0_9, %c0_10] : memref<5x64xf32, #tpu.memory_space<vmem>>, vector<1x64xf32>
    %11 = arith.addf %9, %10 : vector<1x64xf32>
    %cst_11 = arith.constant 0.000000e+00 : f32
    %12 = vector.broadcast %cst_11 : f32 to vector<11x64xf32>
    %13 = tpu.concatenate %11, %8, %12 in 0 : vector<1x64xf32>, vector<4x64xf32>, vector<11x64xf32> -> vector<16x64xf32>
    %14 = arith.truncf %13 : vector<16x64xf32> to vector<16x64xbf16>
    %c0_12 = arith.constant 0 : index
    %c0_13 = arith.constant 0 : index
    %c0_14 = arith.constant 0 : index
    %15 = vector.load %arg6[%c0_12, %c0_13, %c0_14] : memref<1x16x64xbf16, #tpu.memory_space<vmem>>, vector<1x16x64xbf16>
    %16 = vector.shape_cast %15 : vector<1x16x64xbf16> to vector<16x64xbf16>
    %17 = vector.shape_cast %14 : vector<16x64xbf16> to vector<1x16x64xbf16>
    tpu.vector_store %arg6[%c0_12, %c0_13, %c0_14], %17 {strides = array<i32>} : memref<1x16x64xbf16, #tpu.memory_space<vmem>>, vector<1x16x64xbf16>,
    return
  }
  func.func @transform_0(%arg0: i32) -> (i32, i32, i32) {
    %c0_i32 = arith.constant 0 : i32
    %c0_i32_0 = arith.constant 0 : i32
    %c0_i32_1 = arith.constant 0 : i32
    return %arg0, %c0_i32, %c0_i32_0 : i32, i32, i32
  }
  func.func @transform_1(%arg0: i32) -> (i32, i32) {
    %c0_i32 = arith.constant 0 : i32
    %c0_i32_0 = arith.constant 0 : i32
    %c0_i32_1 = arith.constant 0 : i32
    return %c0_i32, %c0_i32_0 : i32, i32
  }
  func.func @transform_2(%arg0: i32) -> (i32, i32) {
    %c0_i32 = arith.constant 0 : i32
    %c0_i32_0 = arith.constant 0 : i32
    %c0_i32_1 = arith.constant 0 : i32
    return %c0_i32, %c0_i32_0 : i32, i32
  }
  func.func @transform_3(%arg0: i32) -> (i32, i32) {
    %c0_i32 = arith.constant 0 : i32
    %c0_i32_0 = arith.constant 0 : i32
    %c0_i32_1 = arith.constant 0 : i32
    return %c0_i32, %c0_i32_0 : i32, i32
  }
  func.func @transform_4(%arg0: i32) -> (i32, i32) {
    %c0_i32 = arith.constant 0 : i32
    %c0_i32_0 = arith.constant 0 : i32
    %c0_i32_1 = arith.constant 0 : i32
    return %c0_i32, %c0_i32_0 : i32, i32
  }
  func.func @transform_5(%arg0: i32) -> (i32, i32, i32) {
    %c0_i32 = arith.constant 0 : i32
    %c0_i32_0 = arith.constant 0 : i32
    %c0_i32_1 = arith.constant 0 : i32
    return %arg0, %c0_i32, %c0_i32_0 : i32, i32, i32
  }
}

module attributes {stable_mosaic.version = 11 : i64} {
  func.func @block_kernel(%arg0: i32, %arg1: memref<1x16x64xbf16, #tpu.memory_space<vmem>>, %arg2: memref<1x64xf32, #tpu.memory_space<vmem>>, %arg3: memref<1x64xf32, #tpu.memory_space<vmem>>, %arg4: memref<64x64xbf16, #tpu.memory_space<vmem>>, %arg5: memref<1x64xf32, #tpu.memory_space<vmem>>, %arg6: memref<64x64xbf16, #tpu.memory_space<vmem>>, %arg7: memref<1x64xf32, #tpu.memory_space<vmem>>, %arg8: memref<64x64xbf16, #tpu.memory_space<vmem>>, %arg9: memref<1x64xf32, #tpu.memory_space<vmem>>, %arg10: memref<64x64xbf16, #tpu.memory_space<vmem>>, %arg11: memref<1x64xf32, #tpu.memory_space<vmem>>, %arg12: memref<1x64xf32, #tpu.memory_space<vmem>>, %arg13: memref<1x64xf32, #tpu.memory_space<vmem>>, %arg14: memref<64x256xbf16, #tpu.memory_space<vmem>>, %arg15: memref<1x256xf32, #tpu.memory_space<vmem>>, %arg16: memref<256x64xbf16, #tpu.memory_space<vmem>>, %arg17: memref<1x64xf32, #tpu.memory_space<vmem>>, %arg18: memref<1x64xf32, #tpu.memory_space<vmem>>, %arg19: memref<1x64xf32, #tpu.memory_space<vmem>>, %arg20: memref<1x16x64xbf16, #tpu.memory_space<vmem>>, %arg21: memref<16x64xbf16, #tpu.memory_space<vmem>>) attributes {dimension_semantics = [#tpu.dimension_semantics<parallel>], iteration_bounds = array<i64: 2>, scalar_prefetch = 0 : i64, scratch_operands = 1 : i64, tpu.core_type = #tpu.core_type<tc>, window_params = [{transform_indices = @transform_0, window_bounds = array<i64: 1, 16, 64>}, {pipeline_mode = #tpu.pipeline_mode<synchronous>, transform_indices = @transform_1, window_bounds = array<i64: 1, 64>}, {pipeline_mode = #tpu.pipeline_mode<synchronous>, transform_indices = @transform_2, window_bounds = array<i64: 1, 64>}, {pipeline_mode = #tpu.pipeline_mode<synchronous>, transform_indices = @transform_3, window_bounds = array<i64: 64, 64>}, {pipeline_mode = #tpu.pipeline_mode<synchronous>, transform_indices = @transform_4, window_bounds = array<i64: 1, 64>}, {pipeline_mode = #tpu.pipeline_mode<synchronous>, transform_indices = @transform_5, window_bounds = array<i64: 64, 64>}, {pipeline_mode = #tpu.pipeline_mode<synchronous>, transform_indices = @transform_6, window_bounds = array<i64: 1, 64>}, {pipeline_mode = #tpu.pipeline_mode<synchronous>, transform_indices = @transform_7, window_bounds = array<i64: 64, 64>}, {pipeline_mode = #tpu.pipeline_mode<synchronous>, transform_indices = @transform_8, window_bounds = array<i64: 1, 64>}, {pipeline_mode = #tpu.pipeline_mode<synchronous>, transform_indices = @transform_9, window_bounds = array<i64: 64, 64>}, {pipeline_mode = #tpu.pipeline_mode<synchronous>, transform_indices = @transform_10, window_bounds = array<i64: 1, 64>}, {pipeline_mode = #tpu.pipeline_mode<synchronous>, transform_indices = @transform_11, window_bounds = array<i64: 1, 64>}, {pipeline_mode = #tpu.pipeline_mode<synchronous>, transform_indices = @transform_12, window_bounds = array<i64: 1, 64>}, {pipeline_mode = #tpu.pipeline_mode<synchronous>, transform_indices = @transform_13, window_bounds = array<i64: 64, 256>}, {pipeline_mode = #tpu.pipeline_mode<synchronous>, transform_indices = @transform_14, window_bounds = array<i64: 1, 256>}, {pipeline_mode = #tpu.pipeline_mode<synchronous>, transform_indices = @transform_15, window_bounds = array<i64: 256, 64>}, {pipeline_mode = #tpu.pipeline_mode<synchronous>, transform_indices = @transform_16, window_bounds = array<i64: 1, 64>}, {pipeline_mode = #tpu.pipeline_mode<synchronous>, transform_indices = @transform_17, window_bounds = array<i64: 1, 64>}, {pipeline_mode = #tpu.pipeline_mode<synchronous>, transform_indices = @transform_18, window_bounds = array<i64: 1, 64>}, {transform_indices = @transform_19, window_bounds = array<i64: 1, 16, 64>}]} {
    %c0 = arith.constant 0 : index
    %c0_0 = arith.constant 0 : index
    %c0_1 = arith.constant 0 : index
    %0 = vector.load %arg1[%c0, %c0_0, %c0_1] : memref<1x16x64xbf16, #tpu.memory_space<vmem>>, vector<1x16x64xbf16>
    %1 = vector.shape_cast %0 : vector<1x16x64xbf16> to vector<16x64xbf16>
    %2 = arith.extf %1 : vector<16x64xbf16> to vector<16x64xf32>
    %c0_2 = arith.constant 0 : index
    %c0_3 = arith.constant 0 : index
    %3 = vector.load %arg2[%c0_2, %c0_3] : memref<1x64xf32, #tpu.memory_space<vmem>>, vector<1x64xf32>
    %c0_4 = arith.constant 0 : index
    %c0_5 = arith.constant 0 : index
    %4 = vector.load %arg3[%c0_4, %c0_5] : memref<1x64xf32, #tpu.memory_space<vmem>>, vector<1x64xf32>
    %cst = arith.constant dense<0.000000e+00> : vector<16xf32>
    %5 = vector.multi_reduction <add>, %2, %cst [1] : vector<16x64xf32> to vector<16xf32>
    %6 = vector.shape_cast %5 : vector<16xf32> to vector<16x1xf32>
    %cst_6 = arith.constant 6.400000e+01 : f32
    %7 = vector.broadcast %cst_6 : f32 to vector<16x1xf32>
    %8 = arith.divf %6, %7 : vector<16x1xf32>
    %9 = vector.broadcast %8 : vector<16x1xf32> to vector<16x64xf32>
    %10 = arith.subf %2, %9 : vector<16x64xf32>
    %11 = arith.mulf %10, %10 : vector<16x64xf32>
    %cst_7 = arith.constant dense<0.000000e+00> : vector<16xf32>
    %12 = vector.multi_reduction <add>, %11, %cst_7 [1] : vector<16x64xf32> to vector<16xf32>
    %13 = vector.shape_cast %12 : vector<16xf32> to vector<16x1xf32>
    %cst_8 = arith.constant 6.400000e+01 : f32
    %14 = vector.broadcast %cst_8 : f32 to vector<16x1xf32>
    %15 = arith.divf %13, %14 : vector<16x1xf32>
    %16 = vector.broadcast %8 : vector<16x1xf32> to vector<16x64xf32>
    %17 = arith.subf %2, %16 : vector<16x64xf32>
    %cst_9 = arith.constant 9.99999997E-7 : f32
    %18 = vector.broadcast %cst_9 : f32 to vector<16x1xf32>
    %19 = arith.addf %15, %18 : vector<16x1xf32>
    %20 = math.rsqrt %19 : vector<16x1xf32>
    %21 = vector.broadcast %20 : vector<16x1xf32> to vector<16x64xf32>
    %22 = arith.mulf %17, %21 : vector<16x64xf32>
    %23 = vector.broadcast %3 : vector<1x64xf32> to vector<16x64xf32>
    %24 = arith.mulf %22, %23 : vector<16x64xf32>
    %25 = vector.broadcast %4 : vector<1x64xf32> to vector<16x64xf32>
    %26 = arith.addf %24, %25 : vector<16x64xf32>
    %27 = arith.truncf %26 : vector<16x64xf32> to vector<16x64xbf16>
    %c0_10 = arith.constant 0 : index
    %c0_11 = arith.constant 0 : index
    %28 = vector.load %arg4[%c0_10, %c0_11] : memref<64x64xbf16, #tpu.memory_space<vmem>>, vector<64x64xbf16>
    %cst_12 = arith.constant dense<0.000000e+00> : vector<16x64xf32>
    %29 = tpu.matmul %27, %28, %cst_12 {dimension_numbers = #tpu.dot_dimension_numbers<[1], [0], [0], [1], [0, 0, 1, 1], [], []>} : vector<16x64xbf16>, vector<64x64xbf16>, vector<16x64xf32> -> vector<16x64xf32>
    %c0_13 = arith.constant 0 : index
    %c0_14 = arith.constant 0 : index
    %30 = vector.load %arg5[%c0_13, %c0_14] : memref<1x64xf32, #tpu.memory_space<vmem>>, vector<1x64xf32>
    %31 = vector.broadcast %30 : vector<1x64xf32> to vector<16x64xf32>
    %32 = arith.addf %29, %31 : vector<16x64xf32>
    %33 = arith.truncf %32 : vector<16x64xf32> to vector<16x64xbf16>
    %c0_15 = arith.constant 0 : index
    %c0_16 = arith.constant 0 : index
    %34 = vector.load %arg6[%c0_15, %c0_16] : memref<64x64xbf16, #tpu.memory_space<vmem>>, vector<64x64xbf16>
    %cst_17 = arith.constant dense<0.000000e+00> : vector<16x64xf32>
    %35 = tpu.matmul %27, %34, %cst_17 {dimension_numbers = #tpu.dot_dimension_numbers<[1], [0], [0], [1], [0, 0, 1, 1], [], []>} : vector<16x64xbf16>, vector<64x64xbf16>, vector<16x64xf32> -> vector<16x64xf32>
    %c0_18 = arith.constant 0 : index
    %c0_19 = arith.constant 0 : index
    %36 = vector.load %arg7[%c0_18, %c0_19] : memref<1x64xf32, #tpu.memory_space<vmem>>, vector<1x64xf32>
    %37 = vector.broadcast %36 : vector<1x64xf32> to vector<16x64xf32>
    %38 = arith.addf %35, %37 : vector<16x64xf32>
    %39 = arith.truncf %38 : vector<16x64xf32> to vector<16x64xbf16>
    %c0_20 = arith.constant 0 : index
    %c0_21 = arith.constant 0 : index
    %40 = vector.load %arg8[%c0_20, %c0_21] : memref<64x64xbf16, #tpu.memory_space<vmem>>, vector<64x64xbf16>
    %cst_22 = arith.constant dense<0.000000e+00> : vector<16x64xf32>
    %41 = tpu.matmul %27, %40, %cst_22 {dimension_numbers = #tpu.dot_dimension_numbers<[1], [0], [0], [1], [0, 0, 1, 1], [], []>} : vector<16x64xbf16>, vector<64x64xbf16>, vector<16x64xf32> -> vector<16x64xf32>
    %c0_23 = arith.constant 0 : index
    %c0_24 = arith.constant 0 : index
    %42 = vector.load %arg9[%c0_23, %c0_24] : memref<1x64xf32, #tpu.memory_space<vmem>>, vector<1x64xf32>
    %43 = vector.broadcast %42 : vector<1x64xf32> to vector<16x64xf32>
    %44 = arith.addf %41, %43 : vector<16x64xf32>
    %45 = arith.truncf %44 : vector<16x64xf32> to vector<16x64xbf16>
    %46 = tpu.iota {dimensions = array<i32: 1>} : vector<16x16xi32>
    %c5_i32 = arith.constant 5 : i32
    %47 = vector.broadcast %c5_i32 : i32 to vector<16x16xi32>
    %48 = arith.cmpi slt, %46, %47 : vector<16x16xi32>
    %49 = vector.extract_strided_slice %33 {offsets = [0, 0], sizes = [16, 16], strides = [1, 1]} : vector<16x64xbf16> to vector<16x16xbf16>
    %50 = vector.extract_strided_slice %39 {offsets = [0, 0], sizes = [16, 16], strides = [1, 1]} : vector<16x64xbf16> to vector<16x16xbf16>
    %51 = vector.extract_strided_slice %45 {offsets = [0, 0], sizes = [16, 16], strides = [1, 1]} : vector<16x64xbf16> to vector<16x16xbf16>
    "tpu.trace_start"() <{level = 10 : i32, message = "nd,md->nm"}> : () -> ()
    %cst_25 = arith.constant dense<0.000000e+00> : vector<16x16xf32>
    %52 = tpu.matmul %49, %50, %cst_25 {dimension_numbers = #tpu.dot_dimension_numbers<[1], [1], [0], [0], [0, 0, 1, 0], [], []>} : vector<16x16xbf16>, vector<16x16xbf16>, vector<16x16xf32> -> vector<16x16xf32>
    %cst_26 = arith.constant -1.000000e+30 : f32
    "tpu.trace_stop"() : () -> ()
    %53 = vector.broadcast %cst_26 : f32 to vector<16x16xf32>
    %54 = arith.select %48, %52, %53 : vector<16x16xi1>, vector<16x16xf32>
    %cst_27 = arith.constant dense<0xFF800000> : vector<16xf32>
    %55 = vector.multi_reduction <maximumf>, %54, %cst_27 [1] : vector<16x16xf32> to vector<16xf32>
    %56 = vector.shape_cast %55 : vector<16xf32> to vector<16x1xf32>
    %57 = vector.broadcast %56 : vector<16x1xf32> to vector<16x16xf32>
    %58 = arith.subf %54, %57 : vector<16x16xf32>
    %59 = math.exp %58 : vector<16x16xf32>
    %cst_28 = arith.constant dense<0.000000e+00> : vector<16xf32>
    %60 = vector.multi_reduction <add>, %59, %cst_28 [1] : vector<16x16xf32> to vector<16xf32>
    %61 = vector.shape_cast %60 : vector<16xf32> to vector<16x1xf32>
    %62 = tpu.reciprocal %61 {approx = true} : vector<16x1xf32> -> vector<16x1xf32>
    %63 = vector.broadcast %62 : vector<16x1xf32> to vector<16x16xf32>
    %64 = arith.mulf %59, %63 : vector<16x16xf32>
    %65 = arith.truncf %64 : vector<16x16xf32> to vector<16x16xbf16>
    %cst_29 = arith.constant dense<0.000000e+00> : vector<16x16xf32>
    %66 = tpu.matmul %65, %51, %cst_29 {dimension_numbers = #tpu.dot_dimension_numbers<[1], [0], [0], [1], [0, 0, 1, 1], [], []>} : vector<16x16xbf16>, vector<16x16xbf16>, vector<16x16xf32> -> vector<16x16xf32>
    %67 = arith.truncf %66 : vector<16x16xf32> to vector<16x16xbf16>
    %c0_30 = arith.constant 0 : index
    %c0_31 = arith.constant 0 : index
    %68 = vector.load %arg21[%c0_30, %c0_31] : memref<16x64xbf16, #tpu.memory_space<vmem>>, vector<16x16xbf16>
    tpu.vector_store %arg21[%c0_30, %c0_31], %67 {strides = array<i32>} : memref<16x64xbf16, #tpu.memory_space<vmem>>, vector<16x16xbf16>,
    %69 = vector.extract_strided_slice %33 {offsets = [0, 16], sizes = [16, 16], strides = [1, 1]} : vector<16x64xbf16> to vector<16x16xbf16>
    %70 = vector.extract_strided_slice %39 {offsets = [0, 16], sizes = [16, 16], strides = [1, 1]} : vector<16x64xbf16> to vector<16x16xbf16>
    %71 = vector.extract_strided_slice %45 {offsets = [0, 16], sizes = [16, 16], strides = [1, 1]} : vector<16x64xbf16> to vector<16x16xbf16>
    "tpu.trace_start"() <{level = 10 : i32, message = "nd,md->nm"}> : () -> ()
    %cst_32 = arith.constant dense<0.000000e+00> : vector<16x16xf32>
    %72 = tpu.matmul %69, %70, %cst_32 {dimension_numbers = #tpu.dot_dimension_numbers<[1], [1], [0], [0], [0, 0, 1, 0], [], []>} : vector<16x16xbf16>, vector<16x16xbf16>, vector<16x16xf32> -> vector<16x16xf32>
    %cst_33 = arith.constant -1.000000e+30 : f32
    "tpu.trace_stop"() : () -> ()
    %73 = vector.broadcast %cst_33 : f32 to vector<16x16xf32>
    %74 = arith.select %48, %72, %73 : vector<16x16xi1>, vector<16x16xf32>
    %cst_34 = arith.constant dense<0xFF800000> : vector<16xf32>
    %75 = vector.multi_reduction <maximumf>, %74, %cst_34 [1] : vector<16x16xf32> to vector<16xf32>
    %76 = vector.shape_cast %75 : vector<16xf32> to vector<16x1xf32>
    %77 = vector.broadcast %76 : vector<16x1xf32> to vector<16x16xf32>
    %78 = arith.subf %74, %77 : vector<16x16xf32>
    %79 = math.exp %78 : vector<16x16xf32>
    %cst_35 = arith.constant dense<0.000000e+00> : vector<16xf32>
    %80 = vector.multi_reduction <add>, %79, %cst_35 [1] : vector<16x16xf32> to vector<16xf32>
    %81 = vector.shape_cast %80 : vector<16xf32> to vector<16x1xf32>
    %82 = tpu.reciprocal %81 {approx = true} : vector<16x1xf32> -> vector<16x1xf32>
    %83 = vector.broadcast %82 : vector<16x1xf32> to vector<16x16xf32>
    %84 = arith.mulf %79, %83 : vector<16x16xf32>
    %85 = arith.truncf %84 : vector<16x16xf32> to vector<16x16xbf16>
    %cst_36 = arith.constant dense<0.000000e+00> : vector<16x16xf32>
    %86 = tpu.matmul %85, %71, %cst_36 {dimension_numbers = #tpu.dot_dimension_numbers<[1], [0], [0], [1], [0, 0, 1, 1], [], []>} : vector<16x16xbf16>, vector<16x16xbf16>, vector<16x16xf32> -> vector<16x16xf32>
    %87 = arith.truncf %86 : vector<16x16xf32> to vector<16x16xbf16>
    %c0_37 = arith.constant 0 : index
    %c16 = arith.constant 16 : index
    %88 = vector.load %arg21[%c0_37, %c16] : memref<16x64xbf16, #tpu.memory_space<vmem>>, vector<16x16xbf16>
    tpu.vector_store %arg21[%c0_37, %c16], %87 {strides = array<i32>} : memref<16x64xbf16, #tpu.memory_space<vmem>>, vector<16x16xbf16>,
    %89 = vector.extract_strided_slice %33 {offsets = [0, 32], sizes = [16, 16], strides = [1, 1]} : vector<16x64xbf16> to vector<16x16xbf16>
    %90 = vector.extract_strided_slice %39 {offsets = [0, 32], sizes = [16, 16], strides = [1, 1]} : vector<16x64xbf16> to vector<16x16xbf16>
    %91 = vector.extract_strided_slice %45 {offsets = [0, 32], sizes = [16, 16], strides = [1, 1]} : vector<16x64xbf16> to vector<16x16xbf16>
    "tpu.trace_start"() <{level = 10 : i32, message = "nd,md->nm"}> : () -> ()
    %cst_38 = arith.constant dense<0.000000e+00> : vector<16x16xf32>
    %92 = tpu.matmul %89, %90, %cst_38 {dimension_numbers = #tpu.dot_dimension_numbers<[1], [1], [0], [0], [0, 0, 1, 0], [], []>} : vector<16x16xbf16>, vector<16x16xbf16>, vector<16x16xf32> -> vector<16x16xf32>
    %cst_39 = arith.constant -1.000000e+30 : f32
    "tpu.trace_stop"() : () -> ()
    %93 = vector.broadcast %cst_39 : f32 to vector<16x16xf32>
    %94 = arith.select %48, %92, %93 : vector<16x16xi1>, vector<16x16xf32>
    %cst_40 = arith.constant dense<0xFF800000> : vector<16xf32>
    %95 = vector.multi_reduction <maximumf>, %94, %cst_40 [1] : vector<16x16xf32> to vector<16xf32>
    %96 = vector.shape_cast %95 : vector<16xf32> to vector<16x1xf32>
    %97 = vector.broadcast %96 : vector<16x1xf32> to vector<16x16xf32>
    %98 = arith.subf %94, %97 : vector<16x16xf32>
    %99 = math.exp %98 : vector<16x16xf32>
    %cst_41 = arith.constant dense<0.000000e+00> : vector<16xf32>
    %100 = vector.multi_reduction <add>, %99, %cst_41 [1] : vector<16x16xf32> to vector<16xf32>
    %101 = vector.shape_cast %100 : vector<16xf32> to vector<16x1xf32>
    %102 = tpu.reciprocal %101 {approx = true} : vector<16x1xf32> -> vector<16x1xf32>
    %103 = vector.broadcast %102 : vector<16x1xf32> to vector<16x16xf32>
    %104 = arith.mulf %99, %103 : vector<16x16xf32>
    %105 = arith.truncf %104 : vector<16x16xf32> to vector<16x16xbf16>
    %cst_42 = arith.constant dense<0.000000e+00> : vector<16x16xf32>
    %106 = tpu.matmul %105, %91, %cst_42 {dimension_numbers = #tpu.dot_dimension_numbers<[1], [0], [0], [1], [0, 0, 1, 1], [], []>} : vector<16x16xbf16>, vector<16x16xbf16>, vector<16x16xf32> -> vector<16x16xf32>
    %107 = arith.truncf %106 : vector<16x16xf32> to vector<16x16xbf16>
    %c0_43 = arith.constant 0 : index
    %c32 = arith.constant 32 : index
    %108 = vector.load %arg21[%c0_43, %c32] : memref<16x64xbf16, #tpu.memory_space<vmem>>, vector<16x16xbf16>
    tpu.vector_store %arg21[%c0_43, %c32], %107 {strides = array<i32>} : memref<16x64xbf16, #tpu.memory_space<vmem>>, vector<16x16xbf16>,
    %109 = vector.extract_strided_slice %33 {offsets = [0, 48], sizes = [16, 16], strides = [1, 1]} : vector<16x64xbf16> to vector<16x16xbf16>
    %110 = vector.extract_strided_slice %39 {offsets = [0, 48], sizes = [16, 16], strides = [1, 1]} : vector<16x64xbf16> to vector<16x16xbf16>
    %111 = vector.extract_strided_slice %45 {offsets = [0, 48], sizes = [16, 16], strides = [1, 1]} : vector<16x64xbf16> to vector<16x16xbf16>
    "tpu.trace_start"() <{level = 10 : i32, message = "nd,md->nm"}> : () -> ()
    %cst_44 = arith.constant dense<0.000000e+00> : vector<16x16xf32>
    %112 = tpu.matmul %109, %110, %cst_44 {dimension_numbers = #tpu.dot_dimension_numbers<[1], [1], [0], [0], [0, 0, 1, 0], [], []>} : vector<16x16xbf16>, vector<16x16xbf16>, vector<16x16xf32> -> vector<16x16xf32>
    %cst_45 = arith.constant -1.000000e+30 : f32
    "tpu.trace_stop"() : () -> ()
    %113 = vector.broadcast %cst_45 : f32 to vector<16x16xf32>
    %114 = arith.select %48, %112, %113 : vector<16x16xi1>, vector<16x16xf32>
    %cst_46 = arith.constant dense<0xFF800000> : vector<16xf32>
    %115 = vector.multi_reduction <maximumf>, %114, %cst_46 [1] : vector<16x16xf32> to vector<16xf32>
    %116 = vector.shape_cast %115 : vector<16xf32> to vector<16x1xf32>
    %117 = vector.broadcast %116 : vector<16x1xf32> to vector<16x16xf32>
    %118 = arith.subf %114, %117 : vector<16x16xf32>
    %119 = math.exp %118 : vector<16x16xf32>
    %cst_47 = arith.constant dense<0.000000e+00> : vector<16xf32>
    %120 = vector.multi_reduction <add>, %119, %cst_47 [1] : vector<16x16xf32> to vector<16xf32>
    %121 = vector.shape_cast %120 : vector<16xf32> to vector<16x1xf32>
    %122 = tpu.reciprocal %121 {approx = true} : vector<16x1xf32> -> vector<16x1xf32>
    %123 = vector.broadcast %122 : vector<16x1xf32> to vector<16x16xf32>
    %124 = arith.mulf %119, %123 : vector<16x16xf32>
    %125 = arith.truncf %124 : vector<16x16xf32> to vector<16x16xbf16>
    %cst_48 = arith.constant dense<0.000000e+00> : vector<16x16xf32>
    %126 = tpu.matmul %125, %111, %cst_48 {dimension_numbers = #tpu.dot_dimension_numbers<[1], [0], [0], [1], [0, 0, 1, 1], [], []>} : vector<16x16xbf16>, vector<16x16xbf16>, vector<16x16xf32> -> vector<16x16xf32>
    %127 = arith.truncf %126 : vector<16x16xf32> to vector<16x16xbf16>
    %c0_49 = arith.constant 0 : index
    %c48 = arith.constant 48 : index
    %128 = vector.load %arg21[%c0_49, %c48] : memref<16x64xbf16, #tpu.memory_space<vmem>>, vector<16x16xbf16>
    tpu.vector_store %arg21[%c0_49, %c48], %127 {strides = array<i32>} : memref<16x64xbf16, #tpu.memory_space<vmem>>, vector<16x16xbf16>,
    %c0_50 = arith.constant 0 : index
    %c0_51 = arith.constant 0 : index
    %129 = vector.load %arg21[%c0_50, %c0_51] : memref<16x64xbf16, #tpu.memory_space<vmem>>, vector<16x64xbf16>
    %c0_52 = arith.constant 0 : index
    %c0_53 = arith.constant 0 : index
    %130 = vector.load %arg10[%c0_52, %c0_53] : memref<64x64xbf16, #tpu.memory_space<vmem>>, vector<64x64xbf16>
    %cst_54 = arith.constant dense<0.000000e+00> : vector<16x64xf32>
    %131 = tpu.matmul %129, %130, %cst_54 {dimension_numbers = #tpu.dot_dimension_numbers<[1], [0], [0], [1], [0, 0, 1, 1], [], []>} : vector<16x64xbf16>, vector<64x64xbf16>, vector<16x64xf32> -> vector<16x64xf32>
    %c0_55 = arith.constant 0 : index
    %c0_56 = arith.constant 0 : index
    %132 = vector.load %arg11[%c0_55, %c0_56] : memref<1x64xf32, #tpu.memory_space<vmem>>, vector<1x64xf32>
    %133 = vector.broadcast %132 : vector<1x64xf32> to vector<16x64xf32>
    %134 = arith.addf %131, %133 : vector<16x64xf32>
    %135 = arith.addf %2, %134 : vector<16x64xf32>
    %c0_57 = arith.constant 0 : index
    %c0_58 = arith.constant 0 : index
    %136 = vector.load %arg12[%c0_57, %c0_58] : memref<1x64xf32, #tpu.memory_space<vmem>>, vector<1x64xf32>
    %c0_59 = arith.constant 0 : index
    %c0_60 = arith.constant 0 : index
    %137 = vector.load %arg13[%c0_59, %c0_60] : memref<1x64xf32, #tpu.memory_space<vmem>>, vector<1x64xf32>
    %cst_61 = arith.constant dense<0.000000e+00> : vector<16xf32>
    %138 = vector.multi_reduction <add>, %135, %cst_61 [1] : vector<16x64xf32> to vector<16xf32>
    %139 = vector.shape_cast %138 : vector<16xf32> to vector<16x1xf32>
    %cst_62 = arith.constant 6.400000e+01 : f32
    %140 = vector.broadcast %cst_62 : f32 to vector<16x1xf32>
    %141 = arith.divf %139, %140 : vector<16x1xf32>
    %142 = vector.broadcast %141 : vector<16x1xf32> to vector<16x64xf32>
    %143 = arith.subf %135, %142 : vector<16x64xf32>
    %144 = arith.mulf %143, %143 : vector<16x64xf32>
    %cst_63 = arith.constant dense<0.000000e+00> : vector<16xf32>
    %145 = vector.multi_reduction <add>, %144, %cst_63 [1] : vector<16x64xf32> to vector<16xf32>
    %146 = vector.shape_cast %145 : vector<16xf32> to vector<16x1xf32>
    %cst_64 = arith.constant 6.400000e+01 : f32
    %147 = vector.broadcast %cst_64 : f32 to vector<16x1xf32>
    %148 = arith.divf %146, %147 : vector<16x1xf32>
    %149 = vector.broadcast %141 : vector<16x1xf32> to vector<16x64xf32>
    %150 = arith.subf %135, %149 : vector<16x64xf32>
    %cst_65 = arith.constant 9.99999997E-7 : f32
    %151 = vector.broadcast %cst_65 : f32 to vector<16x1xf32>
    %152 = arith.addf %148, %151 : vector<16x1xf32>
    %153 = math.rsqrt %152 : vector<16x1xf32>
    %154 = vector.broadcast %153 : vector<16x1xf32> to vector<16x64xf32>
    %155 = arith.mulf %150, %154 : vector<16x64xf32>
    %156 = vector.broadcast %136 : vector<1x64xf32> to vector<16x64xf32>
    %157 = arith.mulf %155, %156 : vector<16x64xf32>
    %158 = vector.broadcast %137 : vector<1x64xf32> to vector<16x64xf32>
    %159 = arith.addf %157, %158 : vector<16x64xf32>
    %160 = arith.truncf %159 : vector<16x64xf32> to vector<16x64xbf16>
    %c0_66 = arith.constant 0 : index
    %c0_67 = arith.constant 0 : index
    %161 = vector.load %arg14[%c0_66, %c0_67] : memref<64x256xbf16, #tpu.memory_space<vmem>>, vector<64x256xbf16>
    %cst_68 = arith.constant dense<0.000000e+00> : vector<16x256xf32>
    %162 = tpu.matmul %160, %161, %cst_68 {dimension_numbers = #tpu.dot_dimension_numbers<[1], [0], [0], [1], [0, 0, 1, 1], [], []>} : vector<16x64xbf16>, vector<64x256xbf16>, vector<16x256xf32> -> vector<16x256xf32>
    %c0_69 = arith.constant 0 : index
    %c0_70 = arith.constant 0 : index
    %163 = vector.load %arg15[%c0_69, %c0_70] : memref<1x256xf32, #tpu.memory_space<vmem>>, vector<1x256xf32>
    %164 = vector.broadcast %163 : vector<1x256xf32> to vector<16x256xf32>
    %165 = arith.addf %162, %164 : vector<16x256xf32>
    %cst_71 = arith.constant 5.000000e-01 : f32
    %166 = vector.broadcast %cst_71 : f32 to vector<16x256xf32>
    %167 = arith.mulf %166, %165 : vector<16x256xf32>
    %cst_72 = arith.constant 0.707106769 : f32
    %168 = vector.broadcast %cst_72 : f32 to vector<16x256xf32>
    %169 = arith.mulf %165, %168 : vector<16x256xf32>
    %170 = math.erf %169 : vector<16x256xf32>
    %cst_73 = arith.constant 1.000000e+00 : f32
    %171 = vector.broadcast %cst_73 : f32 to vector<16x256xf32>
    %172 = arith.addf %171, %170 : vector<16x256xf32>
    %173 = arith.mulf %167, %172 : vector<16x256xf32>
    %174 = arith.truncf %173 : vector<16x256xf32> to vector<16x256xbf16>
    %c0_74 = arith.constant 0 : index
    %c0_75 = arith.constant 0 : index
    %175 = vector.load %arg16[%c0_74, %c0_75] : memref<256x64xbf16, #tpu.memory_space<vmem>>, vector<256x64xbf16>
    %cst_76 = arith.constant dense<0.000000e+00> : vector<16x64xf32>
    %176 = tpu.matmul %174, %175, %cst_76 {dimension_numbers = #tpu.dot_dimension_numbers<[1], [0], [0], [1], [0, 0, 1, 1], [], []>} : vector<16x256xbf16>, vector<256x64xbf16>, vector<16x64xf32> -> vector<16x64xf32>
    %c0_77 = arith.constant 0 : index
    %c0_78 = arith.constant 0 : index
    %177 = vector.load %arg17[%c0_77, %c0_78] : memref<1x64xf32, #tpu.memory_space<vmem>>, vector<1x64xf32>
    %178 = vector.broadcast %177 : vector<1x64xf32> to vector<16x64xf32>
    %179 = arith.addf %176, %178 : vector<16x64xf32>
    %180 = arith.addf %135, %179 : vector<16x64xf32>
    %181 = vector.shape_cast %180 : vector<16x64xf32> to vector<1x16x64xf32>
    %182 = arith.truncf %181 : vector<1x16x64xf32> to vector<1x16x64xbf16>
    %c0_79 = arith.constant 0 : index
    %c0_80 = arith.constant 0 : index
    %c0_81 = arith.constant 0 : index
    %183 = vector.load %arg20[%c0_79, %c0_80, %c0_81] : memref<1x16x64xbf16, #tpu.memory_space<vmem>>, vector<1x16x64xbf16>
    tpu.vector_store %arg20[%c0_79, %c0_80, %c0_81], %182 {strides = array<i32>} : memref<1x16x64xbf16, #tpu.memory_space<vmem>>, vector<1x16x64xbf16>,
    return
  }
  func.func @transform_0(%arg0: i32) -> (i32, i32, i32) {
    %c0_i32 = arith.constant 0 : i32
    %c0_i32_0 = arith.constant 0 : i32
    %c0_i32_1 = arith.constant 0 : i32
    return %arg0, %c0_i32, %c0_i32_0 : i32, i32, i32
  }
  func.func @transform_1(%arg0: i32) -> (i32, i32) {
    %c0_i32 = arith.constant 0 : i32
    %c0_i32_0 = arith.constant 0 : i32
    %c0_i32_1 = arith.constant 0 : i32
    return %c0_i32, %c0_i32_0 : i32, i32
  }
  func.func @transform_2(%arg0: i32) -> (i32, i32) {
    %c0_i32 = arith.constant 0 : i32
    %c0_i32_0 = arith.constant 0 : i32
    %c0_i32_1 = arith.constant 0 : i32
    return %c0_i32, %c0_i32_0 : i32, i32
  }
  func.func @transform_3(%arg0: i32) -> (i32, i32) {
    %c0_i32 = arith.constant 0 : i32
    %c0_i32_0 = arith.constant 0 : i32
    %c0_i32_1 = arith.constant 0 : i32
    return %c0_i32, %c0_i32_0 : i32, i32
  }
  func.func @transform_4(%arg0: i32) -> (i32, i32) {
    %c0_i32 = arith.constant 0 : i32
    %c0_i32_0 = arith.constant 0 : i32
    %c0_i32_1 = arith.constant 0 : i32
    return %c0_i32, %c0_i32_0 : i32, i32
  }
  func.func @transform_5(%arg0: i32) -> (i32, i32) {
    %c0_i32 = arith.constant 0 : i32
    %c0_i32_0 = arith.constant 0 : i32
    %c0_i32_1 = arith.constant 0 : i32
    return %c0_i32, %c0_i32_0 : i32, i32
  }
  func.func @transform_6(%arg0: i32) -> (i32, i32) {
    %c0_i32 = arith.constant 0 : i32
    %c0_i32_0 = arith.constant 0 : i32
    %c0_i32_1 = arith.constant 0 : i32
    return %c0_i32, %c0_i32_0 : i32, i32
  }
  func.func @transform_7(%arg0: i32) -> (i32, i32) {
    %c0_i32 = arith.constant 0 : i32
    %c0_i32_0 = arith.constant 0 : i32
    %c0_i32_1 = arith.constant 0 : i32
    return %c0_i32, %c0_i32_0 : i32, i32
  }
  func.func @transform_8(%arg0: i32) -> (i32, i32) {
    %c0_i32 = arith.constant 0 : i32
    %c0_i32_0 = arith.constant 0 : i32
    %c0_i32_1 = arith.constant 0 : i32
    return %c0_i32, %c0_i32_0 : i32, i32
  }
  func.func @transform_9(%arg0: i32) -> (i32, i32) {
    %c0_i32 = arith.constant 0 : i32
    %c0_i32_0 = arith.constant 0 : i32
    %c0_i32_1 = arith.constant 0 : i32
    return %c0_i32, %c0_i32_0 : i32, i32
  }
  func.func @transform_10(%arg0: i32) -> (i32, i32) {
    %c0_i32 = arith.constant 0 : i32
    %c0_i32_0 = arith.constant 0 : i32
    %c0_i32_1 = arith.constant 0 : i32
    return %c0_i32, %c0_i32_0 : i32, i32
  }
  func.func @transform_11(%arg0: i32) -> (i32, i32) {
    %c0_i32 = arith.constant 0 : i32
    %c0_i32_0 = arith.constant 0 : i32
    %c0_i32_1 = arith.constant 0 : i32
    return %c0_i32, %c0_i32_0 : i32, i32
  }
  func.func @transform_12(%arg0: i32) -> (i32, i32) {
    %c0_i32 = arith.constant 0 : i32
    %c0_i32_0 = arith.constant 0 : i32
    %c0_i32_1 = arith.constant 0 : i32
    return %c0_i32, %c0_i32_0 : i32, i32
  }
  func.func @transform_13(%arg0: i32) -> (i32, i32) {
    %c0_i32 = arith.constant 0 : i32
    %c0_i32_0 = arith.constant 0 : i32
    %c0_i32_1 = arith.constant 0 : i32
    return %c0_i32, %c0_i32_0 : i32, i32
  }
  func.func @transform_14(%arg0: i32) -> (i32, i32) {
    %c0_i32 = arith.constant 0 : i32
    %c0_i32_0 = arith.constant 0 : i32
    %c0_i32_1 = arith.constant 0 : i32
    return %c0_i32, %c0_i32_0 : i32, i32
  }
  func.func @transform_15(%arg0: i32) -> (i32, i32) {
    %c0_i32 = arith.constant 0 : i32
    %c0_i32_0 = arith.constant 0 : i32
    %c0_i32_1 = arith.constant 0 : i32
    return %c0_i32, %c0_i32_0 : i32, i32
  }
  func.func @transform_16(%arg0: i32) -> (i32, i32) {
    %c0_i32 = arith.constant 0 : i32
    %c0_i32_0 = arith.constant 0 : i32
    %c0_i32_1 = arith.constant 0 : i32
    return %c0_i32, %c0_i32_0 : i32, i32
  }
  func.func @transform_17(%arg0: i32) -> (i32, i32) {
    %c0_i32 = arith.constant 0 : i32
    %c0_i32_0 = arith.constant 0 : i32
    %c0_i32_1 = arith.constant 0 : i32
    return %c0_i32, %c0_i32_0 : i32, i32
  }
  func.func @transform_18(%arg0: i32) -> (i32, i32) {
    %c0_i32 = arith.constant 0 : i32
    %c0_i32_0 = arith.constant 0 : i32
    %c0_i32_1 = arith.constant 0 : i32
    return %c0_i32, %c0_i32_0 : i32, i32
  }
  func.func @transform_19(%arg0: i32) -> (i32, i32, i32) {
    %c0_i32 = arith.constant 0 : i32
    %c0_i32_0 = arith.constant 0 : i32
    %c0_i32_1 = arith.constant 0 : i32
    return %arg0, %c0_i32, %c0_i32_0 : i32, i32, i32
  }
}

module attributes {stable_mosaic.version = 11 : i64} {
  func.func @block_kernel(%arg0: i32, %arg1: memref<1x16x64xbf16, #tpu.memory_space<vmem>>, %arg2: memref<1x64xf32, #tpu.memory_space<vmem>>, %arg3: memref<1x64xf32, #tpu.memory_space<vmem>>, %arg4: memref<64x64xbf16, #tpu.memory_space<vmem>>, %arg5: memref<1x64xf32, #tpu.memory_space<vmem>>, %arg6: memref<64x64xbf16, #tpu.memory_space<vmem>>, %arg7: memref<1x64xf32, #tpu.memory_space<vmem>>, %arg8: memref<64x64xbf16, #tpu.memory_space<vmem>>, %arg9: memref<1x64xf32, #tpu.memory_space<vmem>>, %arg10: memref<64x64xbf16, #tpu.memory_space<vmem>>, %arg11: memref<1x64xf32, #tpu.memory_space<vmem>>, %arg12: memref<1x64xf32, #tpu.memory_space<vmem>>, %arg13: memref<1x64xf32, #tpu.memory_space<vmem>>, %arg14: memref<64x256xbf16, #tpu.memory_space<vmem>>, %arg15: memref<1x256xf32, #tpu.memory_space<vmem>>, %arg16: memref<256x64xbf16, #tpu.memory_space<vmem>>, %arg17: memref<1x64xf32, #tpu.memory_space<vmem>>, %arg18: memref<1x64xf32, #tpu.memory_space<vmem>>, %arg19: memref<1x64xf32, #tpu.memory_space<vmem>>, %arg20: memref<1x16x64xbf16, #tpu.memory_space<vmem>>, %arg21: memref<16x64xbf16, #tpu.memory_space<vmem>>) attributes {dimension_semantics = [#tpu.dimension_semantics<parallel>], iteration_bounds = array<i64: 2>, scalar_prefetch = 0 : i64, scratch_operands = 1 : i64, tpu.core_type = #tpu.core_type<tc>, window_params = [{transform_indices = @transform_0, window_bounds = array<i64: 1, 16, 64>}, {pipeline_mode = #tpu.pipeline_mode<synchronous>, transform_indices = @transform_1, window_bounds = array<i64: 1, 64>}, {pipeline_mode = #tpu.pipeline_mode<synchronous>, transform_indices = @transform_2, window_bounds = array<i64: 1, 64>}, {pipeline_mode = #tpu.pipeline_mode<synchronous>, transform_indices = @transform_3, window_bounds = array<i64: 64, 64>}, {pipeline_mode = #tpu.pipeline_mode<synchronous>, transform_indices = @transform_4, window_bounds = array<i64: 1, 64>}, {pipeline_mode = #tpu.pipeline_mode<synchronous>, transform_indices = @transform_5, window_bounds = array<i64: 64, 64>}, {pipeline_mode = #tpu.pipeline_mode<synchronous>, transform_indices = @transform_6, window_bounds = array<i64: 1, 64>}, {pipeline_mode = #tpu.pipeline_mode<synchronous>, transform_indices = @transform_7, window_bounds = array<i64: 64, 64>}, {pipeline_mode = #tpu.pipeline_mode<synchronous>, transform_indices = @transform_8, window_bounds = array<i64: 1, 64>}, {pipeline_mode = #tpu.pipeline_mode<synchronous>, transform_indices = @transform_9, window_bounds = array<i64: 64, 64>}, {pipeline_mode = #tpu.pipeline_mode<synchronous>, transform_indices = @transform_10, window_bounds = array<i64: 1, 64>}, {pipeline_mode = #tpu.pipeline_mode<synchronous>, transform_indices = @transform_11, window_bounds = array<i64: 1, 64>}, {pipeline_mode = #tpu.pipeline_mode<synchronous>, transform_indices = @transform_12, window_bounds = array<i64: 1, 64>}, {pipeline_mode = #tpu.pipeline_mode<synchronous>, transform_indices = @transform_13, window_bounds = array<i64: 64, 256>}, {pipeline_mode = #tpu.pipeline_mode<synchronous>, transform_indices = @transform_14, window_bounds = array<i64: 1, 256>}, {pipeline_mode = #tpu.pipeline_mode<synchronous>, transform_indices = @transform_15, window_bounds = array<i64: 256, 64>}, {pipeline_mode = #tpu.pipeline_mode<synchronous>, transform_indices = @transform_16, window_bounds = array<i64: 1, 64>}, {pipeline_mode = #tpu.pipeline_mode<synchronous>, transform_indices = @transform_17, window_bounds = array<i64: 1, 64>}, {pipeline_mode = #tpu.pipeline_mode<synchronous>, transform_indices = @transform_18, window_bounds = array<i64: 1, 64>}, {transform_indices = @transform_19, window_bounds = array<i64: 1, 16, 64>}]} {
    %c0 = arith.constant 0 : index
    %c0_0 = arith.constant 0 : index
    %c0_1 = arith.constant 0 : index
    %0 = vector.load %arg1[%c0, %c0_0, %c0_1] : memref<1x16x64xbf16, #tpu.memory_space<vmem>>, vector<1x16x64xbf16>
    %1 = vector.shape_cast %0 : vector<1x16x64xbf16> to vector<16x64xbf16>
    %2 = arith.extf %1 : vector<16x64xbf16> to vector<16x64xf32>
    %c0_2 = arith.constant 0 : index
    %c0_3 = arith.constant 0 : index
    %3 = vector.load %arg2[%c0_2, %c0_3] : memref<1x64xf32, #tpu.memory_space<vmem>>, vector<1x64xf32>
    %c0_4 = arith.constant 0 : index
    %c0_5 = arith.constant 0 : index
    %4 = vector.load %arg3[%c0_4, %c0_5] : memref<1x64xf32, #tpu.memory_space<vmem>>, vector<1x64xf32>
    %cst = arith.constant dense<0.000000e+00> : vector<16xf32>
    %5 = vector.multi_reduction <add>, %2, %cst [1] : vector<16x64xf32> to vector<16xf32>
    %6 = vector.shape_cast %5 : vector<16xf32> to vector<16x1xf32>
    %cst_6 = arith.constant 6.400000e+01 : f32
    %7 = vector.broadcast %cst_6 : f32 to vector<16x1xf32>
    %8 = arith.divf %6, %7 : vector<16x1xf32>
    %9 = vector.broadcast %8 : vector<16x1xf32> to vector<16x64xf32>
    %10 = arith.subf %2, %9 : vector<16x64xf32>
    %11 = arith.mulf %10, %10 : vector<16x64xf32>
    %cst_7 = arith.constant dense<0.000000e+00> : vector<16xf32>
    %12 = vector.multi_reduction <add>, %11, %cst_7 [1] : vector<16x64xf32> to vector<16xf32>
    %13 = vector.shape_cast %12 : vector<16xf32> to vector<16x1xf32>
    %cst_8 = arith.constant 6.400000e+01 : f32
    %14 = vector.broadcast %cst_8 : f32 to vector<16x1xf32>
    %15 = arith.divf %13, %14 : vector<16x1xf32>
    %16 = vector.broadcast %8 : vector<16x1xf32> to vector<16x64xf32>
    %17 = arith.subf %2, %16 : vector<16x64xf32>
    %cst_9 = arith.constant 9.99999997E-7 : f32
    %18 = vector.broadcast %cst_9 : f32 to vector<16x1xf32>
    %19 = arith.addf %15, %18 : vector<16x1xf32>
    %20 = math.rsqrt %19 : vector<16x1xf32>
    %21 = vector.broadcast %20 : vector<16x1xf32> to vector<16x64xf32>
    %22 = arith.mulf %17, %21 : vector<16x64xf32>
    %23 = vector.broadcast %3 : vector<1x64xf32> to vector<16x64xf32>
    %24 = arith.mulf %22, %23 : vector<16x64xf32>
    %25 = vector.broadcast %4 : vector<1x64xf32> to vector<16x64xf32>
    %26 = arith.addf %24, %25 : vector<16x64xf32>
    %27 = arith.truncf %26 : vector<16x64xf32> to vector<16x64xbf16>
    %c0_10 = arith.constant 0 : index
    %c0_11 = arith.constant 0 : index
    %28 = vector.load %arg4[%c0_10, %c0_11] : memref<64x64xbf16, #tpu.memory_space<vmem>>, vector<64x64xbf16>
    %cst_12 = arith.constant dense<0.000000e+00> : vector<16x64xf32>
    %29 = tpu.matmul %27, %28, %cst_12 {dimension_numbers = #tpu.dot_dimension_numbers<[1], [0], [0], [1], [0, 0, 1, 1], [], []>} : vector<16x64xbf16>, vector<64x64xbf16>, vector<16x64xf32> -> vector<16x64xf32>
    %c0_13 = arith.constant 0 : index
    %c0_14 = arith.constant 0 : index
    %30 = vector.load %arg5[%c0_13, %c0_14] : memref<1x64xf32, #tpu.memory_space<vmem>>, vector<1x64xf32>
    %31 = vector.broadcast %30 : vector<1x64xf32> to vector<16x64xf32>
    %32 = arith.addf %29, %31 : vector<16x64xf32>
    %33 = arith.truncf %32 : vector<16x64xf32> to vector<16x64xbf16>
    %c0_15 = arith.constant 0 : index
    %c0_16 = arith.constant 0 : index
    %34 = vector.load %arg6[%c0_15, %c0_16] : memref<64x64xbf16, #tpu.memory_space<vmem>>, vector<64x64xbf16>
    %cst_17 = arith.constant dense<0.000000e+00> : vector<16x64xf32>
    %35 = tpu.matmul %27, %34, %cst_17 {dimension_numbers = #tpu.dot_dimension_numbers<[1], [0], [0], [1], [0, 0, 1, 1], [], []>} : vector<16x64xbf16>, vector<64x64xbf16>, vector<16x64xf32> -> vector<16x64xf32>
    %c0_18 = arith.constant 0 : index
    %c0_19 = arith.constant 0 : index
    %36 = vector.load %arg7[%c0_18, %c0_19] : memref<1x64xf32, #tpu.memory_space<vmem>>, vector<1x64xf32>
    %37 = vector.broadcast %36 : vector<1x64xf32> to vector<16x64xf32>
    %38 = arith.addf %35, %37 : vector<16x64xf32>
    %39 = arith.truncf %38 : vector<16x64xf32> to vector<16x64xbf16>
    %c0_20 = arith.constant 0 : index
    %c0_21 = arith.constant 0 : index
    %40 = vector.load %arg8[%c0_20, %c0_21] : memref<64x64xbf16, #tpu.memory_space<vmem>>, vector<64x64xbf16>
    %cst_22 = arith.constant dense<0.000000e+00> : vector<16x64xf32>
    %41 = tpu.matmul %27, %40, %cst_22 {dimension_numbers = #tpu.dot_dimension_numbers<[1], [0], [0], [1], [0, 0, 1, 1], [], []>} : vector<16x64xbf16>, vector<64x64xbf16>, vector<16x64xf32> -> vector<16x64xf32>
    %c0_23 = arith.constant 0 : index
    %c0_24 = arith.constant 0 : index
    %42 = vector.load %arg9[%c0_23, %c0_24] : memref<1x64xf32, #tpu.memory_space<vmem>>, vector<1x64xf32>
    %43 = vector.broadcast %42 : vector<1x64xf32> to vector<16x64xf32>
    %44 = arith.addf %41, %43 : vector<16x64xf32>
    %45 = arith.truncf %44 : vector<16x64xf32> to vector<16x64xbf16>
    %46 = tpu.iota {dimensions = array<i32: 1>} : vector<16x16xi32>
    %c5_i32 = arith.constant 5 : i32
    %47 = vector.broadcast %c5_i32 : i32 to vector<16x16xi32>
    %48 = arith.cmpi slt, %46, %47 : vector<16x16xi32>
    %49 = vector.extract_strided_slice %33 {offsets = [0, 0], sizes = [16, 16], strides = [1, 1]} : vector<16x64xbf16> to vector<16x16xbf16>
    %50 = vector.extract_strided_slice %39 {offsets = [0, 0], sizes = [16, 16], strides = [1, 1]} : vector<16x64xbf16> to vector<16x16xbf16>
    %51 = vector.extract_strided_slice %45 {offsets = [0, 0], sizes = [16, 16], strides = [1, 1]} : vector<16x64xbf16> to vector<16x16xbf16>
    "tpu.trace_start"() <{level = 10 : i32, message = "nd,md->nm"}> : () -> ()
    %cst_25 = arith.constant dense<0.000000e+00> : vector<16x16xf32>
    %52 = tpu.matmul %49, %50, %cst_25 {dimension_numbers = #tpu.dot_dimension_numbers<[1], [1], [0], [0], [0, 0, 1, 0], [], []>} : vector<16x16xbf16>, vector<16x16xbf16>, vector<16x16xf32> -> vector<16x16xf32>
    %cst_26 = arith.constant -1.000000e+30 : f32
    "tpu.trace_stop"() : () -> ()
    %53 = vector.broadcast %cst_26 : f32 to vector<16x16xf32>
    %54 = arith.select %48, %52, %53 : vector<16x16xi1>, vector<16x16xf32>
    %cst_27 = arith.constant dense<0xFF800000> : vector<16xf32>
    %55 = vector.multi_reduction <maximumf>, %54, %cst_27 [1] : vector<16x16xf32> to vector<16xf32>
    %56 = vector.shape_cast %55 : vector<16xf32> to vector<16x1xf32>
    %57 = vector.broadcast %56 : vector<16x1xf32> to vector<16x16xf32>
    %58 = arith.subf %54, %57 : vector<16x16xf32>
    %59 = math.exp %58 : vector<16x16xf32>
    %cst_28 = arith.constant dense<0.000000e+00> : vector<16xf32>
    %60 = vector.multi_reduction <add>, %59, %cst_28 [1] : vector<16x16xf32> to vector<16xf32>
    %61 = vector.shape_cast %60 : vector<16xf32> to vector<16x1xf32>
    %62 = tpu.reciprocal %61 {approx = true} : vector<16x1xf32> -> vector<16x1xf32>
    %63 = vector.broadcast %62 : vector<16x1xf32> to vector<16x16xf32>
    %64 = arith.mulf %59, %63 : vector<16x16xf32>
    %65 = arith.truncf %64 : vector<16x16xf32> to vector<16x16xbf16>
    %cst_29 = arith.constant dense<0.000000e+00> : vector<16x16xf32>
    %66 = tpu.matmul %65, %51, %cst_29 {dimension_numbers = #tpu.dot_dimension_numbers<[1], [0], [0], [1], [0, 0, 1, 1], [], []>} : vector<16x16xbf16>, vector<16x16xbf16>, vector<16x16xf32> -> vector<16x16xf32>
    %67 = arith.truncf %66 : vector<16x16xf32> to vector<16x16xbf16>
    %c0_30 = arith.constant 0 : index
    %c0_31 = arith.constant 0 : index
    %68 = vector.load %arg21[%c0_30, %c0_31] : memref<16x64xbf16, #tpu.memory_space<vmem>>, vector<16x16xbf16>
    tpu.vector_store %arg21[%c0_30, %c0_31], %67 {strides = array<i32>} : memref<16x64xbf16, #tpu.memory_space<vmem>>, vector<16x16xbf16>,
    %69 = vector.extract_strided_slice %33 {offsets = [0, 16], sizes = [16, 16], strides = [1, 1]} : vector<16x64xbf16> to vector<16x16xbf16>
    %70 = vector.extract_strided_slice %39 {offsets = [0, 16], sizes = [16, 16], strides = [1, 1]} : vector<16x64xbf16> to vector<16x16xbf16>
    %71 = vector.extract_strided_slice %45 {offsets = [0, 16], sizes = [16, 16], strides = [1, 1]} : vector<16x64xbf16> to vector<16x16xbf16>
    "tpu.trace_start"() <{level = 10 : i32, message = "nd,md->nm"}> : () -> ()
    %cst_32 = arith.constant dense<0.000000e+00> : vector<16x16xf32>
    %72 = tpu.matmul %69, %70, %cst_32 {dimension_numbers = #tpu.dot_dimension_numbers<[1], [1], [0], [0], [0, 0, 1, 0], [], []>} : vector<16x16xbf16>, vector<16x16xbf16>, vector<16x16xf32> -> vector<16x16xf32>
    %cst_33 = arith.constant -1.000000e+30 : f32
    "tpu.trace_stop"() : () -> ()
    %73 = vector.broadcast %cst_33 : f32 to vector<16x16xf32>
    %74 = arith.select %48, %72, %73 : vector<16x16xi1>, vector<16x16xf32>
    %cst_34 = arith.constant dense<0xFF800000> : vector<16xf32>
    %75 = vector.multi_reduction <maximumf>, %74, %cst_34 [1] : vector<16x16xf32> to vector<16xf32>
    %76 = vector.shape_cast %75 : vector<16xf32> to vector<16x1xf32>
    %77 = vector.broadcast %76 : vector<16x1xf32> to vector<16x16xf32>
    %78 = arith.subf %74, %77 : vector<16x16xf32>
    %79 = math.exp %78 : vector<16x16xf32>
    %cst_35 = arith.constant dense<0.000000e+00> : vector<16xf32>
    %80 = vector.multi_reduction <add>, %79, %cst_35 [1] : vector<16x16xf32> to vector<16xf32>
    %81 = vector.shape_cast %80 : vector<16xf32> to vector<16x1xf32>
    %82 = tpu.reciprocal %81 {approx = true} : vector<16x1xf32> -> vector<16x1xf32>
    %83 = vector.broadcast %82 : vector<16x1xf32> to vector<16x16xf32>
    %84 = arith.mulf %79, %83 : vector<16x16xf32>
    %85 = arith.truncf %84 : vector<16x16xf32> to vector<16x16xbf16>
    %cst_36 = arith.constant dense<0.000000e+00> : vector<16x16xf32>
    %86 = tpu.matmul %85, %71, %cst_36 {dimension_numbers = #tpu.dot_dimension_numbers<[1], [0], [0], [1], [0, 0, 1, 1], [], []>} : vector<16x16xbf16>, vector<16x16xbf16>, vector<16x16xf32> -> vector<16x16xf32>
    %87 = arith.truncf %86 : vector<16x16xf32> to vector<16x16xbf16>
    %c0_37 = arith.constant 0 : index
    %c16 = arith.constant 16 : index
    %88 = vector.load %arg21[%c0_37, %c16] : memref<16x64xbf16, #tpu.memory_space<vmem>>, vector<16x16xbf16>
    tpu.vector_store %arg21[%c0_37, %c16], %87 {strides = array<i32>} : memref<16x64xbf16, #tpu.memory_space<vmem>>, vector<16x16xbf16>,
    %89 = vector.extract_strided_slice %33 {offsets = [0, 32], sizes = [16, 16], strides = [1, 1]} : vector<16x64xbf16> to vector<16x16xbf16>
    %90 = vector.extract_strided_slice %39 {offsets = [0, 32], sizes = [16, 16], strides = [1, 1]} : vector<16x64xbf16> to vector<16x16xbf16>
    %91 = vector.extract_strided_slice %45 {offsets = [0, 32], sizes = [16, 16], strides = [1, 1]} : vector<16x64xbf16> to vector<16x16xbf16>
    "tpu.trace_start"() <{level = 10 : i32, message = "nd,md->nm"}> : () -> ()
    %cst_38 = arith.constant dense<0.000000e+00> : vector<16x16xf32>
    %92 = tpu.matmul %89, %90, %cst_38 {dimension_numbers = #tpu.dot_dimension_numbers<[1], [1], [0], [0], [0, 0, 1, 0], [], []>} : vector<16x16xbf16>, vector<16x16xbf16>, vector<16x16xf32> -> vector<16x16xf32>
    %cst_39 = arith.constant -1.000000e+30 : f32
    "tpu.trace_stop"() : () -> ()
    %93 = vector.broadcast %cst_39 : f32 to vector<16x16xf32>
    %94 = arith.select %48, %92, %93 : vector<16x16xi1>, vector<16x16xf32>
    %cst_40 = arith.constant dense<0xFF800000> : vector<16xf32>
    %95 = vector.multi_reduction <maximumf>, %94, %cst_40 [1] : vector<16x16xf32> to vector<16xf32>
    %96 = vector.shape_cast %95 : vector<16xf32> to vector<16x1xf32>
    %97 = vector.broadcast %96 : vector<16x1xf32> to vector<16x16xf32>
    %98 = arith.subf %94, %97 : vector<16x16xf32>
    %99 = math.exp %98 : vector<16x16xf32>
    %cst_41 = arith.constant dense<0.000000e+00> : vector<16xf32>
    %100 = vector.multi_reduction <add>, %99, %cst_41 [1] : vector<16x16xf32> to vector<16xf32>
    %101 = vector.shape_cast %100 : vector<16xf32> to vector<16x1xf32>
    %102 = tpu.reciprocal %101 {approx = true} : vector<16x1xf32> -> vector<16x1xf32>
    %103 = vector.broadcast %102 : vector<16x1xf32> to vector<16x16xf32>
    %104 = arith.mulf %99, %103 : vector<16x16xf32>
    %105 = arith.truncf %104 : vector<16x16xf32> to vector<16x16xbf16>
    %cst_42 = arith.constant dense<0.000000e+00> : vector<16x16xf32>
    %106 = tpu.matmul %105, %91, %cst_42 {dimension_numbers = #tpu.dot_dimension_numbers<[1], [0], [0], [1], [0, 0, 1, 1], [], []>} : vector<16x16xbf16>, vector<16x16xbf16>, vector<16x16xf32> -> vector<16x16xf32>
    %107 = arith.truncf %106 : vector<16x16xf32> to vector<16x16xbf16>
    %c0_43 = arith.constant 0 : index
    %c32 = arith.constant 32 : index
    %108 = vector.load %arg21[%c0_43, %c32] : memref<16x64xbf16, #tpu.memory_space<vmem>>, vector<16x16xbf16>
    tpu.vector_store %arg21[%c0_43, %c32], %107 {strides = array<i32>} : memref<16x64xbf16, #tpu.memory_space<vmem>>, vector<16x16xbf16>,
    %109 = vector.extract_strided_slice %33 {offsets = [0, 48], sizes = [16, 16], strides = [1, 1]} : vector<16x64xbf16> to vector<16x16xbf16>
    %110 = vector.extract_strided_slice %39 {offsets = [0, 48], sizes = [16, 16], strides = [1, 1]} : vector<16x64xbf16> to vector<16x16xbf16>
    %111 = vector.extract_strided_slice %45 {offsets = [0, 48], sizes = [16, 16], strides = [1, 1]} : vector<16x64xbf16> to vector<16x16xbf16>
    "tpu.trace_start"() <{level = 10 : i32, message = "nd,md->nm"}> : () -> ()
    %cst_44 = arith.constant dense<0.000000e+00> : vector<16x16xf32>
    %112 = tpu.matmul %109, %110, %cst_44 {dimension_numbers = #tpu.dot_dimension_numbers<[1], [1], [0], [0], [0, 0, 1, 0], [], []>} : vector<16x16xbf16>, vector<16x16xbf16>, vector<16x16xf32> -> vector<16x16xf32>
    %cst_45 = arith.constant -1.000000e+30 : f32
    "tpu.trace_stop"() : () -> ()
    %113 = vector.broadcast %cst_45 : f32 to vector<16x16xf32>
    %114 = arith.select %48, %112, %113 : vector<16x16xi1>, vector<16x16xf32>
    %cst_46 = arith.constant dense<0xFF800000> : vector<16xf32>
    %115 = vector.multi_reduction <maximumf>, %114, %cst_46 [1] : vector<16x16xf32> to vector<16xf32>
    %116 = vector.shape_cast %115 : vector<16xf32> to vector<16x1xf32>
    %117 = vector.broadcast %116 : vector<16x1xf32> to vector<16x16xf32>
    %118 = arith.subf %114, %117 : vector<16x16xf32>
    %119 = math.exp %118 : vector<16x16xf32>
    %cst_47 = arith.constant dense<0.000000e+00> : vector<16xf32>
    %120 = vector.multi_reduction <add>, %119, %cst_47 [1] : vector<16x16xf32> to vector<16xf32>
    %121 = vector.shape_cast %120 : vector<16xf32> to vector<16x1xf32>
    %122 = tpu.reciprocal %121 {approx = true} : vector<16x1xf32> -> vector<16x1xf32>
    %123 = vector.broadcast %122 : vector<16x1xf32> to vector<16x16xf32>
    %124 = arith.mulf %119, %123 : vector<16x16xf32>
    %125 = arith.truncf %124 : vector<16x16xf32> to vector<16x16xbf16>
    %cst_48 = arith.constant dense<0.000000e+00> : vector<16x16xf32>
    %126 = tpu.matmul %125, %111, %cst_48 {dimension_numbers = #tpu.dot_dimension_numbers<[1], [0], [0], [1], [0, 0, 1, 1], [], []>} : vector<16x16xbf16>, vector<16x16xbf16>, vector<16x16xf32> -> vector<16x16xf32>
    %127 = arith.truncf %126 : vector<16x16xf32> to vector<16x16xbf16>
    %c0_49 = arith.constant 0 : index
    %c48 = arith.constant 48 : index
    %128 = vector.load %arg21[%c0_49, %c48] : memref<16x64xbf16, #tpu.memory_space<vmem>>, vector<16x16xbf16>
    tpu.vector_store %arg21[%c0_49, %c48], %127 {strides = array<i32>} : memref<16x64xbf16, #tpu.memory_space<vmem>>, vector<16x16xbf16>,
    %c0_50 = arith.constant 0 : index
    %c0_51 = arith.constant 0 : index
    %129 = vector.load %arg21[%c0_50, %c0_51] : memref<16x64xbf16, #tpu.memory_space<vmem>>, vector<16x64xbf16>
    %c0_52 = arith.constant 0 : index
    %c0_53 = arith.constant 0 : index
    %130 = vector.load %arg10[%c0_52, %c0_53] : memref<64x64xbf16, #tpu.memory_space<vmem>>, vector<64x64xbf16>
    %cst_54 = arith.constant dense<0.000000e+00> : vector<16x64xf32>
    %131 = tpu.matmul %129, %130, %cst_54 {dimension_numbers = #tpu.dot_dimension_numbers<[1], [0], [0], [1], [0, 0, 1, 1], [], []>} : vector<16x64xbf16>, vector<64x64xbf16>, vector<16x64xf32> -> vector<16x64xf32>
    %c0_55 = arith.constant 0 : index
    %c0_56 = arith.constant 0 : index
    %132 = vector.load %arg11[%c0_55, %c0_56] : memref<1x64xf32, #tpu.memory_space<vmem>>, vector<1x64xf32>
    %133 = vector.broadcast %132 : vector<1x64xf32> to vector<16x64xf32>
    %134 = arith.addf %131, %133 : vector<16x64xf32>
    %135 = arith.addf %2, %134 : vector<16x64xf32>
    %c0_57 = arith.constant 0 : index
    %c0_58 = arith.constant 0 : index
    %136 = vector.load %arg12[%c0_57, %c0_58] : memref<1x64xf32, #tpu.memory_space<vmem>>, vector<1x64xf32>
    %c0_59 = arith.constant 0 : index
    %c0_60 = arith.constant 0 : index
    %137 = vector.load %arg13[%c0_59, %c0_60] : memref<1x64xf32, #tpu.memory_space<vmem>>, vector<1x64xf32>
    %cst_61 = arith.constant dense<0.000000e+00> : vector<16xf32>
    %138 = vector.multi_reduction <add>, %135, %cst_61 [1] : vector<16x64xf32> to vector<16xf32>
    %139 = vector.shape_cast %138 : vector<16xf32> to vector<16x1xf32>
    %cst_62 = arith.constant 6.400000e+01 : f32
    %140 = vector.broadcast %cst_62 : f32 to vector<16x1xf32>
    %141 = arith.divf %139, %140 : vector<16x1xf32>
    %142 = vector.broadcast %141 : vector<16x1xf32> to vector<16x64xf32>
    %143 = arith.subf %135, %142 : vector<16x64xf32>
    %144 = arith.mulf %143, %143 : vector<16x64xf32>
    %cst_63 = arith.constant dense<0.000000e+00> : vector<16xf32>
    %145 = vector.multi_reduction <add>, %144, %cst_63 [1] : vector<16x64xf32> to vector<16xf32>
    %146 = vector.shape_cast %145 : vector<16xf32> to vector<16x1xf32>
    %cst_64 = arith.constant 6.400000e+01 : f32
    %147 = vector.broadcast %cst_64 : f32 to vector<16x1xf32>
    %148 = arith.divf %146, %147 : vector<16x1xf32>
    %149 = vector.broadcast %141 : vector<16x1xf32> to vector<16x64xf32>
    %150 = arith.subf %135, %149 : vector<16x64xf32>
    %cst_65 = arith.constant 9.99999997E-7 : f32
    %151 = vector.broadcast %cst_65 : f32 to vector<16x1xf32>
    %152 = arith.addf %148, %151 : vector<16x1xf32>
    %153 = math.rsqrt %152 : vector<16x1xf32>
    %154 = vector.broadcast %153 : vector<16x1xf32> to vector<16x64xf32>
    %155 = arith.mulf %150, %154 : vector<16x64xf32>
    %156 = vector.broadcast %136 : vector<1x64xf32> to vector<16x64xf32>
    %157 = arith.mulf %155, %156 : vector<16x64xf32>
    %158 = vector.broadcast %137 : vector<1x64xf32> to vector<16x64xf32>
    %159 = arith.addf %157, %158 : vector<16x64xf32>
    %160 = arith.truncf %159 : vector<16x64xf32> to vector<16x64xbf16>
    %c0_66 = arith.constant 0 : index
    %c0_67 = arith.constant 0 : index
    %161 = vector.load %arg14[%c0_66, %c0_67] : memref<64x256xbf16, #tpu.memory_space<vmem>>, vector<64x256xbf16>
    %cst_68 = arith.constant dense<0.000000e+00> : vector<16x256xf32>
    %162 = tpu.matmul %160, %161, %cst_68 {dimension_numbers = #tpu.dot_dimension_numbers<[1], [0], [0], [1], [0, 0, 1, 1], [], []>} : vector<16x64xbf16>, vector<64x256xbf16>, vector<16x256xf32> -> vector<16x256xf32>
    %c0_69 = arith.constant 0 : index
    %c0_70 = arith.constant 0 : index
    %163 = vector.load %arg15[%c0_69, %c0_70] : memref<1x256xf32, #tpu.memory_space<vmem>>, vector<1x256xf32>
    %164 = vector.broadcast %163 : vector<1x256xf32> to vector<16x256xf32>
    %165 = arith.addf %162, %164 : vector<16x256xf32>
    %cst_71 = arith.constant 5.000000e-01 : f32
    %166 = vector.broadcast %cst_71 : f32 to vector<16x256xf32>
    %167 = arith.mulf %166, %165 : vector<16x256xf32>
    %cst_72 = arith.constant 0.707106769 : f32
    %168 = vector.broadcast %cst_72 : f32 to vector<16x256xf32>
    %169 = arith.mulf %165, %168 : vector<16x256xf32>
    %170 = math.erf %169 : vector<16x256xf32>
    %cst_73 = arith.constant 1.000000e+00 : f32
    %171 = vector.broadcast %cst_73 : f32 to vector<16x256xf32>
    %172 = arith.addf %171, %170 : vector<16x256xf32>
    %173 = arith.mulf %167, %172 : vector<16x256xf32>
    %174 = arith.truncf %173 : vector<16x256xf32> to vector<16x256xbf16>
    %c0_74 = arith.constant 0 : index
    %c0_75 = arith.constant 0 : index
    %175 = vector.load %arg16[%c0_74, %c0_75] : memref<256x64xbf16, #tpu.memory_space<vmem>>, vector<256x64xbf16>
    %cst_76 = arith.constant dense<0.000000e+00> : vector<16x64xf32>
    %176 = tpu.matmul %174, %175, %cst_76 {dimension_numbers = #tpu.dot_dimension_numbers<[1], [0], [0], [1], [0, 0, 1, 1], [], []>} : vector<16x256xbf16>, vector<256x64xbf16>, vector<16x64xf32> -> vector<16x64xf32>
    %c0_77 = arith.constant 0 : index
    %c0_78 = arith.constant 0 : index
    %177 = vector.load %arg17[%c0_77, %c0_78] : memref<1x64xf32, #tpu.memory_space<vmem>>, vector<1x64xf32>
    %178 = vector.broadcast %177 : vector<1x64xf32> to vector<16x64xf32>
    %179 = arith.addf %176, %178 : vector<16x64xf32>
    %180 = arith.addf %135, %179 : vector<16x64xf32>
    %c0_79 = arith.constant 0 : index
    %c0_80 = arith.constant 0 : index
    %181 = vector.load %arg18[%c0_79, %c0_80] : memref<1x64xf32, #tpu.memory_space<vmem>>, vector<1x64xf32>
    %c0_81 = arith.constant 0 : index
    %c0_82 = arith.constant 0 : index
    %182 = vector.load %arg19[%c0_81, %c0_82] : memref<1x64xf32, #tpu.memory_space<vmem>>, vector<1x64xf32>
    %cst_83 = arith.constant dense<0.000000e+00> : vector<16xf32>
    %183 = vector.multi_reduction <add>, %180, %cst_83 [1] : vector<16x64xf32> to vector<16xf32>
    %184 = vector.shape_cast %183 : vector<16xf32> to vector<16x1xf32>
    %cst_84 = arith.constant 6.400000e+01 : f32
    %185 = vector.broadcast %cst_84 : f32 to vector<16x1xf32>
    %186 = arith.divf %184, %185 : vector<16x1xf32>
    %187 = vector.broadcast %186 : vector<16x1xf32> to vector<16x64xf32>
    %188 = arith.subf %180, %187 : vector<16x64xf32>
    %189 = arith.mulf %188, %188 : vector<16x64xf32>
    %cst_85 = arith.constant dense<0.000000e+00> : vector<16xf32>
    %190 = vector.multi_reduction <add>, %189, %cst_85 [1] : vector<16x64xf32> to vector<16xf32>
    %191 = vector.shape_cast %190 : vector<16xf32> to vector<16x1xf32>
    %cst_86 = arith.constant 6.400000e+01 : f32
    %192 = vector.broadcast %cst_86 : f32 to vector<16x1xf32>
    %193 = arith.divf %191, %192 : vector<16x1xf32>
    %194 = vector.broadcast %186 : vector<16x1xf32> to vector<16x64xf32>
    %195 = arith.subf %180, %194 : vector<16x64xf32>
    %cst_87 = arith.constant 9.99999997E-7 : f32
    %196 = vector.broadcast %cst_87 : f32 to vector<16x1xf32>
    %197 = arith.addf %193, %196 : vector<16x1xf32>
    %198 = math.rsqrt %197 : vector<16x1xf32>
    %199 = vector.broadcast %198 : vector<16x1xf32> to vector<16x64xf32>
    %200 = arith.mulf %195, %199 : vector<16x64xf32>
    %201 = vector.broadcast %181 : vector<1x64xf32> to vector<16x64xf32>
    %202 = arith.mulf %200, %201 : vector<16x64xf32>
    %203 = vector.broadcast %182 : vector<1x64xf32> to vector<16x64xf32>
    %204 = arith.addf %202, %203 : vector<16x64xf32>
    %205 = vector.shape_cast %204 : vector<16x64xf32> to vector<1x16x64xf32>
    %206 = arith.truncf %205 : vector<1x16x64xf32> to vector<1x16x64xbf16>
    %c0_88 = arith.constant 0 : index
    %c0_89 = arith.constant 0 : index
    %c0_90 = arith.constant 0 : index
    %207 = vector.load %arg20[%c0_88, %c0_89, %c0_90] : memref<1x16x64xbf16, #tpu.memory_space<vmem>>, vector<1x16x64xbf16>
    tpu.vector_store %arg20[%c0_88, %c0_89, %c0_90], %206 {strides = array<i32>} : memref<1x16x64xbf16, #tpu.memory_space<vmem>>, vector<1x16x64xbf16>,
    return
  }
  func.func @transform_0(%arg0: i32) -> (i32, i32, i32) {
    %c0_i32 = arith.constant 0 : i32
    %c0_i32_0 = arith.constant 0 : i32
    %c0_i32_1 = arith.constant 0 : i32
    return %arg0, %c0_i32, %c0_i32_0 : i32, i32, i32
  }
  func.func @transform_1(%arg0: i32) -> (i32, i32) {
    %c0_i32 = arith.constant 0 : i32
    %c0_i32_0 = arith.constant 0 : i32
    %c0_i32_1 = arith.constant 0 : i32
    return %c0_i32, %c0_i32_0 : i32, i32
  }
  func.func @transform_2(%arg0: i32) -> (i32, i32) {
    %c0_i32 = arith.constant 0 : i32
    %c0_i32_0 = arith.constant 0 : i32
    %c0_i32_1 = arith.constant 0 : i32
    return %c0_i32, %c0_i32_0 : i32, i32
  }
  func.func @transform_3(%arg0: i32) -> (i32, i32) {
    %c0_i32 = arith.constant 0 : i32
    %c0_i32_0 = arith.constant 0 : i32
    %c0_i32_1 = arith.constant 0 : i32
    return %c0_i32, %c0_i32_0 : i32, i32
  }
  func.func @transform_4(%arg0: i32) -> (i32, i32) {
    %c0_i32 = arith.constant 0 : i32
    %c0_i32_0 = arith.constant 0 : i32
    %c0_i32_1 = arith.constant 0 : i32
    return %c0_i32, %c0_i32_0 : i32, i32
  }
  func.func @transform_5(%arg0: i32) -> (i32, i32) {
    %c0_i32 = arith.constant 0 : i32
    %c0_i32_0 = arith.constant 0 : i32
    %c0_i32_1 = arith.constant 0 : i32
    return %c0_i32, %c0_i32_0 : i32, i32
  }
  func.func @transform_6(%arg0: i32) -> (i32, i32) {
    %c0_i32 = arith.constant 0 : i32
    %c0_i32_0 = arith.constant 0 : i32
    %c0_i32_1 = arith.constant 0 : i32
    return %c0_i32, %c0_i32_0 : i32, i32
  }
  func.func @transform_7(%arg0: i32) -> (i32, i32) {
    %c0_i32 = arith.constant 0 : i32
    %c0_i32_0 = arith.constant 0 : i32
    %c0_i32_1 = arith.constant 0 : i32
    return %c0_i32, %c0_i32_0 : i32, i32
  }
  func.func @transform_8(%arg0: i32) -> (i32, i32) {
    %c0_i32 = arith.constant 0 : i32
    %c0_i32_0 = arith.constant 0 : i32
    %c0_i32_1 = arith.constant 0 : i32
    return %c0_i32, %c0_i32_0 : i32, i32
  }
  func.func @transform_9(%arg0: i32) -> (i32, i32) {
    %c0_i32 = arith.constant 0 : i32
    %c0_i32_0 = arith.constant 0 : i32
    %c0_i32_1 = arith.constant 0 : i32
    return %c0_i32, %c0_i32_0 : i32, i32
  }
  func.func @transform_10(%arg0: i32) -> (i32, i32) {
    %c0_i32 = arith.constant 0 : i32
    %c0_i32_0 = arith.constant 0 : i32
    %c0_i32_1 = arith.constant 0 : i32
    return %c0_i32, %c0_i32_0 : i32, i32
  }
  func.func @transform_11(%arg0: i32) -> (i32, i32) {
    %c0_i32 = arith.constant 0 : i32
    %c0_i32_0 = arith.constant 0 : i32
    %c0_i32_1 = arith.constant 0 : i32
    return %c0_i32, %c0_i32_0 : i32, i32
  }
  func.func @transform_12(%arg0: i32) -> (i32, i32) {
    %c0_i32 = arith.constant 0 : i32
    %c0_i32_0 = arith.constant 0 : i32
    %c0_i32_1 = arith.constant 0 : i32
    return %c0_i32, %c0_i32_0 : i32, i32
  }
  func.func @transform_13(%arg0: i32) -> (i32, i32) {
    %c0_i32 = arith.constant 0 : i32
    %c0_i32_0 = arith.constant 0 : i32
    %c0_i32_1 = arith.constant 0 : i32
    return %c0_i32, %c0_i32_0 : i32, i32
  }
  func.func @transform_14(%arg0: i32) -> (i32, i32) {
    %c0_i32 = arith.constant 0 : i32
    %c0_i32_0 = arith.constant 0 : i32
    %c0_i32_1 = arith.constant 0 : i32
    return %c0_i32, %c0_i32_0 : i32, i32
  }
  func.func @transform_15(%arg0: i32) -> (i32, i32) {
    %c0_i32 = arith.constant 0 : i32
    %c0_i32_0 = arith.constant 0 : i32
    %c0_i32_1 = arith.constant 0 : i32
    return %c0_i32, %c0_i32_0 : i32, i32
  }
  func.func @transform_16(%arg0: i32) -> (i32, i32) {
    %c0_i32 = arith.constant 0 : i32
    %c0_i32_0 = arith.constant 0 : i32
    %c0_i32_1 = arith.constant 0 : i32
    return %c0_i32, %c0_i32_0 : i32, i32
  }
  func.func @transform_17(%arg0: i32) -> (i32, i32) {
    %c0_i32 = arith.constant 0 : i32
    %c0_i32_0 = arith.constant 0 : i32
    %c0_i32_1 = arith.constant 0 : i32
    return %c0_i32, %c0_i32_0 : i32, i32
  }
  func.func @transform_18(%arg0: i32) -> (i32, i32) {
    %c0_i32 = arith.constant 0 : i32
    %c0_i32_0 = arith.constant 0 : i32
    %c0_i32_1 = arith.constant 0 : i32
    return %c0_i32, %c0_i32_0 : i32, i32
  }
  func.func @transform_19(%arg0: i32) -> (i32, i32, i32) {
    %c0_i32 = arith.constant 0 : i32
    %c0_i32_0 = arith.constant 0 : i32
    %c0_i32_1 = arith.constant 0 : i32
    return %arg0, %c0_i32, %c0_i32_0 : i32, i32, i32
  }
}

</mosaic_0001>

<llo_original>
// kernel: _lambda_.3
$region0: #{_lambda_.3}
  #allocation0 [shape = 'u32[]', space=smem, size = 0x4, offset = 0x4, fixed_abs, tag = 'smem constant byte address 0x4 - core index']
  #allocation1 [shape = 'u32[144,128]{1,0:T(1,128)}', space=vmem, size = 0x12000, scoped, tag = 'internal scratch']
  %s0 = inlined_call_operand.vmem [shape: bf16[2,4,192], index: 0, kind: input, shape index: {}]
  %s1 = inlined_call_operand.vmem [shape: bf16[192,64], index: 1, kind: input, shape index: {}]
  %s2 = inlined_call_operand.vmem [shape: f32[1,64], index: 2, kind: input, shape index: {}]
  %s3 = inlined_call_operand.vmem [shape: f32[1,64], index: 3, kind: input, shape index: {}]
  %s4 = inlined_call_operand.vmem [shape: f32[5,64], index: 4, kind: input, shape index: {}]
  %s5 = inlined_call_operand.vmem [shape: bf16[2,16,64], index: 5, kind: output, shape index: {}]
  %s6 = sld [smem:[#allocation0]]
  $region53: #{_lambda_.3} parent=0
    _
  %s8 = ssub.s32 1, %s6
  %s9 = scalar_select 0, %s8, %s6
  loop: start=0, step=1, limit=4
  $region2: #{_lambda_.3} parent=0 // loop_pre_header
    _
  $region3: #{_lambda_.3} parent=0 // loop_header
    %s11 = sphi 0, %s15
    %p12 = scmp.ge.s32.totalorder %s11, 4
    %s21 = sphi 0, %s23
    %s24 = sphi 0, %s21
    %s25 = sphi 0, %s24
    %s41 = sphi 0, %s25
    %s45 = sphi 0, %s45
    %s47 = sphi 0, %s45
    %s48 = sphi 0, %s47
    %s62 = sphi 0, %s48
    %s66 = sphi 0, %s66
    %s68 = sphi 0, %s66
    %s69 = sphi 0, %s68
    %s83 = sphi 0, %s69
    %s87 = sphi 0, %s87
    %s89 = sphi 0, %s87
    %s90 = sphi 0, %s89
    %s104 = sphi 0, %s90
    %s108 = sphi 0, %s108
    %s110 = sphi 0, %s108
    %s111 = sphi 0, %s110
    %s125 = sphi 0, %s111
    %s131 = sphi 0, %s133
    %s134 = sphi 0, %s131
    %s135 = sphi 0, %s134
    %s151 = sphi 0, %s135
  $region4: #{_lambda_.3} parent=0 // loop_header_branch
    %14 = sbr.rel (%p12) target = $region8
  $region5: #{_lambda_.3} parent=0 // loop_body
    %s16 = ssub.s32 %s11, 1
    %s17 = ssub.s32 %s11, 2
    %s18 = sadd.s32 %s11, 1
    %s19 = ssub.s32 %s11, %s18
    %p20 = scmp.eq.s32.totalorder %s19, 0
    %s22 = sadd.s32 %s21, 1
    %s23 = scalar_select %p20, %s21, %s22
    %p26 = pneg %p20
    %p27 = scmp.eq.s32.totalorder %s11, 1
    %p28 = por %p26, %p27
    %p29 = scmp.ne.s32.totalorder %s21, %s24
    %p30 = scmp.eq.s32.totalorder %s11, 0
    %p31 = por %p29, %p30
    %p32 = scmp.ne.s32.totalorder %s21, %s24
    %p33 = scmp.eq.s32.totalorder %s16, 1
    %p34 = por %p32, %p33
    %p35 = scmp.ne.s32.totalorder %s24, %s25
    %p36 = scmp.eq.s32.totalorder %s16, 0
    %p37 = por %p35, %p36
    %p38 = scmp.ne.s32.totalorder %s24, %s25
    %p39 = scmp.eq.s32.totalorder %s17, 1
    %p40 = por %p38, %p39
    %p42 = scmp.ne.s32.totalorder %s25, %s41
    %p43 = scmp.eq.s32.totalorder %s17, 0
    %p44 = por %p42, %p43
    %s46 = sadd.s32 %s45, 1
    %p49 = scmp.eq.s32.totalorder %s11, 1
    %p50 = scmp.ne.s32.totalorder %s45, %s47
    %p51 = scmp.eq.s32.totalorder %s11, 0
    %p52 = por %p50, %p51
    %p53 = scmp.ne.s32.totalorder %s45, %s47
    %p54 = scmp.eq.s32.totalorder %s16, 1
    %p55 = por %p53, %p54
    %p56 = scmp.ne.s32.totalorder %s47, %s48
    %p57 = scmp.eq.s32.totalorder %s16, 0
    %p58 = por %p56, %p57
    %p59 = scmp.ne.s32.totalorder %s47, %s48
    %p60 = scmp.eq.s32.totalorder %s17, 1
    %p61 = por %p59, %p60
    %p63 = scmp.ne.s32.totalorder %s48, %s62
    %p64 = scmp.eq.s32.totalorder %s17, 0
    %p65 = por %p63, %p64
    %s67 = sadd.s32 %s66, 1
    %p70 = scmp.eq.s32.totalorder %s11, 1
    %p71 = scmp.ne.s32.totalorder %s66, %s68
    %p72 = scmp.eq.s32.totalorder %s11, 0
    %p73 = por %p71, %p72
    %p74 = scmp.ne.s32.totalorder %s66, %s68
    %p75 = scmp.eq.s32.totalorder %s16, 1
    %p76 = por %p74, %p75
    %p77 = scmp.ne.s32.totalorder %s68, %s69
    %p78 = scmp.eq.s32.totalorder %s16, 0
    %p79 = por %p77, %p78
    %p80 = scmp.ne.s32.totalorder %s68, %s69
    %p81 = scmp.eq.s32.totalorder %s17, 1
    %p82 = por %p80, %p81
    %p84 = scmp.ne.s32.totalorder %s69, %s83
    %p85 = scmp.eq.s32.totalorder %s17, 0
    %p86 = por %p84, %p85
    %s88 = sadd.s32 %s87, 1
    %p91 = scmp.eq.s32.totalorder %s11, 1
    %p92 = scmp.ne.s32.totalorder %s87, %s89
    %p93 = scmp.eq.s32.totalorder %s11, 0
    %p94 = por %p92, %p93
    %p95 = scmp.ne.s32.totalorder %s87, %s89
    %p96 = scmp.eq.s32.totalorder %s16, 1
    %p97 = por %p95, %p96
    %p98 = scmp.ne.s32.totalorder %s89, %s90
    %p99 = scmp.eq.s32.totalorder %s16, 0
    %p100 = por %p98, %p99
    %p101 = scmp.ne.s32.totalorder %s89, %s90
    %p102 = scmp.eq.s32.totalorder %s17, 1
    %p103 = por %p101, %p102
    %p105 = scmp.ne.s32.totalorder %s90, %s104
    %p106 = scmp.eq.s32.totalorder %s17, 0
    %p107 = por %p105, %p106
    %s109 = sadd.s32 %s108, 1
    %p112 = scmp.eq.s32.totalorder %s11, 1
    %p113 = scmp.ne.s32.totalorder %s108, %s110
    %p114 = scmp.eq.s32.totalorder %s11, 0
    %p115 = por %p113, %p114
    %p116 = scmp.ne.s32.totalorder %s108, %s110
    %p117 = scmp.eq.s32.totalorder %s16, 1
    %p118 = por %p116, %p117
    %p119 = scmp.ne.s32.totalorder %s110, %s111
    %p120 = scmp.eq.s32.totalorder %s16, 0
    %p121 = por %p119, %p120
    %p122 = scmp.ne.s32.totalorder %s110, %s111
    %p123 = scmp.eq.s32.totalorder %s17, 1
    %p124 = por %p122, %p123
    %p126 = scmp.ne.s32.totalorder %s111, %s125
    %p127 = scmp.eq.s32.totalorder %s17, 0
    %p128 = por %p126, %p127
    %s129 = ssub.s32 %s11, %s18
    %p130 = scmp.eq.s32.totalorder %s129, 0
    %s132 = sadd.s32 %s131, 1
    %s133 = scalar_select %p130, %s131, %s132
    %p136 = pneg %p130
    %p137 = scmp.eq.s32.totalorder %s11, 1
    %p138 = por %p136, %p137
    %p139 = scmp.ne.s32.totalorder %s131, %s134
    %p140 = scmp.eq.s32.totalorder %s11, 0
    %p141 = por %p139, %p140
    %p142 = scmp.ne.s32.totalorder %s131, %s134
    %p143 = scmp.eq.s32.totalorder %s16, 1
    %p144 = por %p142, %p143
    %p145 = scmp.ne.s32.totalorder %s134, %s135
    %p146 = scmp.eq.s32.totalorder %s16, 0
    %p147 = por %p145, %p146
    %p148 = scmp.ne.s32.totalorder %s134, %s135
    %p149 = scmp.eq.s32.totalorder %s17, 1
    %p150 = por %p148, %p149
    %p152 = scmp.ne.s32.totalorder %s135, %s151
    %p153 = scmp.eq.s32.totalorder %s17, 0
    %p154 = por %p152, %p153
    %p155 = scmp.le.s32.totalorder 1, %s11
    %p156 = scmp.lt.s32.totalorder %s11, 3
    %p157 = pnand %p155, %p156
    %p158 = pneg %p157
    // Predicated region
    $region9: #{_lambda_.3} parent=5 // pred_check
      _
    $region10: #{_lambda_.3} parent=5 // pred_check_branch
      %160 = sbr.rel (%p157) target = $region12
    $region11: #{_lambda_.3} parent=5 // pred_region
      %s161 = ssub.s32 %s11, 1
      // Predicated region
      $region13: #{_lambda_.3} parent=11 // pred_check
        %p162 = pneg %p58
      $region14: #{_lambda_.3} parent=11 // pred_check_branch
        %164 = sbr.rel (%p162) target = $region16
      $region15: #{_lambda_.3} parent=11 // pred_region
        _
      $region16: #{_lambda_.3} parent=11 // pred_fallthru
        _
      // Predicated region
      $region17: #{_lambda_.3} parent=11 // pred_check
        %p165 = pneg %p79
      $region18: #{_lambda_.3} parent=11 // pred_check_branch
        %167 = sbr.rel (%p165) target = $region20
      $region19: #{_lambda_.3} parent=11 // pred_region
        _
      $region20: #{_lambda_.3} parent=11 // pred_fallthru
        _
      // Predicated region
      $region21: #{_lambda_.3} parent=11 // pred_check
        %p168 = pneg %p100
      $region22: #{_lambda_.3} parent=11 // pred_check_branch
        %170 = sbr.rel (%p168) target = $region24
      $region23: #{_lambda_.3} parent=11 // pred_region
        _
      $region24: #{_lambda_.3} parent=11 // pred_fallthru
        _
      // Predicated region
      $region25: #{_lambda_.3} parent=11 // pred_check
        %p171 = pneg %p121
      $region26: #{_lambda_.3} parent=11 // pred_check_branch
        %173 = sbr.rel (%p171) target = $region28
      $region27: #{_lambda_.3} parent=11 // pred_region
        _
      $region28: #{_lambda_.3} parent=11 // pred_fallthru
        _
    $region12: #{_lambda_.3} parent=5 // pred_fallthru
      _
    %p174 = scmp.lt.s32.totalorder %s11, 2
    // Predicated region
    $region29: #{_lambda_.3} parent=5 // pred_check
      %p175 = pneg %p174
    $region30: #{_lambda_.3} parent=5 // pred_check_branch
      %177 = sbr.rel (%p175) target = $region32
    $region31: #{_lambda_.3} parent=5 // pred_region
      // Predicated region
      $region33: #{_lambda_.3} parent=31 // pred_check
        %p178 = pneg %p31
      $region34: #{_lambda_.3} parent=31 // pred_check_branch
        %180 = sbr.rel (%p178) target = $region36
      $region35: #{_lambda_.3} parent=31 // pred_region
        %p181 = scmp.lt.s32.totalorder %s11, 1
        %s182 = scalar_select %p181, %s11, 1
        %s183 = smul.addr %s182, 2
        %s184 = smul.addr %s183, 2
        %s185 = scalar_lea.vmem %s0, %s184
      $region36: #{_lambda_.3} parent=31 // pred_fallthru
        _
    $region32: #{_lambda_.3} parent=5 // pred_fallthru
      _
    %p186 = scmp.le.s32.totalorder 1, %s11
    %p187 = scmp.lt.s32.totalorder %s11, 3
    %p188 = pnand %p186, %p187
    %p189 = pneg %p188
    // Predicated region
    $region37: #{_lambda_.3} parent=5 // pred_check
      _
    $region38: #{_lambda_.3} parent=5 // pred_check_branch
      %191 = sbr.rel (%p188) target = $region40
    $region39: #{_lambda_.3} parent=5 // pred_region
      %s192 = ssub.s32 %s11, 1
      %p193 = scmp.lt.s32.totalorder %s16, 1
      %s194 = scalar_select %p193, %s16, 1
      %s195 = smul.addr %s194, 2
      %s196 = smul.addr %s195, 2
      %s197 = scalar_lea.vmem %s0, %s196
      %p198 = pneg %p37
      %p199 = pneg %p34
      %p200 = pneg %p58
      %p201 = pneg %p55
      %p202 = pneg %p79
      %p203 = pneg %p76
      %p204 = pneg %p100
      %p205 = pneg %p97
      %p206 = pneg %p121
      %p207 = pneg %p118
      %p208 = pneg %p147
      %p209 = pneg %p144
      %p210 = scmp.lt.s32.totalorder %s16, 1
      %s211 = scalar_select %p210, %s16, 1
      %s212 = smul.addr %s211, 2
      %s213 = smul.addr %s212, 4
      %s214 = scalar_lea.vmem %s5, %s213
      %p215 = scmp.lt.s32.totalorder %s16, 1
      %s216 = scalar_select %p215, %s16, 1
      %s217 = smul.addr %s216, 2
      %s218 = smul.addr %s217, 2
      %s219 = scalar_lea.vmem %s0, %s218
      %p220 = scmp.lt.s32.totalorder %s16, 1
      %s221 = scalar_select %p220, %s16, 1
      %s222 = smul.addr %s221, 2
      %s223 = smul.addr %s222, 4
      %s224 = scalar_lea.vmem %s5, %s223
      %v226 = vld [vmem:[%s219] sm:$0xf]
      %v227 = vld [vmem:[%s1] sm:$0xf]
      %v228 = vld [vmem:[%s1 + $0x4] sm:$0xf]
      %v229 = vld [vmem:[%s1 + $0x8] sm:$0xf]
      %v230 = vld [vmem:[%s1 + $0xc] sm:$0xf]
      %v231 = vld [vmem:[%s1 + $0x10] sm:$0xf]
      %v232 = vld [vmem:[%s1 + $0x14] sm:$0xf]
      %v233 = vld [vmem:[%s1 + $0x18] sm:$0xf]
      %v234 = vld [vmem:[%s1 + $0x1c] sm:$0xf]
      %v235 = vld [vmem:[%s1 + $0x20] sm:$0xf]
      %v236 = vld [vmem:[%s1 + $0x24] sm:$0xf]
      %v237 = vld [vmem:[%s1 + $0x28] sm:$0xf]
      %v238 = vld [vmem:[%s1 + $0x2c] sm:$0xf]
      %v239 = vld [vmem:[%s1 + $0x30] sm:$0xf]
      %v240 = vld [vmem:[%s1 + $0x34] sm:$0xf]
      %v241 = vld [vmem:[%s1 + $0x38] sm:$0xf]
      %v242 = vld [vmem:[%s1 + $0x3c] sm:$0xf]
      %v243 = vld [vmem:[%s1 + $0x40] sm:$0xf]
      %v244 = vld [vmem:[%s1 + $0x44] sm:$0xf]
      %v245 = vld [vmem:[%s1 + $0x48] sm:$0xf]
      %v246 = vld [vmem:[%s1 + $0x4c] sm:$0xf]
      %v247 = vld [vmem:[%s1 + $0x50] sm:$0xf]
      %v248 = vld [vmem:[%s1 + $0x54] sm:$0xf]
      %v249 = vld [vmem:[%s1 + $0x58] sm:$0xf]
      %v250 = vld [vmem:[%s1 + $0x5c] sm:$0xf]
      %v251 = vld [vmem:[%s2] sm:$0x1]
      %v253 = vlaneseq
      %v254 = vshrl.u32 %v253, 7
      %v255 = vsub.s32 0, %v254
      %v256 = vrot.slane %v251, %v255
      %v260 = vunpack.c.l.s4 1983009808
      %v261 = vunpack.c.0.s8 %v260
      %v262 = vlaneseq
      %v263 = vshrl.u32 %v262, 7
      %v264 = vsub.s32 %v261, %v263
      %v265 = vrot.slane %v226, %v264
      %v266 = vcombine.high %v265, %v265
      %v292 = vunpack.c.l.b16 %v227
      %v293 = vunpack.c.l.b16 %v228
      %v294 = vunpack.c.l.b16 %v229
      %v295 = vunpack.c.l.b16 %v230
      %v296 = vunpack.c.l.b16 %v231
      %v297 = vunpack.c.l.b16 %v232
      %v298 = vunpack.c.l.b16 %v233
      %v299 = vunpack.c.l.b16 %v234
      %v300 = vunpack.c.l.b16 %v235
      %v301 = vunpack.c.l.b16 %v236
      %v302 = vunpack.c.l.b16 %v237
      %v303 = vunpack.c.l.b16 %v238
      %v304 = vunpack.c.l.b16 %v239
      %v305 = vunpack.c.l.b16 %v240
      %v306 = vunpack.c.l.b16 %v241
      %v307 = vunpack.c.l.b16 %v242
      %v308 = vunpack.c.l.b16 %v243
      %v309 = vunpack.c.l.b16 %v244
      %v310 = vunpack.c.l.b16 %v245
      %v311 = vunpack.c.l.b16 %v246
      %v312 = vunpack.c.l.b16 %v247
      %v313 = vunpack.c.l.b16 %v248
      %v314 = vunpack.c.l.b16 %v249
      %v315 = vunpack.c.l.b16 %v250
      %v316 = vpack.c.b16 %v293, %v292
      %v317 = vpack.c.b16 %v295, %v294
      %v318 = vpack.c.b16 %v297, %v296
      %v319 = vpack.c.b16 %v299, %v298
      %v320 = vpack.c.b16 %v301, %v300
      %v321 = vpack.c.b16 %v303, %v302
      %v322 = vpack.c.b16 %v305, %v304
      %v323 = vpack.c.b16 %v307, %v306
      %v324 = vpack.c.b16 %v309, %v308
      %v325 = vpack.c.b16 %v311, %v310
      %v326 = vpack.c.b16 %v313, %v312
      %v327 = vpack.c.b16 %v315, %v314
      %vm340 = vcmask 523264
      %v342 = vsel %vm340, %v266, 0
      %344 = vmatprep.subr.bf16.mxu0 0
      %345 = vmatpush1.bf16.msra.mxu0 %v316
      %346 = vmatprep.subr.bf16.mxu0 0
      %347 = vmatpush1.bf16.msra.mxu0 %v317
      %348 = vmatprep.subr.bf16.mxu0 0
      %349 = vmatpush1.bf16.msra.mxu0 %v318
      %350 = vmatprep.subr.bf16.mxu0 0
      %351 = vmatpush1.bf16.msra.mxu0 %v319
      %352 = vmatprep.subr.bf16.mxu0 0
      %353 = vmatpush1.bf16.msra.mxu0 %v320
      %354 = vmatprep.subr.bf16.mxu0 0
      %355 = vmatpush1.bf16.msra.mxu0 %v321
      %356 = vmatprep.subr.bf16.mxu0 0
      %357 = vmatpush1.bf16.msra.mxu0 %v322
      %358 = vmatprep.subr.bf16.mxu0 0
      %359 = vmatpush1.bf16.msra.mxu0 %v323
      %360 = vmatprep.subr.bf16.mxu0 0
      %361 = vmatpush1.bf16.msra.mxu0 %v324
      %362 = vmatprep.subr.bf16.mxu0 0
      %363 = vmatpush1.bf16.msra.mxu0 %v325
      %364 = vmatprep.subr.bf16.mxu0 0
      %365 = vmatpush1.bf16.msra.mxu0 %v326
      %366 = vmatprep.subr.bf16.mxu0 0
      %367 = vmatpush1.bf16.msra.mxu0 %v327
      %368 = vmatprep.subr.bf16.mxu0 0
      %369 = vmatpush1.bf16.msra.mxu0 0
      %370 = vmatprep.subr.bf16.mxu0 0
      %371 = vmatpush1.bf16.msra.mxu0 0
      %372 = vmatprep.subr.bf16.mxu0 0
      %373 = vmatpush1.bf16.msra.mxu0 0
      %374 = vmatprep.subr.bf16.mxu0 0
      %375 = vmatpush1.bf16.msra.mxu0 0
      %376 = vmatprep.mubr.bf16.mxu0 %v342
      %377 = vmatmul.mubr.bf16.gmra.mrb[0].mxu0 %v265
      %v378 = vpop.f32.mrb[0].mxu0
      %v379 = vadd.f32 %v256, %v378
      %v380 = vpop.f32.mrb[0].mxu0
      %v381 = vpop.f32.mrb[0].mxu0
      %v382 = vpop.f32.mrb[0].mxu0
      %383 = vdwg.mxu0
      %v384 = vld [vmem:[%s4 + $0x1] sm:$0xf]
      %v385 = vadd.f32 %v379, %v384
      %v386 = vld [vmem:[%s3] sm:$0x1]
      %v387 = vld [vmem:[%s4] sm:$0x1]
      %v388 = vadd.f32 %v386, %v387
      %v390 = vrot.slane %v385, 7
      %vm392 = vcmask 1040384
      %v393 = vsel %vm392, %v388, %v390
      %vm394 = vcmask 1044480
      %v395 = vsel %vm394, %v393, 0.0
      %v396 = vpack.c.bf16 0.0, %v395
      %v398 = vunpack.c.l.b16 %v396
      %v399 = vunpack.c.h.b16 %v396
      %v400 = vpack.c.b16 %v398, %v398
      %v401 = vpack.c.b16 %v399, %v399
      %vm404 = vcmask 519168
      %405 = vst.msk [vmem:[%s224] sm:$0xf] %vm404, %v400
      %406 = vst.msk [vmem:[%s224 + $0x4] sm:$0xf] %vm404, %v401
      %p407 = scmp.lt.s32.totalorder %s16, 1
      %s408 = scalar_select %p407, %s16, 1
      %s409 = smul.addr %s408, 2
      %s410 = smul.addr %s409, 4
      %s411 = scalar_lea.vmem %s5, %s410
      // Predicated region
      $region41: #{_lambda_.3} parent=39 // pred_check
        %p412 = pneg %p144
      $region42: #{_lambda_.3} parent=39 // pred_check_branch
        %414 = sbr.rel (%p412) target = $region44
      $region43: #{_lambda_.3} parent=39 // pred_region
        _
      $region44: #{_lambda_.3} parent=39 // pred_fallthru
        _
    $region40: #{_lambda_.3} parent=5 // pred_fallthru
      _
    %p415 = scmp.le.s32.totalorder 2, %s11
    // Predicated region
    $region45: #{_lambda_.3} parent=5 // pred_check
      %p416 = pneg %p415
    $region46: #{_lambda_.3} parent=5 // pred_check_branch
      %418 = sbr.rel (%p416) target = $region48
    $region47: #{_lambda_.3} parent=5 // pred_region
      %s419 = ssub.s32 %s11, 2
      // Predicated region
      $region49: #{_lambda_.3} parent=47 // pred_check
        %p420 = pneg %p150
      $region50: #{_lambda_.3} parent=47 // pred_check_branch
        %422 = sbr.rel (%p420) target = $region52
      $region51: #{_lambda_.3} parent=47 // pred_region
        %p423 = scmp.lt.s32.totalorder %s17, 1
        %s424 = scalar_select %p423, %s17, 1
        %s425 = smul.addr %s424, 2
        %s426 = smul.addr %s425, 4
        %s427 = scalar_lea.vmem %s5, %s426
      $region52: #{_lambda_.3} parent=47 // pred_fallthru
        _
    $region48: #{_lambda_.3} parent=5 // pred_fallthru
      _
  $region6: #{_lambda_.3} parent=0 // loop_footer
    %s15 = sadd.s32 1, %s11
  $region7: #{_lambda_.3} parent=0 // loop_footer_branch
    %10 = sbr.rel target = $region3
  $region8: #{_lambda_.3} parent=0 // loop_exit
    _

// kernel: _lambda_.4
$region0: #{_lambda_.4}
  #allocation0 [shape = 'u32[]', space=smem, size = 0x4, offset = 0x4, fixed_abs, tag = 'smem constant byte address 0x4 - core index']
  #allocation1 [shape = 'u32[144,128]{1,0:T(1,128)}', space=vmem, size = 0x12000, scoped, tag = 'internal scratch']
  #allocation2 [shape = 'bf16[16,64]{1,0:T(16,128)(2,1)}', space=vmem, size = 0x1000, scoped, tag = 'scratch operand']
  %s0 = inlined_call_operand.vmem [shape: bf16[2,16,64], index: 0, kind: input, shape index: {}]
  %s1 = inlined_call_operand.vmem [shape: f32[1,64], index: 1, kind: input, shape index: {}]
  %s2 = inlined_call_operand.vmem [shape: f32[1,64], index: 2, kind: input, shape index: {}]
  %s3 = inlined_call_operand.vmem [shape: bf16[64,64], index: 3, kind: input, shape index: {}]
  %s4 = inlined_call_operand.vmem [shape: f32[1,64], index: 4, kind: input, shape index: {}]
  %s5 = inlined_call_operand.vmem [shape: bf16[64,64], index: 5, kind: input, shape index: {}]
  %s6 = inlined_call_operand.vmem [shape: f32[1,64], index: 6, kind: input, shape index: {}]
  %s7 = inlined_call_operand.vmem [shape: bf16[64,64], index: 7, kind: input, shape index: {}]
  %s8 = inlined_call_operand.vmem [shape: f32[1,64], index: 8, kind: input, shape index: {}]
  %s9 = inlined_call_operand.vmem [shape: bf16[64,64], index: 9, kind: input, shape index: {}]
  %s10 = inlined_call_operand.vmem [shape: f32[1,64], index: 10, kind: input, shape index: {}]
  %s11 = inlined_call_operand.vmem [shape: f32[1,64], index: 11, kind: input, shape index: {}]
  %s12 = inlined_call_operand.vmem [shape: f32[1,64], index: 12, kind: input, shape index: {}]
  %s13 = inlined_call_operand.vmem [shape: bf16[64,256], index: 13, kind: input, shape index: {}]
  %s14 = inlined_call_operand.vmem [shape: f32[1,256], index: 14, kind: input, shape index: {}]
  %s15 = inlined_call_operand.vmem [shape: bf16[256,64], index: 15, kind: input, shape index: {}]
  %s16 = inlined_call_operand.vmem [shape: f32[1,64], index: 16, kind: input, shape index: {}]
  %s17 = inlined_call_operand.vmem [shape: f32[1,64], index: 17, kind: input, shape index: {}]
  %s18 = inlined_call_operand.vmem [shape: f32[1,64], index: 18, kind: input, shape index: {}]
  %s19 = inlined_call_operand.vmem [shape: bf16[2,16,64], index: 19, kind: output, shape index: {}]
  %s20 = sld [smem:[#allocation0]]
  $region109: #{_lambda_.4} parent=0
    _
  %s22 = ssub.s32 1, %s20
  %s23 = scalar_select 0, %s22, %s20
  loop: start=0, step=1, limit=4
  $region2: #{_lambda_.4} parent=0 // loop_pre_header
    _
  $region3: #{_lambda_.4} parent=0 // loop_header
    %s25 = sphi 0, %s29
    %p26 = scmp.ge.s32.totalorder %s25, 4
    %s35 = sphi 0, %s37
    %s38 = sphi 0, %s35
    %s39 = sphi 0, %s38
    %s55 = sphi 0, %s39
    %s59 = sphi 0, %s59
    %s61 = sphi 0, %s59
    %s62 = sphi 0, %s61
    %s76 = sphi 0, %s62
    %s80 = sphi 0, %s80
    %s82 = sphi 0, %s80
    %s83 = sphi 0, %s82
    %s97 = sphi 0, %s83
    %s101 = sphi 0, %s101
    %s103 = sphi 0, %s101
    %s104 = sphi 0, %s103
    %s118 = sphi 0, %s104
    %s122 = sphi 0, %s122
    %s124 = sphi 0, %s122
    %s125 = sphi 0, %s124
    %s139 = sphi 0, %s125
    %s143 = sphi 0, %s143
    %s145 = sphi 0, %s143
    %s146 = sphi 0, %s145
    %s160 = sphi 0, %s146
    %s164 = sphi 0, %s164
    %s166 = sphi 0, %s164
    %s167 = sphi 0, %s166
    %s181 = sphi 0, %s167
    %s185 = sphi 0, %s185
    %s187 = sphi 0, %s185
    %s188 = sphi 0, %s187
    %s202 = sphi 0, %s188
    %s206 = sphi 0, %s206
    %s208 = sphi 0, %s206
    %s209 = sphi 0, %s208
    %s223 = sphi 0, %s209
    %s227 = sphi 0, %s227
    %s229 = sphi 0, %s227
    %s230 = sphi 0, %s229
    %s244 = sphi 0, %s230
    %s248 = sphi 0, %s248
    %s250 = sphi 0, %s248
    %s251 = sphi 0, %s250
    %s265 = sphi 0, %s251
    %s269 = sphi 0, %s269
    %s271 = sphi 0, %s269
    %s272 = sphi 0, %s271
    %s286 = sphi 0, %s272
    %s290 = sphi 0, %s290
    %s292 = sphi 0, %s290
    %s293 = sphi 0, %s292
    %s307 = sphi 0, %s293
    %s311 = sphi 0, %s311
    %s313 = sphi 0, %s311
    %s314 = sphi 0, %s313
    %s328 = sphi 0, %s314
    %s332 = sphi 0, %s332
    %s334 = sphi 0, %s332
    %s335 = sphi 0, %s334
    %s349 = sphi 0, %s335
    %s353 = sphi 0, %s353
    %s355 = sphi 0, %s353
    %s356 = sphi 0, %s355
    %s370 = sphi 0, %s356
    %s374 = sphi 0, %s374
    %s376 = sphi 0, %s374
    %s377 = sphi 0, %s376
    %s391 = sphi 0, %s377
    %s395 = sphi 0, %s395
    %s397 = sphi 0, %s395
    %s398 = sphi 0, %s397
    %s412 = sphi 0, %s398
    %s416 = sphi 0, %s416
    %s418 = sphi 0, %s416
    %s419 = sphi 0, %s418
    %s433 = sphi 0, %s419
    %s439 = sphi 0, %s441
    %s442 = sphi 0, %s439
    %s443 = sphi 0, %s442
    %s459 = sphi 0, %s443
  $region4: #{_lambda_.4} parent=0 // loop_header_branch
    %28 = sbr.rel (%p26) target = $region8
  $region5: #{_lambda_.4} parent=0 // loop_body
    %s30 = ssub.s32 %s25, 1
    %s31 = ssub.s32 %s25, 2
    %s32 = sadd.s32 %s25, 1
    %s33 = ssub.s32 %s25, %s32
    %p34 = scmp.eq.s32.totalorder %s33, 0
    %s36 = sadd.s32 %s35, 1
    %s37 = scalar_select %p34, %s35, %s36
    %p40 = pneg %p34
    %p41 = scmp.eq.s32.totalorder %s25, 1
    %p42 = por %p40, %p41
    %p43 = scmp.ne.s32.totalorder %s35, %s38
    %p44 = scmp.eq.s32.totalorder %s25, 0
    %p45 = por %p43, %p44
    %p46 = scmp.ne.s32.totalorder %s35, %s38
    %p47 = scmp.eq.s32.totalorder %s30, 1
    %p48 = por %p46, %p47
    %p49 = scmp.ne.s32.totalorder %s38, %s39
    %p50 = scmp.eq.s32.totalorder %s30, 0
    %p51 = por %p49, %p50
    %p52 = scmp.ne.s32.totalorder %s38, %s39
    %p53 = scmp.eq.s32.totalorder %s31, 1
    %p54 = por %p52, %p53
    %p56 = scmp.ne.s32.totalorder %s39, %s55
    %p57 = scmp.eq.s32.totalorder %s31, 0
    %p58 = por %p56, %p57
    %s60 = sadd.s32 %s59, 1
    %p63 = scmp.eq.s32.totalorder %s25, 1
    %p64 = scmp.ne.s32.totalorder %s59, %s61
    %p65 = scmp.eq.s32.totalorder %s25, 0
    %p66 = por %p64, %p65
    %p67 = scmp.ne.s32.totalorder %s59, %s61
    %p68 = scmp.eq.s32.totalorder %s30, 1
    %p69 = por %p67, %p68
    %p70 = scmp.ne.s32.totalorder %s61, %s62
    %p71 = scmp.eq.s32.totalorder %s30, 0
    %p72 = por %p70, %p71
    %p73 = scmp.ne.s32.totalorder %s61, %s62
    %p74 = scmp.eq.s32.totalorder %s31, 1
    %p75 = por %p73, %p74
    %p77 = scmp.ne.s32.totalorder %s62, %s76
    %p78 = scmp.eq.s32.totalorder %s31, 0
    %p79 = por %p77, %p78
    %s81 = sadd.s32 %s80, 1
    %p84 = scmp.eq.s32.totalorder %s25, 1
    %p85 = scmp.ne.s32.totalorder %s80, %s82
    %p86 = scmp.eq.s32.totalorder %s25, 0
    %p87 = por %p85, %p86
    %p88 = scmp.ne.s32.totalorder %s80, %s82
    %p89 = scmp.eq.s32.totalorder %s30, 1
    %p90 = por %p88, %p89
    %p91 = scmp.ne.s32.totalorder %s82, %s83
    %p92 = scmp.eq.s32.totalorder %s30, 0
    %p93 = por %p91, %p92
    %p94 = scmp.ne.s32.totalorder %s82, %s83
    %p95 = scmp.eq.s32.totalorder %s31, 1
    %p96 = por %p94, %p95
    %p98 = scmp.ne.s32.totalorder %s83, %s97
    %p99 = scmp.eq.s32.totalorder %s31, 0
    %p100 = por %p98, %p99
    %s102 = sadd.s32 %s101, 1
    %p105 = scmp.eq.s32.totalorder %s25, 1
    %p106 = scmp.ne.s32.totalorder %s101, %s103
    %p107 = scmp.eq.s32.totalorder %s25, 0
    %p108 = por %p106, %p107
    %p109 = scmp.ne.s32.totalorder %s101, %s103
    %p110 = scmp.eq.s32.totalorder %s30, 1
    %p111 = por %p109, %p110
    %p112 = scmp.ne.s32.totalorder %s103, %s104
    %p113 = scmp.eq.s32.totalorder %s30, 0
    %p114 = por %p112, %p113
    %p115 = scmp.ne.s32.totalorder %s103, %s104
    %p116 = scmp.eq.s32.totalorder %s31, 1
    %p117 = por %p115, %p116
    %p119 = scmp.ne.s32.totalorder %s104, %s118
    %p120 = scmp.eq.s32.totalorder %s31, 0
    %p121 = por %p119, %p120
    %s123 = sadd.s32 %s122, 1
    %p126 = scmp.eq.s32.totalorder %s25, 1
    %p127 = scmp.ne.s32.totalorder %s122, %s124
    %p128 = scmp.eq.s32.totalorder %s25, 0
    %p129 = por %p127, %p128
    %p130 = scmp.ne.s32.totalorder %s122, %s124
    %p131 = scmp.eq.s32.totalorder %s30, 1
    %p132 = por %p130, %p131
    %p133 = scmp.ne.s32.totalorder %s124, %s125
    %p134 = scmp.eq.s32.totalorder %s30, 0
    %p135 = por %p133, %p134
    %p136 = scmp.ne.s32.totalorder %s124, %s125
    %p137 = scmp.eq.s32.totalorder %s31, 1
    %p138 = por %p136, %p137
    %p140 = scmp.ne.s32.totalorder %s125, %s139
    %p141 = scmp.eq.s32.totalorder %s31, 0
    %p142 = por %p140, %p141
    %s144 = sadd.s32 %s143, 1
    %p147 = scmp.eq.s32.totalorder %s25, 1
    %p148 = scmp.ne.s32.totalorder %s143, %s145
    %p149 = scmp.eq.s32.totalorder %s25, 0
    %p150 = por %p148, %p149
    %p151 = scmp.ne.s32.totalorder %s143, %s145
    %p152 = scmp.eq.s32.totalorder %s30, 1
    %p153 = por %p151, %p152
    %p154 = scmp.ne.s32.totalorder %s145, %s146
    %p155 = scmp.eq.s32.totalorder %s30, 0
    %p156 = por %p154, %p155
    %p157 = scmp.ne.s32.totalorder %s145, %s146
    %p158 = scmp.eq.s32.totalorder %s31, 1
    %p159 = por %p157, %p158
    %p161 = scmp.ne.s32.totalorder %s146, %s160
    %p162 = scmp.eq.s32.totalorder %s31, 0
    %p163 = por %p161, %p162
    %s165 = sadd.s32 %s164, 1
    %p168 = scmp.eq.s32.totalorder %s25, 1
    %p169 = scmp.ne.s32.totalorder %s164, %s166
    %p170 = scmp.eq.s32.totalorder %s25, 0
    %p171 = por %p169, %p170
    %p172 = scmp.ne.s32.totalorder %s164, %s166
    %p173 = scmp.eq.s32.totalorder %s30, 1
    %p174 = por %p172, %p173
    %p175 = scmp.ne.s32.totalorder %s166, %s167
    %p176 = scmp.eq.s32.totalorder %s30, 0
    %p177 = por %p175, %p176
    %p178 = scmp.ne.s32.totalorder %s166, %s167
    %p179 = scmp.eq.s32.totalorder %s31, 1
    %p180 = por %p178, %p179
    %p182 = scmp.ne.s32.totalorder %s167, %s181
    %p183 = scmp.eq.s32.totalorder %s31, 0
    %p184 = por %p182, %p183
    %s186 = sadd.s32 %s185, 1
    %p189 = scmp.eq.s32.totalorder %s25, 1
    %p190 = scmp.ne.s32.totalorder %s185, %s187
    %p191 = scmp.eq.s32.totalorder %s25, 0
    %p192 = por %p190, %p191
    %p193 = scmp.ne.s32.totalorder %s185, %s187
    %p194 = scmp.eq.s32.totalorder %s30, 1
    %p195 = por %p193, %p194
    %p196 = scmp.ne.s32.totalorder %s187, %s188
    %p197 = scmp.eq.s32.totalorder %s30, 0
    %p198 = por %p196, %p197
    %p199 = scmp.ne.s32.totalorder %s187, %s188
    %p200 = scmp.eq.s32.totalorder %s31, 1
    %p201 = por %p199, %p200
    %p203 = scmp.ne.s32.totalorder %s188, %s202
    %p204 = scmp.eq.s32.totalorder %s31, 0
    %p205 = por %p203, %p204
    %s207 = sadd.s32 %s206, 1
    %p210 = scmp.eq.s32.totalorder %s25, 1
    %p211 = scmp.ne.s32.totalorder %s206, %s208
    %p212 = scmp.eq.s32.totalorder %s25, 0
    %p213 = por %p211, %p212
    %p214 = scmp.ne.s32.totalorder %s206, %s208
    %p215 = scmp.eq.s32.totalorder %s30, 1
    %p216 = por %p214, %p215
    %p217 = scmp.ne.s32.totalorder %s208, %s209
    %p218 = scmp.eq.s32.totalorder %s30, 0
    %p219 = por %p217, %p218
    %p220 = scmp.ne.s32.totalorder %s208, %s209
    %p221 = scmp.eq.s32.totalorder %s31, 1
    %p222 = por %p220, %p221
    %p224 = scmp.ne.s32.totalorder %s209, %s223
    %p225 = scmp.eq.s32.totalorder %s31, 0
    %p226 = por %p224, %p225
    %s228 = sadd.s32 %s227, 1
    %p231 = scmp.eq.s32.totalorder %s25, 1
    %p232 = scmp.ne.s32.totalorder %s227, %s229
    %p233 = scmp.eq.s32.totalorder %s25, 0
    %p234 = por %p232, %p233
    %p235 = scmp.ne.s32.totalorder %s227, %s229
    %p236 = scmp.eq.s32.totalorder %s30, 1
    %p237 = por %p235, %p236
    %p238 = scmp.ne.s32.totalorder %s229, %s230
    %p239 = scmp.eq.s32.totalorder %s30, 0
    %p240 = por %p238, %p239
    %p241 = scmp.ne.s32.totalorder %s229, %s230
    %p242 = scmp.eq.s32.totalorder %s31, 1
    %p243 = por %p241, %p242
    %p245 = scmp.ne.s32.totalorder %s230, %s244
    %p246 = scmp.eq.s32.totalorder %s31, 0
    %p247 = por %p245, %p246
    %s249 = sadd.s32 %s248, 1
    %p252 = scmp.eq.s32.totalorder %s25, 1
    %p253 = scmp.ne.s32.totalorder %s248, %s250
    %p254 = scmp.eq.s32.totalorder %s25, 0
    %p255 = por %p253, %p254
    %p256 = scmp.ne.s32.totalorder %s248, %s250
    %p257 = scmp.eq.s32.totalorder %s30, 1
    %p258 = por %p256, %p257
    %p259 = scmp.ne.s32.totalorder %s250, %s251
    %p260 = scmp.eq.s32.totalorder %s30, 0
    %p261 = por %p259, %p260
    %p262 = scmp.ne.s32.totalorder %s250, %s251
    %p263 = scmp.eq.s32.totalorder %s31, 1
    %p264 = por %p262, %p263
    %p266 = scmp.ne.s32.totalorder %s251, %s265
    %p267 = scmp.eq.s32.totalorder %s31, 0
    %p268 = por %p266, %p267
    %s270 = sadd.s32 %s269, 1
    %p273 = scmp.eq.s32.totalorder %s25, 1
    %p274 = scmp.ne.s32.totalorder %s269, %s271
    %p275 = scmp.eq.s32.totalorder %s25, 0
    %p276 = por %p274, %p275
    %p277 = scmp.ne.s32.totalorder %s269, %s271
    %p278 = scmp.eq.s32.totalorder %s30, 1
    %p279 = por %p277, %p278
    %p280 = scmp.ne.s32.totalorder %s271, %s272
    %p281 = scmp.eq.s32.totalorder %s30, 0
    %p282 = por %p280, %p281
    %p283 = scmp.ne.s32.totalorder %s271, %s272
    %p284 = scmp.eq.s32.totalorder %s31, 1
    %p285 = por %p283, %p284
    %p287 = scmp.ne.s32.totalorder %s272, %s286
    %p288 = scmp.eq.s32.totalorder %s31, 0
    %p289 = por %p287, %p288
    %s291 = sadd.s32 %s290, 1
    %p294 = scmp.eq.s32.totalorder %s25, 1
    %p295 = scmp.ne.s32.totalorder %s290, %s292
    %p296 = scmp.eq.s32.totalorder %s25, 0
    %p297 = por %p295, %p296
    %p298 = scmp.ne.s32.totalorder %s290, %s292
    %p299 = scmp.eq.s32.totalorder %s30, 1
    %p300 = por %p298, %p299
    %p301 = scmp.ne.s32.totalorder %s292, %s293
    %p302 = scmp.eq.s32.totalorder %s30, 0
    %p303 = por %p301, %p302
    %p304 = scmp.ne.s32.totalorder %s292, %s293
    %p305 = scmp.eq.s32.totalorder %s31, 1
    %p306 = por %p304, %p305
    %p308 = scmp.ne.s32.totalorder %s293, %s307
    %p309 = scmp.eq.s32.totalorder %s31, 0
    %p310 = por %p308, %p309
    %s312 = sadd.s32 %s311, 1
    %p315 = scmp.eq.s32.totalorder %s25, 1
    %p316 = scmp.ne.s32.totalorder %s311, %s313
    %p317 = scmp.eq.s32.totalorder %s25, 0
    %p318 = por %p316, %p317
    %p319 = scmp.ne.s32.totalorder %s311, %s313
    %p320 = scmp.eq.s32.totalorder %s30, 1
    %p321 = por %p319, %p320
    %p322 = scmp.ne.s32.totalorder %s313, %s314
    %p323 = scmp.eq.s32.totalorder %s30, 0
    %p324 = por %p322, %p323
    %p325 = scmp.ne.s32.totalorder %s313, %s314
    %p326 = scmp.eq.s32.totalorder %s31, 1
    %p327 = por %p325, %p326
    %p329 = scmp.ne.s32.totalorder %s314, %s328
    %p330 = scmp.eq.s32.totalorder %s31, 0
    %p331 = por %p329, %p330
    %s333 = sadd.s32 %s332, 1
    %p336 = scmp.eq.s32.totalorder %s25, 1
    %p337 = scmp.ne.s32.totalorder %s332, %s334
    %p338 = scmp.eq.s32.totalorder %s25, 0
    %p339 = por %p337, %p338
    %p340 = scmp.ne.s32.totalorder %s332, %s334
    %p341 = scmp.eq.s32.totalorder %s30, 1
    %p342 = por %p340, %p341
    %p343 = scmp.ne.s32.totalorder %s334, %s335
    %p344 = scmp.eq.s32.totalorder %s30, 0
    %p345 = por %p343, %p344
    %p346 = scmp.ne.s32.totalorder %s334, %s335
    %p347 = scmp.eq.s32.totalorder %s31, 1
    %p348 = por %p346, %p347
    %p350 = scmp.ne.s32.totalorder %s335, %s349
    %p351 = scmp.eq.s32.totalorder %s31, 0
    %p352 = por %p350, %p351
    %s354 = sadd.s32 %s353, 1
    %p357 = scmp.eq.s32.totalorder %s25, 1
    %p358 = scmp.ne.s32.totalorder %s353, %s355
    %p359 = scmp.eq.s32.totalorder %s25, 0
    %p360 = por %p358, %p359
    %p361 = scmp.ne.s32.totalorder %s353, %s355
    %p362 = scmp.eq.s32.totalorder %s30, 1
    %p363 = por %p361, %p362
    %p364 = scmp.ne.s32.totalorder %s355, %s356
    %p365 = scmp.eq.s32.totalorder %s30, 0
    %p366 = por %p364, %p365
    %p367 = scmp.ne.s32.totalorder %s355, %s356
    %p368 = scmp.eq.s32.totalorder %s31, 1
    %p369 = por %p367, %p368
    %p371 = scmp.ne.s32.totalorder %s356, %s370
    %p372 = scmp.eq.s32.totalorder %s31, 0
    %p373 = por %p371, %p372
    %s375 = sadd.s32 %s374, 1
    %p378 = scmp.eq.s32.totalorder %s25, 1
    %p379 = scmp.ne.s32.totalorder %s374, %s376
    %p380 = scmp.eq.s32.totalorder %s25, 0
    %p381 = por %p379, %p380
    %p382 = scmp.ne.s32.totalorder %s374, %s376
    %p383 = scmp.eq.s32.totalorder %s30, 1
    %p384 = por %p382, %p383
    %p385 = scmp.ne.s32.totalorder %s376, %s377
    %p386 = scmp.eq.s32.totalorder %s30, 0
    %p387 = por %p385, %p386
    %p388 = scmp.ne.s32.totalorder %s376, %s377
    %p389 = scmp.eq.s32.totalorder %s31, 1
    %p390 = por %p388, %p389
    %p392 = scmp.ne.s32.totalorder %s377, %s391
    %p393 = scmp.eq.s32.totalorder %s31, 0
    %p394 = por %p392, %p393
    %s396 = sadd.s32 %s395, 1
    %p399 = scmp.eq.s32.totalorder %s25, 1
    %p400 = scmp.ne.s32.totalorder %s395, %s397
    %p401 = scmp.eq.s32.totalorder %s25, 0
    %p402 = por %p400, %p401
    %p403 = scmp.ne.s32.totalorder %s395, %s397
    %p404 = scmp.eq.s32.totalorder %s30, 1
    %p405 = por %p403, %p404
    %p406 = scmp.ne.s32.totalorder %s397, %s398
    %p407 = scmp.eq.s32.totalorder %s30, 0
    %p408 = por %p406, %p407
    %p409 = scmp.ne.s32.totalorder %s397, %s398
    %p410 = scmp.eq.s32.totalorder %s31, 1
    %p411 = por %p409, %p410
    %p413 = scmp.ne.s32.totalorder %s398, %s412
    %p414 = scmp.eq.s32.totalorder %s31, 0
    %p415 = por %p413, %p414
    %s417 = sadd.s32 %s416, 1
    %p420 = scmp.eq.s32.totalorder %s25, 1
    %p421 = scmp.ne.s32.totalorder %s416, %s418
    %p422 = scmp.eq.s32.totalorder %s25, 0
    %p423 = por %p421, %p422
    %p424 = scmp.ne.s32.totalorder %s416, %s418
    %p425 = scmp.eq.s32.totalorder %s30, 1
    %p426 = por %p424, %p425
    %p427 = scmp.ne.s32.totalorder %s418, %s419
    %p428 = scmp.eq.s32.totalorder %s30, 0
    %p429 = por %p427, %p428
    %p430 = scmp.ne.s32.totalorder %s418, %s419
    %p431 = scmp.eq.s32.totalorder %s31, 1
    %p432 = por %p430, %p431
    %p434 = scmp.ne.s32.totalorder %s419, %s433
    %p435 = scmp.eq.s32.totalorder %s31, 0
    %p436 = por %p434, %p435
    %s437 = ssub.s32 %s25, %s32
    %p438 = scmp.eq.s32.totalorder %s437, 0
    %s440 = sadd.s32 %s439, 1
    %s441 = scalar_select %p438, %s439, %s440
    %p444 = pneg %p438
    %p445 = scmp.eq.s32.totalorder %s25, 1
    %p446 = por %p444, %p445
    %p447 = scmp.ne.s32.totalorder %s439, %s442
    %p448 = scmp.eq.s32.totalorder %s25, 0
    %p449 = por %p447, %p448
    %p450 = scmp.ne.s32.totalorder %s439, %s442
    %p451 = scmp.eq.s32.totalorder %s30, 1
    %p452 = por %p450, %p451
    %p453 = scmp.ne.s32.totalorder %s442, %s443
    %p454 = scmp.eq.s32.totalorder %s30, 0
    %p455 = por %p453, %p454
    %p456 = scmp.ne.s32.totalorder %s442, %s443
    %p457 = scmp.eq.s32.totalorder %s31, 1
    %p458 = por %p456, %p457
    %p460 = scmp.ne.s32.totalorder %s443, %s459
    %p461 = scmp.eq.s32.totalorder %s31, 0
    %p462 = por %p460, %p461
    %p463 = scmp.le.s32.totalorder 1, %s25
    %p464 = scmp.lt.s32.totalorder %s25, 3
    %p465 = pnand %p463, %p464
    %p466 = pneg %p465
    // Predicated region
    $region9: #{_lambda_.4} parent=5 // pred_check
      _
    $region10: #{_lambda_.4} parent=5 // pred_check_branch
      %468 = sbr.rel (%p465) target = $region12
    $region11: #{_lambda_.4} parent=5 // pred_region
      %s469 = ssub.s32 %s25, 1
      // Predicated region
      $region13: #{_lambda_.4} parent=11 // pred_check
        %p470 = pneg %p72
      $region14: #{_lambda_.4} parent=11 // pred_check_branch
        %472 = sbr.rel (%p470) target = $region16
      $region15: #{_lambda_.4} parent=11 // pred_region
        _
      $region16: #{_lambda_.4} parent=11 // pred_fallthru
        _
      // Predicated region
      $region17: #{_lambda_.4} parent=11 // pred_check
        %p473 = pneg %p93
      $region18: #{_lambda_.4} parent=11 // pred_check_branch
        %475 = sbr.rel (%p473) target = $region20
      $region19: #{_lambda_.4} parent=11 // pred_region
        _
      $region20: #{_lambda_.4} parent=11 // pred_fallthru
        _
      // Predicated region
      $region21: #{_lambda_.4} parent=11 // pred_check
        %p476 = pneg %p114
      $region22: #{_lambda_.4} parent=11 // pred_check_branch
        %478 = sbr.rel (%p476) target = $region24
      $region23: #{_lambda_.4} parent=11 // pred_region
        _
      $region24: #{_lambda_.4} parent=11 // pred_fallthru
        _
      // Predicated region
      $region25: #{_lambda_.4} parent=11 // pred_check
        %p479 = pneg %p135
      $region26: #{_lambda_.4} parent=11 // pred_check_branch
        %481 = sbr.rel (%p479) target = $region28
      $region27: #{_lambda_.4} parent=11 // pred_region
        _
      $region28: #{_lambda_.4} parent=11 // pred_fallthru
        _
      // Predicated region
      $region29: #{_lambda_.4} parent=11 // pred_check
        %p482 = pneg %p156
      $region30: #{_lambda_.4} parent=11 // pred_check_branch
        %484 = sbr.rel (%p482) target = $region32
      $region31: #{_lambda_.4} parent=11 // pred_region
        _
      $region32: #{_lambda_.4} parent=11 // pred_fallthru
        _
      // Predicated region
      $region33: #{_lambda_.4} parent=11 // pred_check
        %p485 = pneg %p177
      $region34: #{_lambda_.4} parent=11 // pred_check_branch
        %487 = sbr.rel (%p485) target = $region36
      $region35: #{_lambda_.4} parent=11 // pred_region
        _
      $region36: #{_lambda_.4} parent=11 // pred_fallthru
        _
      // Predicated region
      $region37: #{_lambda_.4} parent=11 // pred_check
        %p488 = pneg %p198
      $region38: #{_lambda_.4} parent=11 // pred_check_branch
        %490 = sbr.rel (%p488) target = $region40
      $region39: #{_lambda_.4} parent=11 // pred_region
        _
      $region40: #{_lambda_.4} parent=11 // pred_fallthru
        _
      // Predicated region
      $region41: #{_lambda_.4} parent=11 // pred_check
        %p491 = pneg %p219
      $region42: #{_lambda_.4} parent=11 // pred_check_branch
        %493 = sbr.rel (%p491) target = $region44
      $region43: #{_lambda_.4} parent=11 // pred_region
        _
      $region44: #{_lambda_.4} parent=11 // pred_fallthru
        _
      // Predicated region
      $region45: #{_lambda_.4} parent=11 // pred_check
        %p494 = pneg %p240
      $region46: #{_lambda_.4} parent=11 // pred_check_branch
        %496 = sbr.rel (%p494) target = $region48
      $region47: #{_lambda_.4} parent=11 // pred_region
        _
      $region48: #{_lambda_.4} parent=11 // pred_fallthru
        _
      // Predicated region
      $region49: #{_lambda_.4} parent=11 // pred_check
        %p497 = pneg %p261
      $region50: #{_lambda_.4} parent=11 // pred_check_branch
        %499 = sbr.rel (%p497) target = $region52
      $region51: #{_lambda_.4} parent=11 // pred_region
        _
      $region52: #{_lambda_.4} parent=11 // pred_fallthru
        _
      // Predicated region
      $region53: #{_lambda_.4} parent=11 // pred_check
        %p500 = pneg %p282
      $region54: #{_lambda_.4} parent=11 // pred_check_branch
        %502 = sbr.rel (%p500) target = $region56
      $region55: #{_lambda_.4} parent=11 // pred_region
        _
      $region56: #{_lambda_.4} parent=11 // pred_fallthru
        _
      // Predicated region
      $region57: #{_lambda_.4} parent=11 // pred_check
        %p503 = pneg %p303
      $region58: #{_lambda_.4} parent=11 // pred_check_branch
        %505 = sbr.rel (%p503) target = $region60
      $region59: #{_lambda_.4} parent=11 // pred_region
        _
      $region60: #{_lambda_.4} parent=11 // pred_fallthru
        _
      // Predicated region
      $region61: #{_lambda_.4} parent=11 // pred_check
        %p506 = pneg %p324
      $region62: #{_lambda_.4} parent=11 // pred_check_branch
        %508 = sbr.rel (%p506) target = $region64
      $region63: #{_lambda_.4} parent=11 // pred_region
        _
      $region64: #{_lambda_.4} parent=11 // pred_fallthru
        _
      // Predicated region
      $region65: #{_lambda_.4} parent=11 // pred_check
        %p509 = pneg %p345
      $region66: #{_lambda_.4} parent=11 // pred_check_branch
        %511 = sbr.rel (%p509) target = $region68
      $region67: #{_lambda_.4} parent=11 // pred_region
        _
      $region68: #{_lambda_.4} parent=11 // pred_fallthru
        _
      // Predicated region
      $region69: #{_lambda_.4} parent=11 // pred_check
        %p512 = pneg %p366
      $region70: #{_lambda_.4} parent=11 // pred_check_branch
        %514 = sbr.rel (%p512) target = $region72
      $region71: #{_lambda_.4} parent=11 // pred_region
        _
      $region72: #{_lambda_.4} parent=11 // pred_fallthru
        _
      // Predicated region
      $region73: #{_lambda_.4} parent=11 // pred_check
        %p515 = pneg %p387
      $region74: #{_lambda_.4} parent=11 // pred_check_branch
        %517 = sbr.rel (%p515) target = $region76
      $region75: #{_lambda_.4} parent=11 // pred_region
        _
      $region76: #{_lambda_.4} parent=11 // pred_fallthru
        _
      // Predicated region
      $region77: #{_lambda_.4} parent=11 // pred_check
        %p518 = pneg %p408
      $region78: #{_lambda_.4} parent=11 // pred_check_branch
        %520 = sbr.rel (%p518) target = $region80
      $region79: #{_lambda_.4} parent=11 // pred_region
        _
      $region80: #{_lambda_.4} parent=11 // pred_fallthru
        _
      // Predicated region
      $region81: #{_lambda_.4} parent=11 // pred_check
        %p521 = pneg %p429
      $region82: #{_lambda_.4} parent=11 // pred_check_branch
        %523 = sbr.rel (%p521) target = $region84
      $region83: #{_lambda_.4} parent=11 // pred_region
        _
      $region84: #{_lambda_.4} parent=11 // pred_fallthru
        _
    $region12: #{_lambda_.4} parent=5 // pred_fallthru
      _
    %p524 = scmp.lt.s32.totalorder %s25, 2
    // Predicated region
    $region85: #{_lambda_.4} parent=5 // pred_check
      %p525 = pneg %p524
    $region86: #{_lambda_.4} parent=5 // pred_check_branch
      %527 = sbr.rel (%p525) target = $region88
    $region87: #{_lambda_.4} parent=5 // pred_region
      // Predicated region
      $region89: #{_lambda_.4} parent=87 // pred_check
        %p528 = pneg %p45
      $region90: #{_lambda_.4} parent=87 // pred_check_branch
        %530 = sbr.rel (%p528) target = $region92
      $region91: #{_lambda_.4} parent=87 // pred_region
        %p531 = scmp.lt.s32.totalorder %s25, 1
        %s532 = scalar_select %p531, %s25, 1
        %s533 = smul.addr %s532, 2
        %s534 = smul.addr %s533, 4
        %s535 = scalar_lea.vmem %s0, %s534
      $region92: #{_lambda_.4} parent=87 // pred_fallthru
        _
    $region88: #{_lambda_.4} parent=5 // pred_fallthru
      _
    %p536 = scmp.le.s32.totalorder 1, %s25
    %p537 = scmp.lt.s32.totalorder %s25, 3
    %p538 = pnand %p536, %p537
    %p539 = pneg %p538
    // Predicated region
    $region93: #{_lambda_.4} parent=5 // pred_check
      _
    $region94: #{_lambda_.4} parent=5 // pred_check_branch
      %541 = sbr.rel (%p538) target = $region96
    $region95: #{_lambda_.4} parent=5 // pred_region
      %s542 = ssub.s32 %s25, 1
      %p543 = scmp.lt.s32.totalorder %s30, 1
      %s544 = scalar_select %p543, %s30, 1
      %s545 = smul.addr %s544, 2
      %s546 = smul.addr %s545, 4
      %s547 = scalar_lea.vmem %s0, %s546
      %p548 = pneg %p51
      %p549 = pneg %p48
      %p550 = pneg %p72
      %p551 = pneg %p69
      %p552 = pneg %p93
      %p553 = pneg %p90
      %p554 = pneg %p114
      %p555 = pneg %p111
      %p556 = pneg %p135
      %p557 = pneg %p132
      %p558 = pneg %p156
      %p559 = pneg %p153
      %p560 = pneg %p177
      %p561 = pneg %p174
      %p562 = pneg %p198
      %p563 = pneg %p195
      %p564 = pneg %p219
      %p565 = pneg %p216
      %p566 = pneg %p240
      %p567 = pneg %p237
      %p568 = pneg %p261
      %p569 = pneg %p258
      %p570 = pneg %p282
      %p571 = pneg %p279
      %p572 = pneg %p303
      %p573 = pneg %p300
      %p574 = pneg %p324
      %p575 = pneg %p321
      %p576 = pneg %p345
      %p577 = pneg %p342
      %p578 = pneg %p366
      %p579 = pneg %p363
      %p580 = pneg %p387
      %p581 = pneg %p384
      %p582 = pneg %p408
      %p583 = pneg %p405
      %p584 = pneg %p429
      %p585 = pneg %p426
      %p586 = pneg %p455
      %p587 = pneg %p452
      %p588 = scmp.lt.s32.totalorder %s30, 1
      %s589 = scalar_select %p588, %s30, 1
      %s590 = smul.addr %s589, 2
      %s591 = smul.addr %s590, 4
      %s592 = scalar_lea.vmem %s19, %s591
      %p593 = scmp.lt.s32.totalorder %s30, 1
      %s594 = scalar_select %p593, %s30, 1
      %s595 = smul.addr %s594, 2
      %s596 = smul.addr %s595, 4
      %s597 = scalar_lea.vmem %s0, %s596
      %p598 = scmp.lt.s32.totalorder %s30, 1
      %s599 = scalar_select %p598, %s30, 1
      %s600 = smul.addr %s599, 2
      %s601 = smul.addr %s600, 4
      %s602 = scalar_lea.vmem %s19, %s601
      %v604 = vld [vmem:[%s597] sm:$0xf]
      %v605 = vld [vmem:[%s597 + $0x4] sm:$0xf]
      %v606 = vunpack.c.l.bf16 %v604
      %v607 = vunpack.c.l.bf16 %v605
      %v608 = vld [vmem:[%s1] sm:$0x1]
      %v609 = vld [vmem:[%s2] sm:$0x1]
      %vm610 = vcmask 523264
      %v611 = vsel %vm610, %v606, 0.0
      %612 = vadd.xlane.f32.xlu0 %v611
      %v613 = vpop.xlane.xlu0 %612
      %v614 = vsel %vm610, %v607, 0.0
      %615 = vadd.xlane.f32.xlu0 %v614
      %v616 = vpop.xlane.xlu0 %615
      %v617 = vrcp.pop 64.0
      %v618 = vmul.f32 %v613, %v617
      %v619 = vmul.f32 %v616, %v617
      %v620 = vsub.f32 %v606, %v618
      %v621 = vsub.f32 %v607, %v619
      %v622 = vmul.f32 %v620, %v620
      %v623 = vmul.f32 %v621, %v621
      %v624 = vsel %vm610, %v622, 0.0
      %625 = vadd.xlane.f32.xlu0 %v624
      %v626 = vpop.xlane.xlu0 %625
      %v627 = vsel %vm610, %v623, 0.0
      %628 = vadd.xlane.f32.xlu0 %v627
      %v629 = vpop.xlane.xlu0 %628
      %v630 = vmul.f32 %v626, %v617
      %v631 = vmul.f32 %v629, %v617
      %v632 = vadd.f32 %v630, 1e-06
      %v633 = vadd.f32 %v631, 1e-06
      %v634 = vrsqrt.pop %v632
      %v635 = vrsqrt.pop %v633
      %v636 = vmul.f32 %v620, %v634
      %v637 = vmul.f32 %v621, %v635
      %v639 = vlaneseq
      %v640 = vshrl.u32 %v639, 7
      %v641 = vsub.s32 0, %v640
      %v642 = vrot.slane %v608, %v641
      %v644 = vmul.f32 %v636, %v642
      %v645 = vmul.f32 %v637, %v642
      %v647 = vlaneseq
      %v648 = vshrl.u32 %v647, 7
      %v649 = vsub.s32 0, %v648
      %v650 = vrot.slane %v609, %v649
      %v652 = vadd.f32 %v644, %v650
      %v653 = vadd.f32 %v645, %v650
      %v654 = vpack.c.bf16 %v653, %v652
      %v655 = vld [vmem:[%s3] sm:$0xf]
      %v656 = vld [vmem:[%s3 + $0x4] sm:$0xf]
      %v657 = vld [vmem:[%s3 + $0x8] sm:$0xf]
      %v658 = vld [vmem:[%s3 + $0xc] sm:$0xf]
      %v659 = vld [vmem:[%s3 + $0x10] sm:$0xf]
      %v660 = vld [vmem:[%s3 + $0x14] sm:$0xf]
      %v661 = vld [vmem:[%s3 + $0x18] sm:$0xf]
      %v662 = vld [vmem:[%s3 + $0x1c] sm:$0xf]
      %v663 = vld [vmem:[%s4] sm:$0x1]
      %v665 = vlaneseq
      %v666 = vshrl.u32 %v665, 7
      %v667 = vsub.s32 0, %v666
      %v668 = vrot.slane %v663, %v667
      %v678 = vunpack.c.l.b16 %v655
      %v679 = vunpack.c.l.b16 %v656
      %v680 = vunpack.c.l.b16 %v657
      %v681 = vunpack.c.l.b16 %v658
      %v682 = vunpack.c.l.b16 %v659
      %v683 = vunpack.c.l.b16 %v660
      %v684 = vunpack.c.l.b16 %v661
      %v685 = vunpack.c.l.b16 %v662
      %v686 = vpack.c.b16 %v679, %v678
      %v687 = vpack.c.b16 %v681, %v680
      %v688 = vpack.c.b16 %v683, %v682
      %v689 = vpack.c.b16 %v685, %v684
      %v695 = vsel %vm610, %v654, 0
      %697 = vmatprep.subr.bf16.mxu0 0
      %698 = vmatpush1.bf16.msra.mxu0 %v686
      %699 = vmatprep.subr.bf16.mxu0 0
      %700 = vmatpush1.bf16.msra.mxu0 %v687
      %701 = vmatprep.subr.bf16.mxu0 0
      %702 = vmatpush1.bf16.msra.mxu0 %v688
      %703 = vmatprep.subr.bf16.mxu0 0
      %704 = vmatpush1.bf16.msra.mxu0 %v689
      %705 = vmatprep.subr.bf16.mxu0 0
      %706 = vmatpush1.bf16.msra.mxu0 0
      %707 = vmatprep.subr.bf16.mxu0 0
      %708 = vmatpush1.bf16.msra.mxu0 0
      %709 = vmatprep.subr.bf16.mxu0 0
      %710 = vmatpush1.bf16.msra.mxu0 0
      %711 = vmatprep.subr.bf16.mxu0 0
      %712 = vmatpush1.bf16.msra.mxu0 0
      %713 = vmatprep.subr.bf16.mxu0 0
      %714 = vmatpush1.bf16.msra.mxu0 0
      %715 = vmatprep.subr.bf16.mxu0 0
      %716 = vmatpush1.bf16.msra.mxu0 0
      %717 = vmatprep.subr.bf16.mxu0 0
      %718 = vmatpush1.bf16.msra.mxu0 0
      %719 = vmatprep.subr.bf16.mxu0 0
      %720 = vmatpush1.bf16.msra.mxu0 0
      %721 = vmatprep.subr.bf16.mxu0 0
      %722 = vmatpush1.bf16.msra.mxu0 0
      %723 = vmatprep.subr.bf16.mxu0 0
      %724 = vmatpush1.bf16.msra.mxu0 0
      %725 = vmatprep.subr.bf16.mxu0 0
      %726 = vmatpush1.bf16.msra.mxu0 0
      %727 = vmatprep.subr.bf16.mxu0 0
      %728 = vmatpush1.bf16.msra.mxu0 0
      %729 = vmatprep.mubr.bf16.mxu0 0
      %730 = vmatmul.mubr.bf16.gmra.mrb[0].mxu0 %v695
      %v731 = vpop.f32.mrb[0].mxu0
      %v732 = vadd.f32 %v668, %v731
      %v733 = vpop.f32.mrb[0].mxu0
      %v734 = vpop.f32.mrb[0].mxu0
      %v735 = vadd.f32 %v668, %v734
      %v736 = vpop.f32.mrb[0].mxu0
      %737 = vdwg.mxu0
      %v738 = vpack.c.bf16 %v735, %v732
      %v739 = vld [vmem:[%s5] sm:$0xf]
      %v740 = vld [vmem:[%s5 + $0x4] sm:$0xf]
      %v741 = vld [vmem:[%s5 + $0x8] sm:$0xf]
      %v742 = vld [vmem:[%s5 + $0xc] sm:$0xf]
      %v743 = vld [vmem:[%s5 + $0x10] sm:$0xf]
      %v744 = vld [vmem:[%s5 + $0x14] sm:$0xf]
      %v745 = vld [vmem:[%s5 + $0x18] sm:$0xf]
      %v746 = vld [vmem:[%s5 + $0x1c] sm:$0xf]
      %v747 = vld [vmem:[%s6] sm:$0x1]
      %v749 = vlaneseq
      %v750 = vshrl.u32 %v749, 7
      %v751 = vsub.s32 0, %v750
      %v752 = vrot.slane %v747, %v751
      %v762 = vunpack.c.l.b16 %v739
      %v763 = vunpack.c.l.b16 %v740
      %v764 = vunpack.c.l.b16 %v741
      %v765 = vunpack.c.l.b16 %v742
      %v766 = vunpack.c.l.b16 %v743
      %v767 = vunpack.c.l.b16 %v744
      %v768 = vunpack.c.l.b16 %v745
      %v769 = vunpack.c.l.b16 %v746
      %v770 = vpack.c.b16 %v763, %v762
      %v771 = vpack.c.b16 %v765, %v764
      %v772 = vpack.c.b16 %v767, %v766
      %v773 = vpack.c.b16 %v769, %v768
      %778 = vmatprep.subr.bf16.mxu0 0
      %779 = vmatpush1.bf16.msra.mxu0 %v770
      %780 = vmatprep.subr.bf16.mxu0 0
      %781 = vmatpush1.bf16.msra.mxu0 %v771
      %782 = vmatprep.subr.bf16.mxu0 0
      %783 = vmatpush1.bf16.msra.mxu0 %v772
      %784 = vmatprep.subr.bf16.mxu0 0
      %785 = vmatpush1.bf16.msra.mxu0 %v773
      %786 = vmatprep.subr.bf16.mxu0 0
      %787 = vmatpush1.bf16.msra.mxu0 0
      %788 = vmatprep.subr.bf16.mxu0 0
      %789 = vmatpush1.bf16.msra.mxu0 0
      %790 = vmatprep.subr.bf16.mxu0 0
      %791 = vmatpush1.bf16.msra.mxu0 0
      %792 = vmatprep.subr.bf16.mxu0 0
      %793 = vmatpush1.bf16.msra.mxu0 0
      %794 = vmatprep.subr.bf16.mxu0 0
      %795 = vmatpush1.bf16.msra.mxu0 0
      %796 = vmatprep.subr.bf16.mxu0 0
      %797 = vmatpush1.bf16.msra.mxu0 0
      %798 = vmatprep.subr.bf16.mxu0 0
      %799 = vmatpush1.bf16.msra.mxu0 0
      %800 = vmatprep.subr.bf16.mxu0 0
      %801 = vmatpush1.bf16.msra.mxu0 0
      %802 = vmatprep.subr.bf16.mxu0 0
      %803 = vmatpush1.bf16.msra.mxu0 0
      %804 = vmatprep.subr.bf16.mxu0 0
      %805 = vmatpush1.bf16.msra.mxu0 0
      %806 = vmatprep.subr.bf16.mxu0 0
      %807 = vmatpush1.bf16.msra.mxu0 0
      %808 = vmatprep.subr.bf16.mxu0 0
      %809 = vmatpush1.bf16.msra.mxu0 0
      %810 = vmatprep.mubr.bf16.mxu0 0
      %811 = vmatmul.mubr.bf16.gmra.mrb[0].mxu0 %v695
      %v812 = vpop.f32.mrb[0].mxu0
      %v813 = vadd.f32 %v752, %v812
      %v814 = vpop.f32.mrb[0].mxu0
      %v815 = vpop.f32.mrb[0].mxu0
      %v816 = vadd.f32 %v752, %v815
      %v817 = vpop.f32.mrb[0].mxu0
      %818 = vdwg.mxu0
      %v819 = vpack.c.bf16 %v816, %v813
      %v820 = vld [vmem:[%s7] sm:$0xf]
      %v821 = vld [vmem:[%s7 + $0x4] sm:$0xf]
      %v822 = vld [vmem:[%s7 + $0x8] sm:$0xf]
      %v823 = vld [vmem:[%s7 + $0xc] sm:$0xf]
      %v824 = vld [vmem:[%s7 + $0x10] sm:$0xf]
      %v825 = vld [vmem:[%s7 + $0x14] sm:$0xf]
      %v826 = vld [vmem:[%s7 + $0x18] sm:$0xf]
      %v827 = vld [vmem:[%s7 + $0x1c] sm:$0xf]
      %v828 = vld [vmem:[%s8] sm:$0x1]
      %v830 = vlaneseq
      %v831 = vshrl.u32 %v830, 7
      %v832 = vsub.s32 0, %v831
      %v833 = vrot.slane %v828, %v832
      %v843 = vunpack.c.l.b16 %v820
      %v844 = vunpack.c.l.b16 %v821
      %v845 = vunpack.c.l.b16 %v822
      %v846 = vunpack.c.l.b16 %v823
      %v847 = vunpack.c.l.b16 %v824
      %v848 = vunpack.c.l.b16 %v825
      %v849 = vunpack.c.l.b16 %v826
      %v850 = vunpack.c.l.b16 %v827
      %v851 = vpack.c.b16 %v844, %v843
      %v852 = vpack.c.b16 %v846, %v845
      %v853 = vpack.c.b16 %v848, %v847
      %v854 = vpack.c.b16 %v850, %v849
      %859 = vmatprep.subr.bf16.mxu0 0
      %860 = vmatpush1.bf16.msra.mxu0 %v851
      %861 = vmatprep.subr.bf16.mxu0 0
      %862 = vmatpush1.bf16.msra.mxu0 %v852
      %863 = vmatprep.subr.bf16.mxu0 0
      %864 = vmatpush1.bf16.msra.mxu0 %v853
      %865 = vmatprep.subr.bf16.mxu0 0
      %866 = vmatpush1.bf16.msra.mxu0 %v854
      %867 = vmatprep.subr.bf16.mxu0 0
      %868 = vmatpush1.bf16.msra.mxu0 0
      %869 = vmatprep.subr.bf16.mxu0 0
      %870 = vmatpush1.bf16.msra.mxu0 0
      %871 = vmatprep.subr.bf16.mxu0 0
      %872 = vmatpush1.bf16.msra.mxu0 0
      %873 = vmatprep.subr.bf16.mxu0 0
      %874 = vmatpush1.bf16.msra.mxu0 0
      %875 = vmatprep.subr.bf16.mxu0 0
      %876 = vmatpush1.bf16.msra.mxu0 0
      %877 = vmatprep.subr.bf16.mxu0 0
      %878 = vmatpush1.bf16.msra.mxu0 0
      %879 = vmatprep.subr.bf16.mxu0 0
      %880 = vmatpush1.bf16.msra.mxu0 0
      %881 = vmatprep.subr.bf16.mxu0 0
      %882 = vmatpush1.bf16.msra.mxu0 0
      %883 = vmatprep.subr.bf16.mxu0 0
      %884 = vmatpush1.bf16.msra.mxu0 0
      %885 = vmatprep.subr.bf16.mxu0 0
      %886 = vmatpush1.bf16.msra.mxu0 0
      %887 = vmatprep.subr.bf16.mxu0 0
      %888 = vmatpush1.bf16.msra.mxu0 0
      %889 = vmatprep.subr.bf16.mxu0 0
      %890 = vmatpush1.bf16.msra.mxu0 0
      %891 = vmatprep.mubr.bf16.mxu0 0
      %892 = vmatmul.mubr.bf16.gmra.mrb[0].mxu0 %v695
      %v893 = vpop.f32.mrb[0].mxu0
      %v894 = vadd.f32 %v833, %v893
      %v895 = vpop.f32.mrb[0].mxu0
      %v896 = vpop.f32.mrb[0].mxu0
      %v897 = vadd.f32 %v833, %v896
      %v898 = vpop.f32.mrb[0].mxu0
      %899 = vdwg.mxu0
      %v900 = vpack.c.bf16 %v897, %v894
      %v901 = vlaneseq
      %v902 = vand.u32 %v901, 127
      %vm903 = vcmp.lt.s32.totalorder %v902, 5
      %vm904 = vcmask 130048
      %v906 = vsel %vm904, %v738, 0
      %v909 = vsel %vm904, %v819, 0
      %911 = vmatprep.subr.bf16.mxu0 0
      %912 = vmatpush1.bf16.xpose.msra.mxu0 %v909
      %913 = vmatprep.subr.bf16.mxu0 0
      %914 = vmatpush1.bf16.xpose.msra.mxu0 0
      %915 = vmatprep.subr.bf16.mxu0 0
      %916 = vmatpush1.bf16.xpose.msra.mxu0 0
      %917 = vmatprep.subr.bf16.mxu0 0
      %918 = vmatpush1.bf16.xpose.msra.mxu0 0
      %919 = vmatprep.subr.bf16.mxu0 0
      %920 = vmatpush1.bf16.xpose.msra.mxu0 0
      %921 = vmatprep.subr.bf16.mxu0 0
      %922 = vmatpush1.bf16.xpose.msra.mxu0 0
      %923 = vmatprep.subr.bf16.mxu0 0
      %924 = vmatpush1.bf16.xpose.msra.mxu0 0
      %925 = vmatprep.subr.bf16.mxu0 0
      %926 = vmatpush1.bf16.xpose.msra.mxu0 0
      %927 = vmatprep.subr.bf16.mxu0 0
      %928 = vmatpush1.bf16.xpose.msra.mxu0 0
      %929 = vmatprep.subr.bf16.mxu0 0
      %930 = vmatpush1.bf16.xpose.msra.mxu0 0
      %931 = vmatprep.subr.bf16.mxu0 0
      %932 = vmatpush1.bf16.xpose.msra.mxu0 0
      %933 = vmatprep.subr.bf16.mxu0 0
      %934 = vmatpush1.bf16.xpose.msra.mxu0 0
      %935 = vmatprep.subr.bf16.mxu0 0
      %936 = vmatpush1.bf16.xpose.msra.mxu0 0
      %937 = vmatprep.subr.bf16.mxu0 0
      %938 = vmatpush1.bf16.xpose.msra.mxu0 0
      %939 = vmatprep.subr.bf16.mxu0 0
      %940 = vmatpush1.bf16.xpose.msra.mxu0 0
      %941 = vmatprep.subr.bf16.mxu0 0
      %942 = vmatpush1.bf16.xpose.msra.mxu0 0
      %943 = vmatprep.mubr.bf16.mxu0 0
      %944 = vmatmul.mubr.bf16.gmra.mrb[0].mxu0 %v906
      %v945 = vpop.f32.mrb[0].mxu0
      %v946 = vadd.f32 0.0, %v945
      %v947 = vpop.f32.mrb[0].mxu0
      %v948 = vpop.f32.mrb[0].mxu0
      %v949 = vadd.f32 0.0, %v948
      %v950 = vpop.f32.mrb[0].mxu0
      %951 = vdwg.mxu0
      %v952 = vsel %vm903, %v946, -1e+30
      %v953 = vsel %vm903, %v949, -1e+30
      %v954 = vsel %vm904, %v952, -inf
      %955 = vmax.xlane.f32.xlu0 %v954
      %v956 = vpop.xlane.xlu0 %955
      %v957 = vsel %vm904, %v953, -inf
      %958 = vmax.xlane.f32.xlu0 %v957
      %v959 = vpop.xlane.xlu0 %958
      %v960 = vsub.f32 %v952, %v956
      %v961 = vsub.f32 %v953, %v959
      %v962 = vmul.f32 %v960, 1.442695
      %v963 = vpow.pop %v962
      %v964 = vmul.f32 %v961, 1.442695
      %v965 = vpow.pop %v964
      %v966 = vsel %vm904, %v963, 0.0
      %967 = vadd.xlane.f32.xlu0 %v966
      %v968 = vpop.xlane.xlu0 %967
      %v969 = vsel %vm904, %v965, 0.0
      %970 = vadd.xlane.f32.xlu0 %v969
      %v971 = vpop.xlane.xlu0 %970
      %v972 = vrcp.pop %v968
      %v973 = vrcp.pop %v971
      %v974 = vmul.f32 %v963, %v972
      %v975 = vmul.f32 %v965, %v973
      %v976 = vpack.c.bf16 %v975, %v974
      %v978 = vsel %vm904, %v976, 0
      %980 = vmatprep.subr.bf16.mxu0 0
      %981 = vmatpush1.bf16.msra.mxu0 %v900
      %982 = vmatprep.subr.bf16.mxu0 0
      %983 = vmatpush1.bf16.msra.mxu0 0
      %984 = vmatprep.subr.bf16.mxu0 0
      %985 = vmatpush1.bf16.msra.mxu0 0
      %986 = vmatprep.subr.bf16.mxu0 0
      %987 = vmatpush1.bf16.msra.mxu0 0
      %988 = vmatprep.subr.bf16.mxu0 0
      %989 = vmatpush1.bf16.msra.mxu0 0
      %990 = vmatprep.subr.bf16.mxu0 0
      %991 = vmatpush1.bf16.msra.mxu0 0
      %992 = vmatprep.subr.bf16.mxu0 0
      %993 = vmatpush1.bf16.msra.mxu0 0
      %994 = vmatprep.subr.bf16.mxu0 0
      %995 = vmatpush1.bf16.msra.mxu0 0
      %996 = vmatprep.subr.bf16.mxu0 0
      %997 = vmatpush1.bf16.msra.mxu0 0
      %998 = vmatprep.subr.bf16.mxu0 0
      %999 = vmatpush1.bf16.msra.mxu0 0
      %1000 = vmatprep.subr.bf16.mxu0 0
      %1001 = vmatpush1.bf16.msra.mxu0 0
      %1002 = vmatprep.subr.bf16.mxu0 0
      %1003 = vmatpush1.bf16.msra.mxu0 0
      %1004 = vmatprep.subr.bf16.mxu0 0
      %1005 = vmatpush1.bf16.msra.mxu0 0
      %1006 = vmatprep.subr.bf16.mxu0 0
      %1007 = vmatpush1.bf16.msra.mxu0 0
      %1008 = vmatprep.subr.bf16.mxu0 0
      %1009 = vmatpush1.bf16.msra.mxu0 0
      %1010 = vmatprep.subr.bf16.mxu0 0
      %1011 = vmatpush1.bf16.msra.mxu0 0
      %1012 = vmatprep.mubr.bf16.mxu0 0
      %1013 = vmatmul.mubr.bf16.gmra.mrb[0].mxu0 %v978
      %v1014 = vpop.f32.mrb[0].mxu0
      %v1015 = vadd.f32 0.0, %v1014
      %v1016 = vpop.f32.mrb[0].mxu0
      %v1017 = vpop.f32.mrb[0].mxu0
      %v1018 = vadd.f32 0.0, %v1017
      %v1019 = vpop.f32.mrb[0].mxu0
      %1020 = vdwg.mxu0
      %v1021 = vpack.c.bf16 %v1018, %v1015
      %1022 = vst.msk [vmem:[#allocation2] sm:$0xff] %vm904, %v1021
      %1024 = vrot.lane.b32.xlu0 %v738, 112
      %v1025 = vpop.permute.xlu0 %1024
      %1027 = vrot.lane.b32.xlu0 %v819, 112
      %v1028 = vpop.permute.xlu0 %1027
      %v1030 = vsel %vm904, %v1025, 0
      %v1033 = vsel %vm904, %v1028, 0
      %1035 = vmatprep.subr.bf16.mxu0 0
      %1036 = vmatpush1.bf16.xpose.msra.mxu0 %v1033
      %1037 = vmatprep.subr.bf16.mxu0 0
      %1038 = vmatpush1.bf16.xpose.msra.mxu0 0
      %1039 = vmatprep.subr.bf16.mxu0 0
      %1040 = vmatpush1.bf16.xpose.msra.mxu0 0
      %1041 = vmatprep.subr.bf16.mxu0 0
      %1042 = vmatpush1.bf16.xpose.msra.mxu0 0
      %1043 = vmatprep.subr.bf16.mxu0 0
      %1044 = vmatpush1.bf16.xpose.msra.mxu0 0
      %1045 = vmatprep.subr.bf16.mxu0 0
      %1046 = vmatpush1.bf16.xpose.msra.mxu0 0
      %1047 = vmatprep.subr.bf16.mxu0 0
      %1048 = vmatpush1.bf16.xpose.msra.mxu0 0
      %1049 = vmatprep.subr.bf16.mxu0 0
      %1050 = vmatpush1.bf16.xpose.msra.mxu0 0
      %1051 = vmatprep.subr.bf16.mxu0 0
      %1052 = vmatpush1.bf16.xpose.msra.mxu0 0
      %1053 = vmatprep.subr.bf16.mxu0 0
      %1054 = vmatpush1.bf16.xpose.msra.mxu0 0
      %1055 = vmatprep.subr.bf16.mxu0 0
      %1056 = vmatpush1.bf16.xpose.msra.mxu0 0
      %1057 = vmatprep.subr.bf16.mxu0 0
      %1058 = vmatpush1.bf16.xpose.msra.mxu0 0
      %1059 = vmatprep.subr.bf16.mxu0 0
      %1060 = vmatpush1.bf16.xpose.msra.mxu0 0
      %1061 = vmatprep.subr.bf16.mxu0 0
      %1062 = vmatpush1.bf16.xpose.msra.mxu0 0
      %1063 = vmatprep.subr.bf16.mxu0 0
      %1064 = vmatpush1.bf16.xpose.msra.mxu0 0
      %1065 = vmatprep.subr.bf16.mxu0 0
      %1066 = vmatpush1.bf16.xpose.msra.mxu0 0
      %1067 = vmatprep.mubr.bf16.mxu0 0
      %1068 = vmatmul.mubr.bf16.gmra.mrb[0].mxu0 %v1030
      %v1069 = vpop.f32.mrb[0].mxu0
      %v1070 = vadd.f32 0.0, %v1069
      %v1071 = vpop.f32.mrb[0].mxu0
      %v1072 = vpop.f32.mrb[0].mxu0
      %v1073 = vadd.f32 0.0, %v1072
      %v1074 = vpop.f32.mrb[0].mxu0
      %1075 = vdwg.mxu0
      %v1076 = vsel %vm903, %v1070, -1e+30
      %v1077 = vsel %vm903, %v1073, -1e+30
      %v1078 = vsel %vm904, %v1076, -inf
      %1079 = vmax.xlane.f32.xlu0 %v1078
      %v1080 = vpop.xlane.xlu0 %1079
      %v1081 = vsel %vm904, %v1077, -inf
      %1082 = vmax.xlane.f32.xlu0 %v1081
      %v1083 = vpop.xlane.xlu0 %1082
      %v1084 = vsub.f32 %v1076, %v1080
      %v1085 = vsub.f32 %v1077, %v1083
      %v1086 = vmul.f32 %v1084, 1.442695
      %v1087 = vpow.pop %v1086
      %v1088 = vmul.f32 %v1085, 1.442695
      %v1089 = vpow.pop %v1088
      %v1090 = vsel %vm904, %v1087, 0.0
      %1091 = vadd.xlane.f32.xlu0 %v1090
      %v1092 = vpop.xlane.xlu0 %1091
      %v1093 = vsel %vm904, %v1089, 0.0
      %1094 = vadd.xlane.f32.xlu0 %v1093
      %v1095 = vpop.xlane.xlu0 %1094
      %v1096 = vrcp.pop %v1092
      %v1097 = vrcp.pop %v1095
      %v1098 = vmul.f32 %v1087, %v1096
      %v1099 = vmul.f32 %v1089, %v1097
      %v1100 = vpack.c.bf16 %v1099, %v1098
      %1102 = vrot.lane.b32.xlu0 %v900, 112
      %v1103 = vpop.permute.xlu0 %1102
      %v1106 = vsel %vm904, %v1100, 0
      %1108 = vmatprep.subr.bf16.mxu0 0
      %1109 = vmatpush1.bf16.msra.mxu0 %v1103
      %1110 = vmatprep.subr.bf16.mxu0 0
      %1111 = vmatpush1.bf16.msra.mxu0 0
      %1112 = vmatprep.subr.bf16.mxu0 0
      %1113 = vmatpush1.bf16.msra.mxu0 0
      %1114 = vmatprep.subr.bf16.mxu0 0
      %1115 = vmatpush1.bf16.msra.mxu0 0
      %1116 = vmatprep.subr.bf16.mxu0 0
      %1117 = vmatpush1.bf16.msra.mxu0 0
      %1118 = vmatprep.subr.bf16.mxu0 0
      %1119 = vmatpush1.bf16.msra.mxu0 0
      %1120 = vmatprep.subr.bf16.mxu0 0
      %1121 = vmatpush1.bf16.msra.mxu0 0
      %1122 = vmatprep.subr.bf16.mxu0 0
      %1123 = vmatpush1.bf16.msra.mxu0 0
      %1124 = vmatprep.subr.bf16.mxu0 0
      %1125 = vmatpush1.bf16.msra.mxu0 0
      %1126 = vmatprep.subr.bf16.mxu0 0
      %1127 = vmatpush1.bf16.msra.mxu0 0
      %1128 = vmatprep.subr.bf16.mxu0 0
      %1129 = vmatpush1.bf16.msra.mxu0 0
      %1130 = vmatprep.subr.bf16.mxu0 0
      %1131 = vmatpush1.bf16.msra.mxu0 0
      %1132 = vmatprep.subr.bf16.mxu0 0
      %1133 = vmatpush1.bf16.msra.mxu0 0
      %1134 = vmatprep.subr.bf16.mxu0 0
      %1135 = vmatpush1.bf16.msra.mxu0 0
      %1136 = vmatprep.subr.bf16.mxu0 0
      %1137 = vmatpush1.bf16.msra.mxu0 0
      %1138 = vmatprep.subr.bf16.mxu0 0
      %1139 = vmatpush1.bf16.msra.mxu0 0
      %1140 = vmatprep.mubr.bf16.mxu0 0
      %1141 = vmatmul.mubr.bf16.gmra.mrb[0].mxu0 %v1106
      %v1142 = vpop.f32.mrb[0].mxu0
      %v1143 = vadd.f32 0.0, %v1142
      %v1144 = vpop.f32.mrb[0].mxu0
      %v1145 = vpop.f32.mrb[0].mxu0
      %v1146 = vadd.f32 0.0, %v1145
      %v1147 = vpop.f32.mrb[0].mxu0
      %1148 = vdwg.mxu0
      %v1149 = vpack.c.bf16 %v1146, %v1143
      %1151 = vrot.lane.b32.xlu0 %v1149, 16
      %v1152 = vpop.permute.xlu0 %1151
      %vm1154 = vcmask 261248
      %1155 = vst.msk [vmem:[#allocation2] sm:$0xff] %vm1154, %v1152
      %1156 = vrot.lane.b32.xlu0 %v738, 96
      %v1157 = vpop.permute.xlu0 %1156
      %1158 = vrot.lane.b32.xlu0 %v819, 96
      %v1159 = vpop.permute.xlu0 %1158
      %v1161 = vsel %vm904, %v1157, 0
      %v1164 = vsel %vm904, %v1159, 0
      %1166 = vmatprep.subr.bf16.mxu0 0
      %1167 = vmatpush1.bf16.xpose.msra.mxu0 %v1164
      %1168 = vmatprep.subr.bf16.mxu0 0
      %1169 = vmatpush1.bf16.xpose.msra.mxu0 0
      %1170 = vmatprep.subr.bf16.mxu0 0
      %1171 = vmatpush1.bf16.xpose.msra.mxu0 0
      %1172 = vmatprep.subr.bf16.mxu0 0
      %1173 = vmatpush1.bf16.xpose.msra.mxu0 0
      %1174 = vmatprep.subr.bf16.mxu0 0
      %1175 = vmatpush1.bf16.xpose.msra.mxu0 0
      %1176 = vmatprep.subr.bf16.mxu0 0
      %1177 = vmatpush1.bf16.xpose.msra.mxu0 0
      %1178 = vmatprep.subr.bf16.mxu0 0
      %1179 = vmatpush1.bf16.xpose.msra.mxu0 0
      %1180 = vmatprep.subr.bf16.mxu0 0
      %1181 = vmatpush1.bf16.xpose.msra.mxu0 0
      %1182 = vmatprep.subr.bf16.mxu0 0
      %1183 = vmatpush1.bf16.xpose.msra.mxu0 0
      %1184 = vmatprep.subr.bf16.mxu0 0
      %1185 = vmatpush1.bf16.xpose.msra.mxu0 0
      %1186 = vmatprep.subr.bf16.mxu0 0
      %1187 = vmatpush1.bf16.xpose.msra.mxu0 0
      %1188 = vmatprep.subr.bf16.mxu0 0
      %1189 = vmatpush1.bf16.xpose.msra.mxu0 0
      %1190 = vmatprep.subr.bf16.mxu0 0
      %1191 = vmatpush1.bf16.xpose.msra.mxu0 0
      %1192 = vmatprep.subr.bf16.mxu0 0
      %1193 = vmatpush1.bf16.xpose.msra.mxu0 0
      %1194 = vmatprep.subr.bf16.mxu0 0
      %1195 = vmatpush1.bf16.xpose.msra.mxu0 0
      %1196 = vmatprep.subr.bf16.mxu0 0
      %1197 = vmatpush1.bf16.xpose.msra.mxu0 0
      %1198 = vmatprep.mubr.bf16.mxu0 0
      %1199 = vmatmul.mubr.bf16.gmra.mrb[0].mxu0 %v1161
      %v1200 = vpop.f32.mrb[0].mxu0
      %v1201 = vadd.f32 0.0, %v1200
      %v1202 = vpop.f32.mrb[0].mxu0
      %v1203 = vpop.f32.mrb[0].mxu0
      %v1204 = vadd.f32 0.0, %v1203
      %v1205 = vpop.f32.mrb[0].mxu0
      %1206 = vdwg.mxu0
      %v1207 = vsel %vm903, %v1201, -1e+30
      %v1208 = vsel %vm903, %v1204, -1e+30
      %v1209 = vsel %vm904, %v1207, -inf
      %1210 = vmax.xlane.f32.xlu0 %v1209
      %v1211 = vpop.xlane.xlu0 %1210
      %v1212 = vsel %vm904, %v1208, -inf
      %1213 = vmax.xlane.f32.xlu0 %v1212
      %v1214 = vpop.xlane.xlu0 %1213
      %v1215 = vsub.f32 %v1207, %v1211
      %v1216 = vsub.f32 %v1208, %v1214
      %v1217 = vmul.f32 %v1215, 1.442695
      %v1218 = vpow.pop %v1217
      %v1219 = vmul.f32 %v1216, 1.442695
      %v1220 = vpow.pop %v1219
      %v1221 = vsel %vm904, %v1218, 0.0
      %1222 = vadd.xlane.f32.xlu0 %v1221
      %v1223 = vpop.xlane.xlu0 %1222
      %v1224 = vsel %vm904, %v1220, 0.0
      %1225 = vadd.xlane.f32.xlu0 %v1224
      %v1226 = vpop.xlane.xlu0 %1225
      %v1227 = vrcp.pop %v1223
      %v1228 = vrcp.pop %v1226
      %v1229 = vmul.f32 %v1218, %v1227
      %v1230 = vmul.f32 %v1220, %v1228
      %v1231 = vpack.c.bf16 %v1230, %v1229
      %1232 = vrot.lane.b32.xlu0 %v900, 96
      %v1233 = vpop.permute.xlu0 %1232
      %v1236 = vsel %vm904, %v1231, 0
      %1238 = vmatprep.subr.bf16.mxu0 0
      %1239 = vmatpush1.bf16.msra.mxu0 %v1233
      %1240 = vmatprep.subr.bf16.mxu0 0
      %1241 = vmatpush1.bf16.msra.mxu0 0
      %1242 = vmatprep.subr.bf16.mxu0 0
      %1243 = vmatpush1.bf16.msra.mxu0 0
      %1244 = vmatprep.subr.bf16.mxu0 0
      %1245 = vmatpush1.bf16.msra.mxu0 0
      %1246 = vmatprep.subr.bf16.mxu0 0
      %1247 = vmatpush1.bf16.msra.mxu0 0
      %1248 = vmatprep.subr.bf16.mxu0 0
      %1249 = vmatpush1.bf16.msra.mxu0 0
      %1250 = vmatprep.subr.bf16.mxu0 0
      %1251 = vmatpush1.bf16.msra.mxu0 0
      %1252 = vmatprep.subr.bf16.mxu0 0
      %1253 = vmatpush1.bf16.msra.mxu0 0
      %1254 = vmatprep.subr.bf16.mxu0 0
      %1255 = vmatpush1.bf16.msra.mxu0 0
      %1256 = vmatprep.subr.bf16.mxu0 0
      %1257 = vmatpush1.bf16.msra.mxu0 0
      %1258 = vmatprep.subr.bf16.mxu0 0
      %1259 = vmatpush1.bf16.msra.mxu0 0
      %1260 = vmatprep.subr.bf16.mxu0 0
      %1261 = vmatpush1.bf16.msra.mxu0 0
      %1262 = vmatprep.subr.bf16.mxu0 0
      %1263 = vmatpush1.bf16.msra.mxu0 0
      %1264 = vmatprep.subr.bf16.mxu0 0
      %1265 = vmatpush1.bf16.msra.mxu0 0
      %1266 = vmatprep.subr.bf16.mxu0 0
      %1267 = vmatpush1.bf16.msra.mxu0 0
      %1268 = vmatprep.subr.bf16.mxu0 0
      %1269 = vmatpush1.bf16.msra.mxu0 0
      %1270 = vmatprep.mubr.bf16.mxu0 0
      %1271 = vmatmul.mubr.bf16.gmra.mrb[0].mxu0 %v1236
      %v1272 = vpop.f32.mrb[0].mxu0
      %v1273 = vadd.f32 0.0, %v1272
      %v1274 = vpop.f32.mrb[0].mxu0
      %v1275 = vpop.f32.mrb[0].mxu0
      %v1276 = vadd.f32 0.0, %v1275
      %v1277 = vpop.f32.mrb[0].mxu0
      %1278 = vdwg.mxu0
      %v1279 = vpack.c.bf16 %v1276, %v1273
      %1281 = vrot.lane.b32.xlu0 %v1279, 32
      %v1282 = vpop.permute.xlu0 %1281
      %vm1284 = vcmask 392448
      %1285 = vst.msk [vmem:[#allocation2] sm:$0xff] %vm1284, %v1282
      %1286 = vrot.lane.b32.xlu0 %v738, 80
      %v1287 = vpop.permute.xlu0 %1286
      %1288 = vrot.lane.b32.xlu0 %v819, 80
      %v1289 = vpop.permute.xlu0 %1288
      %v1291 = vsel %vm904, %v1287, 0
      %v1294 = vsel %vm904, %v1289, 0
      %1296 = vmatprep.subr.bf16.mxu0 0
      %1297 = vmatpush1.bf16.xpose.msra.mxu0 %v1294
      %1298 = vmatprep.subr.bf16.mxu0 0
      %1299 = vmatpush1.bf16.xpose.msra.mxu0 0
      %1300 = vmatprep.subr.bf16.mxu0 0
      %1301 = vmatpush1.bf16.xpose.msra.mxu0 0
      %1302 = vmatprep.subr.bf16.mxu0 0
      %1303 = vmatpush1.bf16.xpose.msra.mxu0 0
      %1304 = vmatprep.subr.bf16.mxu0 0
      %1305 = vmatpush1.bf16.xpose.msra.mxu0 0
      %1306 = vmatprep.subr.bf16.mxu0 0
      %1307 = vmatpush1.bf16.xpose.msra.mxu0 0
      %1308 = vmatprep.subr.bf16.mxu0 0
      %1309 = vmatpush1.bf16.xpose.msra.mxu0 0
      %1310 = vmatprep.subr.bf16.mxu0 0
      %1311 = vmatpush1.bf16.xpose.msra.mxu0 0
      %1312 = vmatprep.subr.bf16.mxu0 0
      %1313 = vmatpush1.bf16.xpose.msra.mxu0 0
      %1314 = vmatprep.subr.bf16.mxu0 0
      %1315 = vmatpush1.bf16.xpose.msra.mxu0 0
      %1316 = vmatprep.subr.bf16.mxu0 0
      %1317 = vmatpush1.bf16.xpose.msra.mxu0 0
      %1318 = vmatprep.subr.bf16.mxu0 0
      %1319 = vmatpush1.bf16.xpose.msra.mxu0 0
      %1320 = vmatprep.subr.bf16.mxu0 0
      %1321 = vmatpush1.bf16.xpose.msra.mxu0 0
      %1322 = vmatprep.subr.bf16.mxu0 0
      %1323 = vmatpush1.bf16.xpose.msra.mxu0 0
      %1324 = vmatprep.subr.bf16.mxu0 0
      %1325 = vmatpush1.bf16.xpose.msra.mxu0 0
      %1326 = vmatprep.subr.bf16.mxu0 0
      %1327 = vmatpush1.bf16.xpose.msra.mxu0 0
      %1328 = vmatprep.mubr.bf16.mxu0 0
      %1329 = vmatmul.mubr.bf16.gmra.mrb[0].mxu0 %v1291
      %v1330 = vpop.f32.mrb[0].mxu0
      %v1331 = vadd.f32 0.0, %v1330
      %v1332 = vpop.f32.mrb[0].mxu0
      %v1333 = vpop.f32.mrb[0].mxu0
      %v1334 = vadd.f32 0.0, %v1333
      %v1335 = vpop.f32.mrb[0].mxu0
      %1336 = vdwg.mxu0
      %v1337 = vsel %vm903, %v1331, -1e+30
      %v1338 = vsel %vm903, %v1334, -1e+30
      %v1339 = vsel %vm904, %v1337, -inf
      %1340 = vmax.xlane.f32.xlu0 %v1339
      %v1341 = vpop.xlane.xlu0 %1340
      %v1342 = vsel %vm904, %v1338, -inf
      %1343 = vmax.xlane.f32.xlu0 %v1342
      %v1344 = vpop.xlane.xlu0 %1343
      %v1345 = vsub.f32 %v1337, %v1341
      %v1346 = vsub.f32 %v1338, %v1344
      %v1347 = vmul.f32 %v1345, 1.442695
      %v1348 = vpow.pop %v1347
      %v1349 = vmul.f32 %v1346, 1.442695
      %v1350 = vpow.pop %v1349
      %v1351 = vsel %vm904, %v1348, 0.0
      %1352 = vadd.xlane.f32.xlu0 %v1351
      %v1353 = vpop.xlane.xlu0 %1352
      %v1354 = vsel %vm904, %v1350, 0.0
      %1355 = vadd.xlane.f32.xlu0 %v1354
      %v1356 = vpop.xlane.xlu0 %1355
      %v1357 = vrcp.pop %v1353
      %v1358 = vrcp.pop %v1356
      %v1359 = vmul.f32 %v1348, %v1357
      %v1360 = vmul.f32 %v1350, %v1358
      %v1361 = vpack.c.bf16 %v1360, %v1359
      %1362 = vrot.lane.b32.xlu0 %v900, 80
      %v1363 = vpop.permute.xlu0 %1362
      %v1366 = vsel %vm904, %v1361, 0
      %1368 = vmatprep.subr.bf16.mxu0 0
      %1369 = vmatpush1.bf16.msra.mxu0 %v1363
      %1370 = vmatprep.subr.bf16.mxu0 0
      %1371 = vmatpush1.bf16.msra.mxu0 0
      %1372 = vmatprep.subr.bf16.mxu0 0
      %1373 = vmatpush1.bf16.msra.mxu0 0
      %1374 = vmatprep.subr.bf16.mxu0 0
      %1375 = vmatpush1.bf16.msra.mxu0 0
      %1376 = vmatprep.subr.bf16.mxu0 0
      %1377 = vmatpush1.bf16.msra.mxu0 0
      %1378 = vmatprep.subr.bf16.mxu0 0
      %1379 = vmatpush1.bf16.msra.mxu0 0
      %1380 = vmatprep.subr.bf16.mxu0 0
      %1381 = vmatpush1.bf16.msra.mxu0 0
      %1382 = vmatprep.subr.bf16.mxu0 0
      %1383 = vmatpush1.bf16.msra.mxu0 0
      %1384 = vmatprep.subr.bf16.mxu0 0
      %1385 = vmatpush1.bf16.msra.mxu0 0
      %1386 = vmatprep.subr.bf16.mxu0 0
      %1387 = vmatpush1.bf16.msra.mxu0 0
      %1388 = vmatprep.subr.bf16.mxu0 0
      %1389 = vmatpush1.bf16.msra.mxu0 0
      %1390 = vmatprep.subr.bf16.mxu0 0
      %1391 = vmatpush1.bf16.msra.mxu0 0
      %1392 = vmatprep.subr.bf16.mxu0 0
      %1393 = vmatpush1.bf16.msra.mxu0 0
      %1394 = vmatprep.subr.bf16.mxu0 0
      %1395 = vmatpush1.bf16.msra.mxu0 0
      %1396 = vmatprep.subr.bf16.mxu0 0
      %1397 = vmatpush1.bf16.msra.mxu0 0
      %1398 = vmatprep.subr.bf16.mxu0 0
      %1399 = vmatpush1.bf16.msra.mxu0 0
      %1400 = vmatprep.mubr.bf16.mxu0 0
      %1401 = vmatmul.mubr.bf16.gmra.mrb[0].mxu0 %v1366
      %v1402 = vpop.f32.mrb[0].mxu0
      %v1403 = vadd.f32 0.0, %v1402
      %v1404 = vpop.f32.mrb[0].mxu0
      %v1405 = vpop.f32.mrb[0].mxu0
      %v1406 = vadd.f32 0.0, %v1405
      %v1407 = vpop.f32.mrb[0].mxu0
      %1408 = vdwg.mxu0
      %v1409 = vpack.c.bf16 %v1406, %v1403
      %1411 = vrot.lane.b32.xlu0 %v1409, 48
      %v1412 = vpop.permute.xlu0 %1411
      %vm1414 = vcmask 523648
      %1415 = vst.msk [vmem:[#allocation2] sm:$0xff] %vm1414, %v1412
      %v1416 = vld [vmem:[#allocation2] sm:$0xff]
      %v1417 = vld [vmem:[%s9] sm:$0xf]
      %v1418 = vld [vmem:[%s9 + $0x4] sm:$0xf]
      %v1419 = vld [vmem:[%s9 + $0x8] sm:$0xf]
      %v1420 = vld [vmem:[%s9 + $0xc] sm:$0xf]
      %v1421 = vld [vmem:[%s9 + $0x10] sm:$0xf]
      %v1422 = vld [vmem:[%s9 + $0x14] sm:$0xf]
      %v1423 = vld [vmem:[%s9 + $0x18] sm:$0xf]
      %v1424 = vld [vmem:[%s9 + $0x1c] sm:$0xf]
      %v1425 = vld [vmem:[%s10] sm:$0x1]
      %v1427 = vlaneseq
      %v1428 = vshrl.u32 %v1427, 7
      %v1429 = vsub.s32 0, %v1428
      %v1430 = vrot.slane %v1425, %v1429
      %v1440 = vunpack.c.l.b16 %v1417
      %v1441 = vunpack.c.l.b16 %v1418
      %v1442 = vunpack.c.l.b16 %v1419
      %v1443 = vunpack.c.l.b16 %v1420
      %v1444 = vunpack.c.l.b16 %v1421
      %v1445 = vunpack.c.l.b16 %v1422
      %v1446 = vunpack.c.l.b16 %v1423
      %v1447 = vunpack.c.l.b16 %v1424
      %v1448 = vpack.c.b16 %v1441, %v1440
      %v1449 = vpack.c.b16 %v1443, %v1442
      %v1450 = vpack.c.b16 %v1445, %v1444
      %v1451 = vpack.c.b16 %v1447, %v1446
      %v1457 = vsel %vm610, %v1416, 0
      %1459 = vmatprep.subr.bf16.mxu0 0
      %1460 = vmatpush1.bf16.msra.mxu0 %v1448
      %1461 = vmatprep.subr.bf16.mxu0 0
      %1462 = vmatpush1.bf16.msra.mxu0 %v1449
      %1463 = vmatprep.subr.bf16.mxu0 0
      %1464 = vmatpush1.bf16.msra.mxu0 %v1450
      %1465 = vmatprep.subr.bf16.mxu0 0
      %1466 = vmatpush1.bf16.msra.mxu0 %v1451
      %1467 = vmatprep.subr.bf16.mxu0 0
      %1468 = vmatpush1.bf16.msra.mxu0 0
      %1469 = vmatprep.subr.bf16.mxu0 0
      %1470 = vmatpush1.bf16.msra.mxu0 0
      %1471 = vmatprep.subr.bf16.mxu0 0
      %1472 = vmatpush1.bf16.msra.mxu0 0
      %1473 = vmatprep.subr.bf16.mxu0 0
      %1474 = vmatpush1.bf16.msra.mxu0 0
      %1475 = vmatprep.subr.bf16.mxu0 0
      %1476 = vmatpush1.bf16.msra.mxu0 0
      %1477 = vmatprep.subr.bf16.mxu0 0
      %1478 = vmatpush1.bf16.msra.mxu0 0
      %1479 = vmatprep.subr.bf16.mxu0 0
      %1480 = vmatpush1.bf16.msra.mxu0 0
      %1481 = vmatprep.subr.bf16.mxu0 0
      %1482 = vmatpush1.bf16.msra.mxu0 0
      %1483 = vmatprep.subr.bf16.mxu0 0
      %1484 = vmatpush1.bf16.msra.mxu0 0
      %1485 = vmatprep.subr.bf16.mxu0 0
      %1486 = vmatpush1.bf16.msra.mxu0 0
      %1487 = vmatprep.subr.bf16.mxu0 0
      %1488 = vmatpush1.bf16.msra.mxu0 0
      %1489 = vmatprep.subr.bf16.mxu0 0
      %1490 = vmatpush1.bf16.msra.mxu0 0
      %1491 = vmatprep.mubr.bf16.mxu0 0
      %1492 = vmatmul.mubr.bf16.gmra.mrb[0].mxu0 %v1457
      %v1493 = vpop.f32.mrb[0].mxu0
      %v1494 = vadd.f32 %v1430, %v1493
      %v1495 = vpop.f32.mrb[0].mxu0
      %v1496 = vpop.f32.mrb[0].mxu0
      %v1497 = vadd.f32 %v1430, %v1496
      %v1498 = vpop.f32.mrb[0].mxu0
      %1499 = vdwg.mxu0
      %v1500 = vadd.f32 %v606, %v1494
      %v1501 = vadd.f32 %v607, %v1497
      %v1502 = vld [vmem:[%s11] sm:$0x1]
      %v1503 = vld [vmem:[%s12] sm:$0x1]
      %v1504 = vsel %vm610, %v1500, 0.0
      %1505 = vadd.xlane.f32.xlu0 %v1504
      %v1506 = vpop.xlane.xlu0 %1505
      %v1507 = vsel %vm610, %v1501, 0.0
      %1508 = vadd.xlane.f32.xlu0 %v1507
      %v1509 = vpop.xlane.xlu0 %1508
      %v1510 = vmul.f32 %v1506, %v617
      %v1511 = vmul.f32 %v1509, %v617
      %v1512 = vsub.f32 %v1500, %v1510
      %v1513 = vsub.f32 %v1501, %v1511
      %v1514 = vmul.f32 %v1512, %v1512
      %v1515 = vmul.f32 %v1513, %v1513
      %v1516 = vsel %vm610, %v1514, 0.0
      %1517 = vadd.xlane.f32.xlu0 %v1516
      %v1518 = vpop.xlane.xlu0 %1517
      %v1519 = vsel %vm610, %v1515, 0.0
      %1520 = vadd.xlane.f32.xlu0 %v1519
      %v1521 = vpop.xlane.xlu0 %1520
      %v1522 = vmul.f32 %v1518, %v617
      %v1523 = vmul.f32 %v1521, %v617
      %v1524 = vadd.f32 %v1522, 1e-06
      %v1525 = vadd.f32 %v1523, 1e-06
      %v1526 = vrsqrt.pop %v1524
      %v1527 = vrsqrt.pop %v1525
      %v1528 = vmul.f32 %v1512, %v1526
      %v1529 = vmul.f32 %v1513, %v1527
      %v1531 = vlaneseq
      %v1532 = vshrl.u32 %v1531, 7
      %v1533 = vsub.s32 0, %v1532
      %v1534 = vrot.slane %v1502, %v1533
      %v1536 = vmul.f32 %v1528, %v1534
      %v1537 = vmul.f32 %v1529, %v1534
      %v1539 = vlaneseq
      %v1540 = vshrl.u32 %v1539, 7
      %v1541 = vsub.s32 0, %v1540
      %v1542 = vrot.slane %v1503, %v1541
      %v1544 = vadd.f32 %v1536, %v1542
      %v1545 = vadd.f32 %v1537, %v1542
      %v1546 = vpack.c.bf16 %v1545, %v1544
      %v1547 = vld [vmem:[%s13] sm:$0xff]
      %v1548 = vld [vmem:[%s13 + $0x8] sm:$0xff]
      %v1549 = vld [vmem:[%s13 + $0x10] sm:$0xff]
      %v1550 = vld [vmem:[%s13 + $0x18] sm:$0xff]
      %v1551 = vld [vmem:[%s13 + $0x20] sm:$0xff]
      %v1552 = vld [vmem:[%s13 + $0x28] sm:$0xff]
      %v1553 = vld [vmem:[%s13 + $0x30] sm:$0xff]
      %v1554 = vld [vmem:[%s13 + $0x38] sm:$0xff]
      %v1555 = vld [vmem:[%s14] sm:$0x3]
      %v1557 = vlaneseq
      %v1558 = vshrl.u32 %v1557, 7
      %v1559 = vsub.s32 0, %v1558
      %v1560 = vrot.slane %v1555, %v1559
      %v1561 = vlaneseq
      %v1562 = vshrl.u32 %v1561, 7
      %v1563 = vsub.s32 1, %v1562
      %v1564 = vrot.slane %v1555, %v1563
      %v1575 = vunpack.c.l.b16 %v1547
      %v1576 = vunpack.c.h.b16 %v1547
      %v1577 = vunpack.c.l.b16 %v1548
      %v1578 = vunpack.c.h.b16 %v1548
      %v1579 = vunpack.c.l.b16 %v1549
      %v1580 = vunpack.c.h.b16 %v1549
      %v1581 = vunpack.c.l.b16 %v1550
      %v1582 = vunpack.c.h.b16 %v1550
      %v1583 = vunpack.c.l.b16 %v1551
      %v1584 = vunpack.c.h.b16 %v1551
      %v1585 = vunpack.c.l.b16 %v1552
      %v1586 = vunpack.c.h.b16 %v1552
      %v1587 = vunpack.c.l.b16 %v1553
      %v1588 = vunpack.c.h.b16 %v1553
      %v1589 = vunpack.c.l.b16 %v1554
      %v1590 = vunpack.c.h.b16 %v1554
      %v1591 = vpack.c.b16 %v1577, %v1575
      %v1592 = vpack.c.b16 %v1578, %v1576
      %v1593 = vpack.c.b16 %v1581, %v1579
      %v1594 = vpack.c.b16 %v1582, %v1580
      %v1595 = vpack.c.b16 %v1585, %v1583
      %v1596 = vpack.c.b16 %v1586, %v1584
      %v1597 = vpack.c.b16 %v1589, %v1587
      %v1598 = vpack.c.b16 %v1590, %v1588
      %v1608 = vsel %vm610, %v1546, 0
      %1610 = vmatprep.subr.bf16.mxu0 %v1592
      %1611 = vmatpush1.bf16.msra.mxu0 %v1591
      %1612 = vmatprep.subr.bf16.mxu0 %v1594
      %1613 = vmatpush1.bf16.msra.mxu0 %v1593
      %1614 = vmatprep.subr.bf16.mxu0 %v1596
      %1615 = vmatpush1.bf16.msra.mxu0 %v1595
      %1616 = vmatprep.subr.bf16.mxu0 %v1598
      %1617 = vmatpush1.bf16.msra.mxu0 %v1597
      %1618 = vmatprep.subr.bf16.mxu0 0
      %1619 = vmatpush1.bf16.msra.mxu0 0
      %1620 = vmatprep.subr.bf16.mxu0 0
      %1621 = vmatpush1.bf16.msra.mxu0 0
      %1622 = vmatprep.subr.bf16.mxu0 0
      %1623 = vmatpush1.bf16.msra.mxu0 0
      %1624 = vmatprep.subr.bf16.mxu0 0
      %1625 = vmatpush1.bf16.msra.mxu0 0
      %1626 = vmatprep.subr.bf16.mxu0 0
      %1627 = vmatpush1.bf16.msra.mxu0 0
      %1628 = vmatprep.subr.bf16.mxu0 0
      %1629 = vmatpush1.bf16.msra.mxu0 0
      %1630 = vmatprep.subr.bf16.mxu0 0
      %1631 = vmatpush1.bf16.msra.mxu0 0
      %1632 = vmatprep.subr.bf16.mxu0 0
      %1633 = vmatpush1.bf16.msra.mxu0 0
      %1634 = vmatprep.subr.bf16.mxu0 0
      %1635 = vmatpush1.bf16.msra.mxu0 0
      %1636 = vmatprep.subr.bf16.mxu0 0
      %1637 = vmatpush1.bf16.msra.mxu0 0
      %1638 = vmatprep.subr.bf16.mxu0 0
      %1639 = vmatpush1.bf16.msra.mxu0 0
      %1640 = vmatprep.subr.bf16.mxu0 0
      %1641 = vmatpush1.bf16.msra.mxu0 0
      %1642 = vmatprep.mubr.bf16.mxu0 0
      %1643 = vmatmul.mubr.bf16.gmra.mrb[0].mxu0 %v1608
      %v1644 = vpop.f32.mrb[0].mxu0
      %v1645 = vadd.f32 %v1560, %v1644
      %v1646 = vpop.f32.mrb[0].mxu0
      %v1647 = vadd.f32 %v1564, %v1646
      %v1648 = vpop.f32.mrb[0].mxu0
      %v1649 = vadd.f32 %v1560, %v1648
      %v1650 = vpop.f32.mrb[0].mxu0
      %v1651 = vadd.f32 %v1564, %v1650
      %1652 = vdwg.mxu0
      %v1653 = vmul.f32 %v1645, 0.5
      %v1654 = vmul.f32 %v1647, 0.5
      %v1655 = vmul.f32 %v1649, 0.5
      %v1656 = vmul.f32 %v1651, 0.5
      %v1657 = vmul.f32 %v1645, 0.70710677
      %v1658 = vmul.f32 %v1647, 0.70710677
      %v1659 = vmul.f32 %v1649, 0.70710677
      %v1660 = vmul.f32 %v1651, 0.70710677
      %v1661 = verf.f32.pop %v1657
      %v1662 = verf.f32.pop %v1658
      %v1663 = verf.f32.pop %v1659
      %v1664 = verf.f32.pop %v1660
      %v1665 = vadd.f32 %v1661, 1.0
      %v1666 = vadd.f32 %v1662, 1.0
      %v1667 = vadd.f32 %v1663, 1.0
      %v1668 = vadd.f32 %v1664, 1.0
      %v1669 = vmul.f32 %v1653, %v1665
      %v1670 = vmul.f32 %v1654, %v1666
      %v1671 = vmul.f32 %v1655, %v1667
      %v1672 = vmul.f32 %v1656, %v1668
      %v1673 = vpack.c.bf16 %v1671, %v1669
      %v1674 = vpack.c.bf16 %v1672, %v1670
      %v1675 = vld [vmem:[%s15] sm:$0xf]
      %v1676 = vld [vmem:[%s15 + $0x4] sm:$0xf]
      %v1677 = vld [vmem:[%s15 + $0x8] sm:$0xf]
      %v1678 = vld [vmem:[%s15 + $0xc] sm:$0xf]
      %v1679 = vld [vmem:[%s15 + $0x10] sm:$0xf]
      %v1680 = vld [vmem:[%s15 + $0x14] sm:$0xf]
      %v1681 = vld [vmem:[%s15 + $0x18] sm:$0xf]
      %v1682 = vld [vmem:[%s15 + $0x1c] sm:$0xf]
      %v1683 = vld [vmem:[%s15 + $0x20] sm:$0xf]
      %v1684 = vld [vmem:[%s15 + $0x24] sm:$0xf]
      %v1685 = vld [vmem:[%s15 + $0x28] sm:$0xf]
      %v1686 = vld [vmem:[%s15 + $0x2c] sm:$0xf]
      %v1687 = vld [vmem:[%s15 + $0x30] sm:$0xf]
      %v1688 = vld [vmem:[%s15 + $0x34] sm:$0xf]
      %v1689 = vld [vmem:[%s15 + $0x38] sm:$0xf]
      %v1690 = vld [vmem:[%s15 + $0x3c] sm:$0xf]
      %v1691 = vld [vmem:[%s15 + $0x40] sm:$0xf]
      %v1692 = vld [vmem:[%s15 + $0x44] sm:$0xf]
      %v1693 = vld [vmem:[%s15 + $0x48] sm:$0xf]
      %v1694 = vld [vmem:[%s15 + $0x4c] sm:$0xf]
      %v1695 = vld [vmem:[%s15 + $0x50] sm:$0xf]
      %v1696 = vld [vmem:[%s15 + $0x54] sm:$0xf]
      %v1697 = vld [vmem:[%s15 + $0x58] sm:$0xf]
      %v1698 = vld [vmem:[%s15 + $0x5c] sm:$0xf]
      %v1699 = vld [vmem:[%s15 + $0x60] sm:$0xf]
      %v1700 = vld [vmem:[%s15 + $0x64] sm:$0xf]
      %v1701 = vld [vmem:[%s15 + $0x68] sm:$0xf]
      %v1702 = vld [vmem:[%s15 + $0x6c] sm:$0xf]
      %v1703 = vld [vmem:[%s15 + $0x70] sm:$0xf]
      %v1704 = vld [vmem:[%s15 + $0x74] sm:$0xf]
      %v1705 = vld [vmem:[%s15 + $0x78] sm:$0xf]
      %v1706 = vld [vmem:[%s15 + $0x7c] sm:$0xf]
      %v1707 = vld [vmem:[%s16] sm:$0x1]
      %v1709 = vlaneseq
      %v1710 = vshrl.u32 %v1709, 7
      %v1711 = vsub.s32 0, %v1710
      %v1712 = vrot.slane %v1707, %v1711
      %v1746 = vunpack.c.l.b16 %v1675
      %v1747 = vunpack.c.l.b16 %v1676
      %v1748 = vunpack.c.l.b16 %v1677
      %v1749 = vunpack.c.l.b16 %v1678
      %v1750 = vunpack.c.l.b16 %v1679
      %v1751 = vunpack.c.l.b16 %v1680
      %v1752 = vunpack.c.l.b16 %v1681
      %v1753 = vunpack.c.l.b16 %v1682
      %v1754 = vunpack.c.l.b16 %v1683
      %v1755 = vunpack.c.l.b16 %v1684
      %v1756 = vunpack.c.l.b16 %v1685
      %v1757 = vunpack.c.l.b16 %v1686
      %v1758 = vunpack.c.l.b16 %v1687
      %v1759 = vunpack.c.l.b16 %v1688
      %v1760 = vunpack.c.l.b16 %v1689
      %v1761 = vunpack.c.l.b16 %v1690
      %v1762 = vunpack.c.l.b16 %v1691
      %v1763 = vunpack.c.l.b16 %v1692
      %v1764 = vunpack.c.l.b16 %v1693
      %v1765 = vunpack.c.l.b16 %v1694
      %v1766 = vunpack.c.l.b16 %v1695
      %v1767 = vunpack.c.l.b16 %v1696
      %v1768 = vunpack.c.l.b16 %v1697
      %v1769 = vunpack.c.l.b16 %v1698
      %v1770 = vunpack.c.l.b16 %v1699
      %v1771 = vunpack.c.l.b16 %v1700
      %v1772 = vunpack.c.l.b16 %v1701
      %v1773 = vunpack.c.l.b16 %v1702
      %v1774 = vunpack.c.l.b16 %v1703
      %v1775 = vunpack.c.l.b16 %v1704
      %v1776 = vunpack.c.l.b16 %v1705
      %v1777 = vunpack.c.l.b16 %v1706
      %v1778 = vpack.c.b16 %v1747, %v1746
      %v1779 = vpack.c.b16 %v1749, %v1748
      %v1780 = vpack.c.b16 %v1751, %v1750
      %v1781 = vpack.c.b16 %v1753, %v1752
      %v1782 = vpack.c.b16 %v1755, %v1754
      %v1783 = vpack.c.b16 %v1757, %v1756
      %v1784 = vpack.c.b16 %v1759, %v1758
      %v1785 = vpack.c.b16 %v1761, %v1760
      %v1786 = vpack.c.b16 %v1763, %v1762
      %v1787 = vpack.c.b16 %v1765, %v1764
      %v1788 = vpack.c.b16 %v1767, %v1766
      %v1789 = vpack.c.b16 %v1769, %v1768
      %v1790 = vpack.c.b16 %v1771, %v1770
      %v1791 = vpack.c.b16 %v1773, %v1772
      %v1792 = vpack.c.b16 %v1775, %v1774
      %v1793 = vpack.c.b16 %v1777, %v1776
      %1810 = vmatprep.subr.bf16.mxu0 0
      %1811 = vmatpush1.bf16.msra.mxu0 %v1778
      %1812 = vmatprep.subr.bf16.mxu0 0
      %1813 = vmatpush1.bf16.msra.mxu0 %v1779
      %1814 = vmatprep.subr.bf16.mxu0 0
      %1815 = vmatpush1.bf16.msra.mxu0 %v1780
      %1816 = vmatprep.subr.bf16.mxu0 0
      %1817 = vmatpush1.bf16.msra.mxu0 %v1781
      %1818 = vmatprep.subr.bf16.mxu0 0
      %1819 = vmatpush1.bf16.msra.mxu0 %v1782
      %1820 = vmatprep.subr.bf16.mxu0 0
      %1821 = vmatpush1.bf16.msra.mxu0 %v1783
      %1822 = vmatprep.subr.bf16.mxu0 0
      %1823 = vmatpush1.bf16.msra.mxu0 %v1784
      %1824 = vmatprep.subr.bf16.mxu0 0
      %1825 = vmatpush1.bf16.msra.mxu0 %v1785
      %1826 = vmatprep.subr.bf16.mxu0 0
      %1827 = vmatpush1.bf16.msra.mxu0 %v1786
      %1828 = vmatprep.subr.bf16.mxu0 0
      %1829 = vmatpush1.bf16.msra.mxu0 %v1787
      %1830 = vmatprep.subr.bf16.mxu0 0
      %1831 = vmatpush1.bf16.msra.mxu0 %v1788
      %1832 = vmatprep.subr.bf16.mxu0 0
      %1833 = vmatpush1.bf16.msra.mxu0 %v1789
      %1834 = vmatprep.subr.bf16.mxu0 0
      %1835 = vmatpush1.bf16.msra.mxu0 %v1790
      %1836 = vmatprep.subr.bf16.mxu0 0
      %1837 = vmatpush1.bf16.msra.mxu0 %v1791
      %1838 = vmatprep.subr.bf16.mxu0 0
      %1839 = vmatpush1.bf16.msra.mxu0 %v1792
      %1840 = vmatprep.subr.bf16.mxu0 0
      %1841 = vmatpush1.bf16.msra.mxu0 %v1793
      %1842 = vmatprep.mubr.bf16.mxu0 %v1674
      %1843 = vmatmul.mubr.bf16.gmra.mrb[0].mxu0 %v1673
      %v1844 = vpop.f32.mrb[0].mxu0
      %v1845 = vadd.f32 %v1712, %v1844
      %v1846 = vpop.f32.mrb[0].mxu0
      %v1847 = vpop.f32.mrb[0].mxu0
      %v1848 = vadd.f32 %v1712, %v1847
      %v1849 = vpop.f32.mrb[0].mxu0
      %1850 = vdwg.mxu0
      %v1851 = vadd.f32 %v1500, %v1845
      %v1852 = vadd.f32 %v1501, %v1848
      %v1853 = vpack.c.bf16 %v1852, %v1851
      %v1855 = vunpack.c.l.b16 %v1853
      %v1856 = vunpack.c.h.b16 %v1853
      %v1857 = vpack.c.b16 %v1855, %v1855
      %v1858 = vpack.c.b16 %v1856, %v1856
      %vm1861 = vcmask 519168
      %1862 = vst.msk [vmem:[%s602] sm:$0xf] %vm1861, %v1857
      %1863 = vst.msk [vmem:[%s602 + $0x4] sm:$0xf] %vm1861, %v1858
      %p1864 = scmp.lt.s32.totalorder %s30, 1
      %s1865 = scalar_select %p1864, %s30, 1
      %s1866 = smul.addr %s1865, 2
      %s1867 = smul.addr %s1866, 4
      %s1868 = scalar_lea.vmem %s19, %s1867
      // Predicated region
      $region97: #{_lambda_.4} parent=95 // pred_check
        %p1869 = pneg %p452
      $region98: #{_lambda_.4} parent=95 // pred_check_branch
        %1871 = sbr.rel (%p1869) target = $region100
      $region99: #{_lambda_.4} parent=95 // pred_region
        _
      $region100: #{_lambda_.4} parent=95 // pred_fallthru
        _
    $region96: #{_lambda_.4} parent=5 // pred_fallthru
      _
    %p1872 = scmp.le.s32.totalorder 2, %s25
    // Predicated region
    $region101: #{_lambda_.4} parent=5 // pred_check
      %p1873 = pneg %p1872
    $region102: #{_lambda_.4} parent=5 // pred_check_branch
      %1875 = sbr.rel (%p1873) target = $region104
    $region103: #{_lambda_.4} parent=5 // pred_region
      %s1876 = ssub.s32 %s25, 2
      // Predicated region
      $region105: #{_lambda_.4} parent=103 // pred_check
        %p1877 = pneg %p458
      $region106: #{_lambda_.4} parent=103 // pred_check_branch
        %1879 = sbr.rel (%p1877) target = $region108
      $region107: #{_lambda_.4} parent=103 // pred_region
        %p1880 = scmp.lt.s32.totalorder %s31, 1
        %s1881 = scalar_select %p1880, %s31, 1
        %s1882 = smul.addr %s1881, 2
        %s1883 = smul.addr %s1882, 4
        %s1884 = scalar_lea.vmem %s19, %s1883
      $region108: #{_lambda_.4} parent=103 // pred_fallthru
        _
    $region104: #{_lambda_.4} parent=5 // pred_fallthru
      _
  $region6: #{_lambda_.4} parent=0 // loop_footer
    %s29 = sadd.s32 1, %s25
  $region7: #{_lambda_.4} parent=0 // loop_footer_branch
    %24 = sbr.rel target = $region3
  $region8: #{_lambda_.4} parent=0 // loop_exit
    _

// kernel: _lambda_.5
$region0: #{_lambda_.5}
  #allocation0 [shape = 'u32[]', space=smem, size = 0x4, offset = 0x4, fixed_abs, tag = 'smem constant byte address 0x4 - core index']
  #allocation1 [shape = 'u32[144,128]{1,0:T(1,128)}', space=vmem, size = 0x12000, scoped, tag = 'internal scratch']
  #allocation2 [shape = 'bf16[16,64]{1,0:T(16,128)(2,1)}', space=vmem, size = 0x1000, scoped, tag = 'scratch operand']
  %s0 = inlined_call_operand.vmem [shape: bf16[2,16,64], index: 0, kind: input, shape index: {}]
  %s1 = inlined_call_operand.vmem [shape: f32[1,64], index: 1, kind: input, shape index: {}]
  %s2 = inlined_call_operand.vmem [shape: f32[1,64], index: 2, kind: input, shape index: {}]
  %s3 = inlined_call_operand.vmem [shape: bf16[64,64], index: 3, kind: input, shape index: {}]
  %s4 = inlined_call_operand.vmem [shape: f32[1,64], index: 4, kind: input, shape index: {}]
  %s5 = inlined_call_operand.vmem [shape: bf16[64,64], index: 5, kind: input, shape index: {}]
  %s6 = inlined_call_operand.vmem [shape: f32[1,64], index: 6, kind: input, shape index: {}]
  %s7 = inlined_call_operand.vmem [shape: bf16[64,64], index: 7, kind: input, shape index: {}]
  %s8 = inlined_call_operand.vmem [shape: f32[1,64], index: 8, kind: input, shape index: {}]
  %s9 = inlined_call_operand.vmem [shape: bf16[64,64], index: 9, kind: input, shape index: {}]
  %s10 = inlined_call_operand.vmem [shape: f32[1,64], index: 10, kind: input, shape index: {}]
  %s11 = inlined_call_operand.vmem [shape: f32[1,64], index: 11, kind: input, shape index: {}]
  %s12 = inlined_call_operand.vmem [shape: f32[1,64], index: 12, kind: input, shape index: {}]
  %s13 = inlined_call_operand.vmem [shape: bf16[64,256], index: 13, kind: input, shape index: {}]
  %s14 = inlined_call_operand.vmem [shape: f32[1,256], index: 14, kind: input, shape index: {}]
  %s15 = inlined_call_operand.vmem [shape: bf16[256,64], index: 15, kind: input, shape index: {}]
  %s16 = inlined_call_operand.vmem [shape: f32[1,64], index: 16, kind: input, shape index: {}]
  %s17 = inlined_call_operand.vmem [shape: f32[1,64], index: 17, kind: input, shape index: {}]
  %s18 = inlined_call_operand.vmem [shape: f32[1,64], index: 18, kind: input, shape index: {}]
  %s19 = inlined_call_operand.vmem [shape: bf16[2,16,64], index: 19, kind: output, shape index: {}]
  %s20 = sld [smem:[#allocation0]]
  $region109: #{_lambda_.5} parent=0
    _
  %s22 = ssub.s32 1, %s20
  %s23 = scalar_select 0, %s22, %s20
  loop: start=0, step=1, limit=4
  $region2: #{_lambda_.5} parent=0 // loop_pre_header
    _
  $region3: #{_lambda_.5} parent=0 // loop_header
    %s25 = sphi 0, %s29
    %p26 = scmp.ge.s32.totalorder %s25, 4
    %s35 = sphi 0, %s37
    %s38 = sphi 0, %s35
    %s39 = sphi 0, %s38
    %s55 = sphi 0, %s39
    %s59 = sphi 0, %s59
    %s61 = sphi 0, %s59
    %s62 = sphi 0, %s61
    %s76 = sphi 0, %s62
    %s80 = sphi 0, %s80
    %s82 = sphi 0, %s80
    %s83 = sphi 0, %s82
    %s97 = sphi 0, %s83
    %s101 = sphi 0, %s101
    %s103 = sphi 0, %s101
    %s104 = sphi 0, %s103
    %s118 = sphi 0, %s104
    %s122 = sphi 0, %s122
    %s124 = sphi 0, %s122
    %s125 = sphi 0, %s124
    %s139 = sphi 0, %s125
    %s143 = sphi 0, %s143
    %s145 = sphi 0, %s143
    %s146 = sphi 0, %s145
    %s160 = sphi 0, %s146
    %s164 = sphi 0, %s164
    %s166 = sphi 0, %s164
    %s167 = sphi 0, %s166
    %s181 = sphi 0, %s167
    %s185 = sphi 0, %s185
    %s187 = sphi 0, %s185
    %s188 = sphi 0, %s187
    %s202 = sphi 0, %s188
    %s206 = sphi 0, %s206
    %s208 = sphi 0, %s206
    %s209 = sphi 0, %s208
    %s223 = sphi 0, %s209
    %s227 = sphi 0, %s227
    %s229 = sphi 0, %s227
    %s230 = sphi 0, %s229
    %s244 = sphi 0, %s230
    %s248 = sphi 0, %s248
    %s250 = sphi 0, %s248
    %s251 = sphi 0, %s250
    %s265 = sphi 0, %s251
    %s269 = sphi 0, %s269
    %s271 = sphi 0, %s269
    %s272 = sphi 0, %s271
    %s286 = sphi 0, %s272
    %s290 = sphi 0, %s290
    %s292 = sphi 0, %s290
    %s293 = sphi 0, %s292
    %s307 = sphi 0, %s293
    %s311 = sphi 0, %s311
    %s313 = sphi 0, %s311
    %s314 = sphi 0, %s313
    %s328 = sphi 0, %s314
    %s332 = sphi 0, %s332
    %s334 = sphi 0, %s332
    %s335 = sphi 0, %s334
    %s349 = sphi 0, %s335
    %s353 = sphi 0, %s353
    %s355 = sphi 0, %s353
    %s356 = sphi 0, %s355
    %s370 = sphi 0, %s356
    %s374 = sphi 0, %s374
    %s376 = sphi 0, %s374
    %s377 = sphi 0, %s376
    %s391 = sphi 0, %s377
    %s395 = sphi 0, %s395
    %s397 = sphi 0, %s395
    %s398 = sphi 0, %s397
    %s412 = sphi 0, %s398
    %s416 = sphi 0, %s416
    %s418 = sphi 0, %s416
    %s419 = sphi 0, %s418
    %s433 = sphi 0, %s419
    %s439 = sphi 0, %s441
    %s442 = sphi 0, %s439
    %s443 = sphi 0, %s442
    %s459 = sphi 0, %s443
  $region4: #{_lambda_.5} parent=0 // loop_header_branch
    %28 = sbr.rel (%p26) target = $region8
  $region5: #{_lambda_.5} parent=0 // loop_body
    %s30 = ssub.s32 %s25, 1
    %s31 = ssub.s32 %s25, 2
    %s32 = sadd.s32 %s25, 1
    %s33 = ssub.s32 %s25, %s32
    %p34 = scmp.eq.s32.totalorder %s33, 0
    %s36 = sadd.s32 %s35, 1
    %s37 = scalar_select %p34, %s35, %s36
    %p40 = pneg %p34
    %p41 = scmp.eq.s32.totalorder %s25, 1
    %p42 = por %p40, %p41
    %p43 = scmp.ne.s32.totalorder %s35, %s38
    %p44 = scmp.eq.s32.totalorder %s25, 0
    %p45 = por %p43, %p44
    %p46 = scmp.ne.s32.totalorder %s35, %s38
    %p47 = scmp.eq.s32.totalorder %s30, 1
    %p48 = por %p46, %p47
    %p49 = scmp.ne.s32.totalorder %s38, %s39
    %p50 = scmp.eq.s32.totalorder %s30, 0
    %p51 = por %p49, %p50
    %p52 = scmp.ne.s32.totalorder %s38, %s39
    %p53 = scmp.eq.s32.totalorder %s31, 1
    %p54 = por %p52, %p53
    %p56 = scmp.ne.s32.totalorder %s39, %s55
    %p57 = scmp.eq.s32.totalorder %s31, 0
    %p58 = por %p56, %p57
    %s60 = sadd.s32 %s59, 1
    %p63 = scmp.eq.s32.totalorder %s25, 1
    %p64 = scmp.ne.s32.totalorder %s59, %s61
    %p65 = scmp.eq.s32.totalorder %s25, 0
    %p66 = por %p64, %p65
    %p67 = scmp.ne.s32.totalorder %s59, %s61
    %p68 = scmp.eq.s32.totalorder %s30, 1
    %p69 = por %p67, %p68
    %p70 = scmp.ne.s32.totalorder %s61, %s62
    %p71 = scmp.eq.s32.totalorder %s30, 0
    %p72 = por %p70, %p71
    %p73 = scmp.ne.s32.totalorder %s61, %s62
    %p74 = scmp.eq.s32.totalorder %s31, 1
    %p75 = por %p73, %p74
    %p77 = scmp.ne.s32.totalorder %s62, %s76
    %p78 = scmp.eq.s32.totalorder %s31, 0
    %p79 = por %p77, %p78
    %s81 = sadd.s32 %s80, 1
    %p84 = scmp.eq.s32.totalorder %s25, 1
    %p85 = scmp.ne.s32.totalorder %s80, %s82
    %p86 = scmp.eq.s32.totalorder %s25, 0
    %p87 = por %p85, %p86
    %p88 = scmp.ne.s32.totalorder %s80, %s82
    %p89 = scmp.eq.s32.totalorder %s30, 1
    %p90 = por %p88, %p89
    %p91 = scmp.ne.s32.totalorder %s82, %s83
    %p92 = scmp.eq.s32.totalorder %s30, 0
    %p93 = por %p91, %p92
    %p94 = scmp.ne.s32.totalorder %s82, %s83
    %p95 = scmp.eq.s32.totalorder %s31, 1
    %p96 = por %p94, %p95
    %p98 = scmp.ne.s32.totalorder %s83, %s97
    %p99 = scmp.eq.s32.totalorder %s31, 0
    %p100 = por %p98, %p99
    %s102 = sadd.s32 %s101, 1
    %p105 = scmp.eq.s32.totalorder %s25, 1
    %p106 = scmp.ne.s32.totalorder %s101, %s103
    %p107 = scmp.eq.s32.totalorder %s25, 0
    %p108 = por %p106, %p107
    %p109 = scmp.ne.s32.totalorder %s101, %s103
    %p110 = scmp.eq.s32.totalorder %s30, 1
    %p111 = por %p109, %p110
    %p112 = scmp.ne.s32.totalorder %s103, %s104
    %p113 = scmp.eq.s32.totalorder %s30, 0
    %p114 = por %p112, %p113
    %p115 = scmp.ne.s32.totalorder %s103, %s104
    %p116 = scmp.eq.s32.totalorder %s31, 1
    %p117 = por %p115, %p116
    %p119 = scmp.ne.s32.totalorder %s104, %s118
    %p120 = scmp.eq.s32.totalorder %s31, 0
    %p121 = por %p119, %p120
    %s123 = sadd.s32 %s122, 1
    %p126 = scmp.eq.s32.totalorder %s25, 1
    %p127 = scmp.ne.s32.totalorder %s122, %s124
    %p128 = scmp.eq.s32.totalorder %s25, 0
    %p129 = por %p127, %p128
    %p130 = scmp.ne.s32.totalorder %s122, %s124
    %p131 = scmp.eq.s32.totalorder %s30, 1
    %p132 = por %p130, %p131
    %p133 = scmp.ne.s32.totalorder %s124, %s125
    %p134 = scmp.eq.s32.totalorder %s30, 0
    %p135 = por %p133, %p134
    %p136 = scmp.ne.s32.totalorder %s124, %s125
    %p137 = scmp.eq.s32.totalorder %s31, 1
    %p138 = por %p136, %p137
    %p140 = scmp.ne.s32.totalorder %s125, %s139
    %p141 = scmp.eq.s32.totalorder %s31, 0
    %p142 = por %p140, %p141
    %s144 = sadd.s32 %s143, 1
    %p147 = scmp.eq.s32.totalorder %s25, 1
    %p148 = scmp.ne.s32.totalorder %s143, %s145
    %p149 = scmp.eq.s32.totalorder %s25, 0
    %p150 = por %p148, %p149
    %p151 = scmp.ne.s32.totalorder %s143, %s145
    %p152 = scmp.eq.s32.totalorder %s30, 1
    %p153 = por %p151, %p152
    %p154 = scmp.ne.s32.totalorder %s145, %s146
    %p155 = scmp.eq.s32.totalorder %s30, 0
    %p156 = por %p154, %p155
    %p157 = scmp.ne.s32.totalorder %s145, %s146
    %p158 = scmp.eq.s32.totalorder %s31, 1
    %p159 = por %p157, %p158
    %p161 = scmp.ne.s32.totalorder %s146, %s160
    %p162 = scmp.eq.s32.totalorder %s31, 0
    %p163 = por %p161, %p162
    %s165 = sadd.s32 %s164, 1
    %p168 = scmp.eq.s32.totalorder %s25, 1
    %p169 = scmp.ne.s32.totalorder %s164, %s166
    %p170 = scmp.eq.s32.totalorder %s25, 0
    %p171 = por %p169, %p170
    %p172 = scmp.ne.s32.totalorder %s164, %s166
    %p173 = scmp.eq.s32.totalorder %s30, 1
    %p174 = por %p172, %p173
    %p175 = scmp.ne.s32.totalorder %s166, %s167
    %p176 = scmp.eq.s32.totalorder %s30, 0
    %p177 = por %p175, %p176
    %p178 = scmp.ne.s32.totalorder %s166, %s167
    %p179 = scmp.eq.s32.totalorder %s31, 1
    %p180 = por %p178, %p179
    %p182 = scmp.ne.s32.totalorder %s167, %s181
    %p183 = scmp.eq.s32.totalorder %s31, 0
    %p184 = por %p182, %p183
    %s186 = sadd.s32 %s185, 1
    %p189 = scmp.eq.s32.totalorder %s25, 1
    %p190 = scmp.ne.s32.totalorder %s185, %s187
    %p191 = scmp.eq.s32.totalorder %s25, 0
    %p192 = por %p190, %p191
    %p193 = scmp.ne.s32.totalorder %s185, %s187
    %p194 = scmp.eq.s32.totalorder %s30, 1
    %p195 = por %p193, %p194
    %p196 = scmp.ne.s32.totalorder %s187, %s188
    %p197 = scmp.eq.s32.totalorder %s30, 0
    %p198 = por %p196, %p197
    %p199 = scmp.ne.s32.totalorder %s187, %s188
    %p200 = scmp.eq.s32.totalorder %s31, 1
    %p201 = por %p199, %p200
    %p203 = scmp.ne.s32.totalorder %s188, %s202
    %p204 = scmp.eq.s32.totalorder %s31, 0
    %p205 = por %p203, %p204
    %s207 = sadd.s32 %s206, 1
    %p210 = scmp.eq.s32.totalorder %s25, 1
    %p211 = scmp.ne.s32.totalorder %s206, %s208
    %p212 = scmp.eq.s32.totalorder %s25, 0
    %p213 = por %p211, %p212
    %p214 = scmp.ne.s32.totalorder %s206, %s208
    %p215 = scmp.eq.s32.totalorder %s30, 1
    %p216 = por %p214, %p215
    %p217 = scmp.ne.s32.totalorder %s208, %s209
    %p218 = scmp.eq.s32.totalorder %s30, 0
    %p219 = por %p217, %p218
    %p220 = scmp.ne.s32.totalorder %s208, %s209
    %p221 = scmp.eq.s32.totalorder %s31, 1
    %p222 = por %p220, %p221
    %p224 = scmp.ne.s32.totalorder %s209, %s223
    %p225 = scmp.eq.s32.totalorder %s31, 0
    %p226 = por %p224, %p225
    %s228 = sadd.s32 %s227, 1
    %p231 = scmp.eq.s32.totalorder %s25, 1
    %p232 = scmp.ne.s32.totalorder %s227, %s229
    %p233 = scmp.eq.s32.totalorder %s25, 0
    %p234 = por %p232, %p233
    %p235 = scmp.ne.s32.totalorder %s227, %s229
    %p236 = scmp.eq.s32.totalorder %s30, 1
    %p237 = por %p235, %p236
    %p238 = scmp.ne.s32.totalorder %s229, %s230
    %p239 = scmp.eq.s32.totalorder %s30, 0
    %p240 = por %p238, %p239
    %p241 = scmp.ne.s32.totalorder %s229, %s230
    %p242 = scmp.eq.s32.totalorder %s31, 1
    %p243 = por %p241, %p242
    %p245 = scmp.ne.s32.totalorder %s230, %s244
    %p246 = scmp.eq.s32.totalorder %s31, 0
    %p247 = por %p245, %p246
    %s249 = sadd.s32 %s248, 1
    %p252 = scmp.eq.s32.totalorder %s25, 1
    %p253 = scmp.ne.s32.totalorder %s248, %s250
    %p254 = scmp.eq.s32.totalorder %s25, 0
    %p255 = por %p253, %p254
    %p256 = scmp.ne.s32.totalorder %s248, %s250
    %p257 = scmp.eq.s32.totalorder %s30, 1
    %p258 = por %p256, %p257
    %p259 = scmp.ne.s32.totalorder %s250, %s251
    %p260 = scmp.eq.s32.totalorder %s30, 0
    %p261 = por %p259, %p260
    %p262 = scmp.ne.s32.totalorder %s250, %s251
    %p263 = scmp.eq.s32.totalorder %s31, 1
    %p264 = por %p262, %p263
    %p266 = scmp.ne.s32.totalorder %s251, %s265
    %p267 = scmp.eq.s32.totalorder %s31, 0
    %p268 = por %p266, %p267
    %s270 = sadd.s32 %s269, 1
    %p273 = scmp.eq.s32.totalorder %s25, 1
    %p274 = scmp.ne.s32.totalorder %s269, %s271
    %p275 = scmp.eq.s32.totalorder %s25, 0
    %p276 = por %p274, %p275
    %p277 = scmp.ne.s32.totalorder %s269, %s271
    %p278 = scmp.eq.s32.totalorder %s30, 1
    %p279 = por %p277, %p278
    %p280 = scmp.ne.s32.totalorder %s271, %s272
    %p281 = scmp.eq.s32.totalorder %s30, 0
    %p282 = por %p280, %p281
    %p283 = scmp.ne.s32.totalorder %s271, %s272
    %p284 = scmp.eq.s32.totalorder %s31, 1
    %p285 = por %p283, %p284
    %p287 = scmp.ne.s32.totalorder %s272, %s286
    %p288 = scmp.eq.s32.totalorder %s31, 0
    %p289 = por %p287, %p288
    %s291 = sadd.s32 %s290, 1
    %p294 = scmp.eq.s32.totalorder %s25, 1
    %p295 = scmp.ne.s32.totalorder %s290, %s292
    %p296 = scmp.eq.s32.totalorder %s25, 0
    %p297 = por %p295, %p296
    %p298 = scmp.ne.s32.totalorder %s290, %s292
    %p299 = scmp.eq.s32.totalorder %s30, 1
    %p300 = por %p298, %p299
    %p301 = scmp.ne.s32.totalorder %s292, %s293
    %p302 = scmp.eq.s32.totalorder %s30, 0
    %p303 = por %p301, %p302
    %p304 = scmp.ne.s32.totalorder %s292, %s293
    %p305 = scmp.eq.s32.totalorder %s31, 1
    %p306 = por %p304, %p305
    %p308 = scmp.ne.s32.totalorder %s293, %s307
    %p309 = scmp.eq.s32.totalorder %s31, 0
    %p310 = por %p308, %p309
    %s312 = sadd.s32 %s311, 1
    %p315 = scmp.eq.s32.totalorder %s25, 1
    %p316 = scmp.ne.s32.totalorder %s311, %s313
    %p317 = scmp.eq.s32.totalorder %s25, 0
    %p318 = por %p316, %p317
    %p319 = scmp.ne.s32.totalorder %s311, %s313
    %p320 = scmp.eq.s32.totalorder %s30, 1
    %p321 = por %p319, %p320
    %p322 = scmp.ne.s32.totalorder %s313, %s314
    %p323 = scmp.eq.s32.totalorder %s30, 0
    %p324 = por %p322, %p323
    %p325 = scmp.ne.s32.totalorder %s313, %s314
    %p326 = scmp.eq.s32.totalorder %s31, 1
    %p327 = por %p325, %p326
    %p329 = scmp.ne.s32.totalorder %s314, %s328
    %p330 = scmp.eq.s32.totalorder %s31, 0
    %p331 = por %p329, %p330
    %s333 = sadd.s32 %s332, 1
    %p336 = scmp.eq.s32.totalorder %s25, 1
    %p337 = scmp.ne.s32.totalorder %s332, %s334
    %p338 = scmp.eq.s32.totalorder %s25, 0
    %p339 = por %p337, %p338
    %p340 = scmp.ne.s32.totalorder %s332, %s334
    %p341 = scmp.eq.s32.totalorder %s30, 1
    %p342 = por %p340, %p341
    %p343 = scmp.ne.s32.totalorder %s334, %s335
    %p344 = scmp.eq.s32.totalorder %s30, 0
    %p345 = por %p343, %p344
    %p346 = scmp.ne.s32.totalorder %s334, %s335
    %p347 = scmp.eq.s32.totalorder %s31, 1
    %p348 = por %p346, %p347
    %p350 = scmp.ne.s32.totalorder %s335, %s349
    %p351 = scmp.eq.s32.totalorder %s31, 0
    %p352 = por %p350, %p351
    %s354 = sadd.s32 %s353, 1
    %p357 = scmp.eq.s32.totalorder %s25, 1
    %p358 = scmp.ne.s32.totalorder %s353, %s355
    %p359 = scmp.eq.s32.totalorder %s25, 0
    %p360 = por %p358, %p359
    %p361 = scmp.ne.s32.totalorder %s353, %s355
    %p362 = scmp.eq.s32.totalorder %s30, 1
    %p363 = por %p361, %p362
    %p364 = scmp.ne.s32.totalorder %s355, %s356
    %p365 = scmp.eq.s32.totalorder %s30, 0
    %p366 = por %p364, %p365
    %p367 = scmp.ne.s32.totalorder %s355, %s356
    %p368 = scmp.eq.s32.totalorder %s31, 1
    %p369 = por %p367, %p368
    %p371 = scmp.ne.s32.totalorder %s356, %s370
    %p372 = scmp.eq.s32.totalorder %s31, 0
    %p373 = por %p371, %p372
    %s375 = sadd.s32 %s374, 1
    %p378 = scmp.eq.s32.totalorder %s25, 1
    %p379 = scmp.ne.s32.totalorder %s374, %s376
    %p380 = scmp.eq.s32.totalorder %s25, 0
    %p381 = por %p379, %p380
    %p382 = scmp.ne.s32.totalorder %s374, %s376
    %p383 = scmp.eq.s32.totalorder %s30, 1
    %p384 = por %p382, %p383
    %p385 = scmp.ne.s32.totalorder %s376, %s377
    %p386 = scmp.eq.s32.totalorder %s30, 0
    %p387 = por %p385, %p386
    %p388 = scmp.ne.s32.totalorder %s376, %s377
    %p389 = scmp.eq.s32.totalorder %s31, 1
    %p390 = por %p388, %p389
    %p392 = scmp.ne.s32.totalorder %s377, %s391
    %p393 = scmp.eq.s32.totalorder %s31, 0
    %p394 = por %p392, %p393
    %s396 = sadd.s32 %s395, 1
    %p399 = scmp.eq.s32.totalorder %s25, 1
    %p400 = scmp.ne.s32.totalorder %s395, %s397
    %p401 = scmp.eq.s32.totalorder %s25, 0
    %p402 = por %p400, %p401
    %p403 = scmp.ne.s32.totalorder %s395, %s397
    %p404 = scmp.eq.s32.totalorder %s30, 1
    %p405 = por %p403, %p404
    %p406 = scmp.ne.s32.totalorder %s397, %s398
    %p407 = scmp.eq.s32.totalorder %s30, 0
    %p408 = por %p406, %p407
    %p409 = scmp.ne.s32.totalorder %s397, %s398
    %p410 = scmp.eq.s32.totalorder %s31, 1
    %p411 = por %p409, %p410
    %p413 = scmp.ne.s32.totalorder %s398, %s412
    %p414 = scmp.eq.s32.totalorder %s31, 0
    %p415 = por %p413, %p414
    %s417 = sadd.s32 %s416, 1
    %p420 = scmp.eq.s32.totalorder %s25, 1
    %p421 = scmp.ne.s32.totalorder %s416, %s418
    %p422 = scmp.eq.s32.totalorder %s25, 0
    %p423 = por %p421, %p422
    %p424 = scmp.ne.s32.totalorder %s416, %s418
    %p425 = scmp.eq.s32.totalorder %s30, 1
    %p426 = por %p424, %p425
    %p427 = scmp.ne.s32.totalorder %s418, %s419
    %p428 = scmp.eq.s32.totalorder %s30, 0
    %p429 = por %p427, %p428
    %p430 = scmp.ne.s32.totalorder %s418, %s419
    %p431 = scmp.eq.s32.totalorder %s31, 1
    %p432 = por %p430, %p431
    %p434 = scmp.ne.s32.totalorder %s419, %s433
    %p435 = scmp.eq.s32.totalorder %s31, 0
    %p436 = por %p434, %p435
    %s437 = ssub.s32 %s25, %s32
    %p438 = scmp.eq.s32.totalorder %s437, 0
    %s440 = sadd.s32 %s439, 1
    %s441 = scalar_select %p438, %s439, %s440
    %p444 = pneg %p438
    %p445 = scmp.eq.s32.totalorder %s25, 1
    %p446 = por %p444, %p445
    %p447 = scmp.ne.s32.totalorder %s439, %s442
    %p448 = scmp.eq.s32.totalorder %s25, 0
    %p449 = por %p447, %p448
    %p450 = scmp.ne.s32.totalorder %s439, %s442
    %p451 = scmp.eq.s32.totalorder %s30, 1
    %p452 = por %p450, %p451
    %p453 = scmp.ne.s32.totalorder %s442, %s443
    %p454 = scmp.eq.s32.totalorder %s30, 0
    %p455 = por %p453, %p454
    %p456 = scmp.ne.s32.totalorder %s442, %s443
    %p457 = scmp.eq.s32.totalorder %s31, 1
    %p458 = por %p456, %p457
    %p460 = scmp.ne.s32.totalorder %s443, %s459
    %p461 = scmp.eq.s32.totalorder %s31, 0
    %p462 = por %p460, %p461
    %p463 = scmp.le.s32.totalorder 1, %s25
    %p464 = scmp.lt.s32.totalorder %s25, 3
    %p465 = pnand %p463, %p464
    %p466 = pneg %p465
    // Predicated region
    $region9: #{_lambda_.5} parent=5 // pred_check
      _
    $region10: #{_lambda_.5} parent=5 // pred_check_branch
      %468 = sbr.rel (%p465) target = $region12
    $region11: #{_lambda_.5} parent=5 // pred_region
      %s469 = ssub.s32 %s25, 1
      // Predicated region
      $region13: #{_lambda_.5} parent=11 // pred_check
        %p470 = pneg %p72
      $region14: #{_lambda_.5} parent=11 // pred_check_branch
        %472 = sbr.rel (%p470) target = $region16
      $region15: #{_lambda_.5} parent=11 // pred_region
        _
      $region16: #{_lambda_.5} parent=11 // pred_fallthru
        _
      // Predicated region
      $region17: #{_lambda_.5} parent=11 // pred_check
        %p473 = pneg %p93
      $region18: #{_lambda_.5} parent=11 // pred_check_branch
        %475 = sbr.rel (%p473) target = $region20
      $region19: #{_lambda_.5} parent=11 // pred_region
        _
      $region20: #{_lambda_.5} parent=11 // pred_fallthru
        _
      // Predicated region
      $region21: #{_lambda_.5} parent=11 // pred_check
        %p476 = pneg %p114
      $region22: #{_lambda_.5} parent=11 // pred_check_branch
        %478 = sbr.rel (%p476) target = $region24
      $region23: #{_lambda_.5} parent=11 // pred_region
        _
      $region24: #{_lambda_.5} parent=11 // pred_fallthru
        _
      // Predicated region
      $region25: #{_lambda_.5} parent=11 // pred_check
        %p479 = pneg %p135
      $region26: #{_lambda_.5} parent=11 // pred_check_branch
        %481 = sbr.rel (%p479) target = $region28
      $region27: #{_lambda_.5} parent=11 // pred_region
        _
      $region28: #{_lambda_.5} parent=11 // pred_fallthru
        _
      // Predicated region
      $region29: #{_lambda_.5} parent=11 // pred_check
        %p482 = pneg %p156
      $region30: #{_lambda_.5} parent=11 // pred_check_branch
        %484 = sbr.rel (%p482) target = $region32
      $region31: #{_lambda_.5} parent=11 // pred_region
        _
      $region32: #{_lambda_.5} parent=11 // pred_fallthru
        _
      // Predicated region
      $region33: #{_lambda_.5} parent=11 // pred_check
        %p485 = pneg %p177
      $region34: #{_lambda_.5} parent=11 // pred_check_branch
        %487 = sbr.rel (%p485) target = $region36
      $region35: #{_lambda_.5} parent=11 // pred_region
        _
      $region36: #{_lambda_.5} parent=11 // pred_fallthru
        _
      // Predicated region
      $region37: #{_lambda_.5} parent=11 // pred_check
        %p488 = pneg %p198
      $region38: #{_lambda_.5} parent=11 // pred_check_branch
        %490 = sbr.rel (%p488) target = $region40
      $region39: #{_lambda_.5} parent=11 // pred_region
        _
      $region40: #{_lambda_.5} parent=11 // pred_fallthru
        _
      // Predicated region
      $region41: #{_lambda_.5} parent=11 // pred_check
        %p491 = pneg %p219
      $region42: #{_lambda_.5} parent=11 // pred_check_branch
        %493 = sbr.rel (%p491) target = $region44
      $region43: #{_lambda_.5} parent=11 // pred_region
        _
      $region44: #{_lambda_.5} parent=11 // pred_fallthru
        _
      // Predicated region
      $region45: #{_lambda_.5} parent=11 // pred_check
        %p494 = pneg %p240
      $region46: #{_lambda_.5} parent=11 // pred_check_branch
        %496 = sbr.rel (%p494) target = $region48
      $region47: #{_lambda_.5} parent=11 // pred_region
        _
      $region48: #{_lambda_.5} parent=11 // pred_fallthru
        _
      // Predicated region
      $region49: #{_lambda_.5} parent=11 // pred_check
        %p497 = pneg %p261
      $region50: #{_lambda_.5} parent=11 // pred_check_branch
        %499 = sbr.rel (%p497) target = $region52
      $region51: #{_lambda_.5} parent=11 // pred_region
        _
      $region52: #{_lambda_.5} parent=11 // pred_fallthru
        _
      // Predicated region
      $region53: #{_lambda_.5} parent=11 // pred_check
        %p500 = pneg %p282
      $region54: #{_lambda_.5} parent=11 // pred_check_branch
        %502 = sbr.rel (%p500) target = $region56
      $region55: #{_lambda_.5} parent=11 // pred_region
        _
      $region56: #{_lambda_.5} parent=11 // pred_fallthru
        _
      // Predicated region
      $region57: #{_lambda_.5} parent=11 // pred_check
        %p503 = pneg %p303
      $region58: #{_lambda_.5} parent=11 // pred_check_branch
        %505 = sbr.rel (%p503) target = $region60
      $region59: #{_lambda_.5} parent=11 // pred_region
        _
      $region60: #{_lambda_.5} parent=11 // pred_fallthru
        _
      // Predicated region
      $region61: #{_lambda_.5} parent=11 // pred_check
        %p506 = pneg %p324
      $region62: #{_lambda_.5} parent=11 // pred_check_branch
        %508 = sbr.rel (%p506) target = $region64
      $region63: #{_lambda_.5} parent=11 // pred_region
        _
      $region64: #{_lambda_.5} parent=11 // pred_fallthru
        _
      // Predicated region
      $region65: #{_lambda_.5} parent=11 // pred_check
        %p509 = pneg %p345
      $region66: #{_lambda_.5} parent=11 // pred_check_branch
        %511 = sbr.rel (%p509) target = $region68
      $region67: #{_lambda_.5} parent=11 // pred_region
        _
      $region68: #{_lambda_.5} parent=11 // pred_fallthru
        _
      // Predicated region
      $region69: #{_lambda_.5} parent=11 // pred_check
        %p512 = pneg %p366
      $region70: #{_lambda_.5} parent=11 // pred_check_branch
        %514 = sbr.rel (%p512) target = $region72
      $region71: #{_lambda_.5} parent=11 // pred_region
        _
      $region72: #{_lambda_.5} parent=11 // pred_fallthru
        _
      // Predicated region
      $region73: #{_lambda_.5} parent=11 // pred_check
        %p515 = pneg %p387
      $region74: #{_lambda_.5} parent=11 // pred_check_branch
        %517 = sbr.rel (%p515) target = $region76
      $region75: #{_lambda_.5} parent=11 // pred_region
        _
      $region76: #{_lambda_.5} parent=11 // pred_fallthru
        _
      // Predicated region
      $region77: #{_lambda_.5} parent=11 // pred_check
        %p518 = pneg %p408
      $region78: #{_lambda_.5} parent=11 // pred_check_branch
        %520 = sbr.rel (%p518) target = $region80
      $region79: #{_lambda_.5} parent=11 // pred_region
        _
      $region80: #{_lambda_.5} parent=11 // pred_fallthru
        _
      // Predicated region
      $region81: #{_lambda_.5} parent=11 // pred_check
        %p521 = pneg %p429
      $region82: #{_lambda_.5} parent=11 // pred_check_branch
        %523 = sbr.rel (%p521) target = $region84
      $region83: #{_lambda_.5} parent=11 // pred_region
        _
      $region84: #{_lambda_.5} parent=11 // pred_fallthru
        _
    $region12: #{_lambda_.5} parent=5 // pred_fallthru
      _
    %p524 = scmp.lt.s32.totalorder %s25, 2
    // Predicated region
    $region85: #{_lambda_.5} parent=5 // pred_check
      %p525 = pneg %p524
    $region86: #{_lambda_.5} parent=5 // pred_check_branch
      %527 = sbr.rel (%p525) target = $region88
    $region87: #{_lambda_.5} parent=5 // pred_region
      // Predicated region
      $region89: #{_lambda_.5} parent=87 // pred_check
        %p528 = pneg %p45
      $region90: #{_lambda_.5} parent=87 // pred_check_branch
        %530 = sbr.rel (%p528) target = $region92
      $region91: #{_lambda_.5} parent=87 // pred_region
        %p531 = scmp.lt.s32.totalorder %s25, 1
        %s532 = scalar_select %p531, %s25, 1
        %s533 = smul.addr %s532, 2
        %s534 = smul.addr %s533, 4
        %s535 = scalar_lea.vmem %s0, %s534
      $region92: #{_lambda_.5} parent=87 // pred_fallthru
        _
    $region88: #{_lambda_.5} parent=5 // pred_fallthru
      _
    %p536 = scmp.le.s32.totalorder 1, %s25
    %p537 = scmp.lt.s32.totalorder %s25, 3
    %p538 = pnand %p536, %p537
    %p539 = pneg %p538
    // Predicated region
    $region93: #{_lambda_.5} parent=5 // pred_check
      _
    $region94: #{_lambda_.5} parent=5 // pred_check_branch
      %541 = sbr.rel (%p538) target = $region96
    $region95: #{_lambda_.5} parent=5 // pred_region
      %s542 = ssub.s32 %s25, 1
      %p543 = scmp.lt.s32.totalorder %s30, 1
      %s544 = scalar_select %p543, %s30, 1
      %s545 = smul.addr %s544, 2
      %s546 = smul.addr %s545, 4
      %s547 = scalar_lea.vmem %s0, %s546
      %p548 = pneg %p51
      %p549 = pneg %p48
      %p550 = pneg %p72
      %p551 = pneg %p69
      %p552 = pneg %p93
      %p553 = pneg %p90
      %p554 = pneg %p114
      %p555 = pneg %p111
      %p556 = pneg %p135
      %p557 = pneg %p132
      %p558 = pneg %p156
      %p559 = pneg %p153
      %p560 = pneg %p177
      %p561 = pneg %p174
      %p562 = pneg %p198
      %p563 = pneg %p195
      %p564 = pneg %p219
      %p565 = pneg %p216
      %p566 = pneg %p240
      %p567 = pneg %p237
      %p568 = pneg %p261
      %p569 = pneg %p258
      %p570 = pneg %p282
      %p571 = pneg %p279
      %p572 = pneg %p303
      %p573 = pneg %p300
      %p574 = pneg %p324
      %p575 = pneg %p321
      %p576 = pneg %p345
      %p577 = pneg %p342
      %p578 = pneg %p366
      %p579 = pneg %p363
      %p580 = pneg %p387
      %p581 = pneg %p384
      %p582 = pneg %p408
      %p583 = pneg %p405
      %p584 = pneg %p429
      %p585 = pneg %p426
      %p586 = pneg %p455
      %p587 = pneg %p452
      %p588 = scmp.lt.s32.totalorder %s30, 1
      %s589 = scalar_select %p588, %s30, 1
      %s590 = smul.addr %s589, 2
      %s591 = smul.addr %s590, 4
      %s592 = scalar_lea.vmem %s19, %s591
      %p593 = scmp.lt.s32.totalorder %s30, 1
      %s594 = scalar_select %p593, %s30, 1
      %s595 = smul.addr %s594, 2
      %s596 = smul.addr %s595, 4
      %s597 = scalar_lea.vmem %s0, %s596
      %p598 = scmp.lt.s32.totalorder %s30, 1
      %s599 = scalar_select %p598, %s30, 1
      %s600 = smul.addr %s599, 2
      %s601 = smul.addr %s600, 4
      %s602 = scalar_lea.vmem %s19, %s601
      %v604 = vld [vmem:[%s597] sm:$0xf]
      %v605 = vld [vmem:[%s597 + $0x4] sm:$0xf]
      %v606 = vunpack.c.l.bf16 %v604
      %v607 = vunpack.c.l.bf16 %v605
      %v608 = vld [vmem:[%s1] sm:$0x1]
      %v609 = vld [vmem:[%s2] sm:$0x1]
      %vm610 = vcmask 523264
      %v611 = vsel %vm610, %v606, 0.0
      %612 = vadd.xlane.f32.xlu0 %v611
      %v613 = vpop.xlane.xlu0 %612
      %v614 = vsel %vm610, %v607, 0.0
      %615 = vadd.xlane.f32.xlu0 %v614
      %v616 = vpop.xlane.xlu0 %615
      %v617 = vrcp.pop 64.0
      %v618 = vmul.f32 %v613, %v617
      %v619 = vmul.f32 %v616, %v617
      %v620 = vsub.f32 %v606, %v618
      %v621 = vsub.f32 %v607, %v619
      %v622 = vmul.f32 %v620, %v620
      %v623 = vmul.f32 %v621, %v621
      %v624 = vsel %vm610, %v622, 0.0
      %625 = vadd.xlane.f32.xlu0 %v624
      %v626 = vpop.xlane.xlu0 %625
      %v627 = vsel %vm610, %v623, 0.0
      %628 = vadd.xlane.f32.xlu0 %v627
      %v629 = vpop.xlane.xlu0 %628
      %v630 = vmul.f32 %v626, %v617
      %v631 = vmul.f32 %v629, %v617
      %v632 = vadd.f32 %v630, 1e-06
      %v633 = vadd.f32 %v631, 1e-06
      %v634 = vrsqrt.pop %v632
      %v635 = vrsqrt.pop %v633
      %v636 = vmul.f32 %v620, %v634
      %v637 = vmul.f32 %v621, %v635
      %v639 = vlaneseq
      %v640 = vshrl.u32 %v639, 7
      %v641 = vsub.s32 0, %v640
      %v642 = vrot.slane %v608, %v641
      %v644 = vmul.f32 %v636, %v642
      %v645 = vmul.f32 %v637, %v642
      %v647 = vlaneseq
      %v648 = vshrl.u32 %v647, 7
      %v649 = vsub.s32 0, %v648
      %v650 = vrot.slane %v609, %v649
      %v652 = vadd.f32 %v644, %v650
      %v653 = vadd.f32 %v645, %v650
      %v654 = vpack.c.bf16 %v653, %v652
      %v655 = vld [vmem:[%s3] sm:$0xf]
      %v656 = vld [vmem:[%s3 + $0x4] sm:$0xf]
      %v657 = vld [vmem:[%s3 + $0x8] sm:$0xf]
      %v658 = vld [vmem:[%s3 + $0xc] sm:$0xf]
      %v659 = vld [vmem:[%s3 + $0x10] sm:$0xf]
      %v660 = vld [vmem:[%s3 + $0x14] sm:$0xf]
      %v661 = vld [vmem:[%s3 + $0x18] sm:$0xf]
      %v662 = vld [vmem:[%s3 + $0x1c] sm:$0xf]
      %v663 = vld [vmem:[%s4] sm:$0x1]
      %v665 = vlaneseq
      %v666 = vshrl.u32 %v665, 7
      %v667 = vsub.s32 0, %v666
      %v668 = vrot.slane %v663, %v667
      %v678 = vunpack.c.l.b16 %v655
      %v679 = vunpack.c.l.b16 %v656
      %v680 = vunpack.c.l.b16 %v657
      %v681 = vunpack.c.l.b16 %v658
      %v682 = vunpack.c.l.b16 %v659
      %v683 = vunpack.c.l.b16 %v660
      %v684 = vunpack.c.l.b16 %v661
      %v685 = vunpack.c.l.b16 %v662
      %v686 = vpack.c.b16 %v679, %v678
      %v687 = vpack.c.b16 %v681, %v680
      %v688 = vpack.c.b16 %v683, %v682
      %v689 = vpack.c.b16 %v685, %v684
      %v695 = vsel %vm610, %v654, 0
      %697 = vmatprep.subr.bf16.mxu0 0
      %698 = vmatpush1.bf16.msra.mxu0 %v686
      %699 = vmatprep.subr.bf16.mxu0 0
      %700 = vmatpush1.bf16.msra.mxu0 %v687
      %701 = vmatprep.subr.bf16.mxu0 0
      %702 = vmatpush1.bf16.msra.mxu0 %v688
      %703 = vmatprep.subr.bf16.mxu0 0
      %704 = vmatpush1.bf16.msra.mxu0 %v689
      %705 = vmatprep.subr.bf16.mxu0 0
      %706 = vmatpush1.bf16.msra.mxu0 0
      %707 = vmatprep.subr.bf16.mxu0 0
      %708 = vmatpush1.bf16.msra.mxu0 0
      %709 = vmatprep.subr.bf16.mxu0 0
      %710 = vmatpush1.bf16.msra.mxu0 0
      %711 = vmatprep.subr.bf16.mxu0 0
      %712 = vmatpush1.bf16.msra.mxu0 0
      %713 = vmatprep.subr.bf16.mxu0 0
      %714 = vmatpush1.bf16.msra.mxu0 0
      %715 = vmatprep.subr.bf16.mxu0 0
      %716 = vmatpush1.bf16.msra.mxu0 0
      %717 = vmatprep.subr.bf16.mxu0 0
      %718 = vmatpush1.bf16.msra.mxu0 0
      %719 = vmatprep.subr.bf16.mxu0 0
      %720 = vmatpush1.bf16.msra.mxu0 0
      %721 = vmatprep.subr.bf16.mxu0 0
      %722 = vmatpush1.bf16.msra.mxu0 0
      %723 = vmatprep.subr.bf16.mxu0 0
      %724 = vmatpush1.bf16.msra.mxu0 0
      %725 = vmatprep.subr.bf16.mxu0 0
      %726 = vmatpush1.bf16.msra.mxu0 0
      %727 = vmatprep.subr.bf16.mxu0 0
      %728 = vmatpush1.bf16.msra.mxu0 0
      %729 = vmatprep.mubr.bf16.mxu0 0
      %730 = vmatmul.mubr.bf16.gmra.mrb[0].mxu0 %v695
      %v731 = vpop.f32.mrb[0].mxu0
      %v732 = vadd.f32 %v668, %v731
      %v733 = vpop.f32.mrb[0].mxu0
      %v734 = vpop.f32.mrb[0].mxu0
      %v735 = vadd.f32 %v668, %v734
      %v736 = vpop.f32.mrb[0].mxu0
      %737 = vdwg.mxu0
      %v738 = vpack.c.bf16 %v735, %v732
      %v739 = vld [vmem:[%s5] sm:$0xf]
      %v740 = vld [vmem:[%s5 + $0x4] sm:$0xf]
      %v741 = vld [vmem:[%s5 + $0x8] sm:$0xf]
      %v742 = vld [vmem:[%s5 + $0xc] sm:$0xf]
      %v743 = vld [vmem:[%s5 + $0x10] sm:$0xf]
      %v744 = vld [vmem:[%s5 + $0x14] sm:$0xf]
      %v745 = vld [vmem:[%s5 + $0x18] sm:$0xf]
      %v746 = vld [vmem:[%s5 + $0x1c] sm:$0xf]
      %v747 = vld [vmem:[%s6] sm:$0x1]
      %v749 = vlaneseq
      %v750 = vshrl.u32 %v749, 7
      %v751 = vsub.s32 0, %v750
      %v752 = vrot.slane %v747, %v751
      %v762 = vunpack.c.l.b16 %v739
      %v763 = vunpack.c.l.b16 %v740
      %v764 = vunpack.c.l.b16 %v741
      %v765 = vunpack.c.l.b16 %v742
      %v766 = vunpack.c.l.b16 %v743
      %v767 = vunpack.c.l.b16 %v744
      %v768 = vunpack.c.l.b16 %v745
      %v769 = vunpack.c.l.b16 %v746
      %v770 = vpack.c.b16 %v763, %v762
      %v771 = vpack.c.b16 %v765, %v764
      %v772 = vpack.c.b16 %v767, %v766
      %v773 = vpack.c.b16 %v769, %v768
      %778 = vmatprep.subr.bf16.mxu0 0
      %779 = vmatpush1.bf16.msra.mxu0 %v770
      %780 = vmatprep.subr.bf16.mxu0 0
      %781 = vmatpush1.bf16.msra.mxu0 %v771
      %782 = vmatprep.subr.bf16.mxu0 0
      %783 = vmatpush1.bf16.msra.mxu0 %v772
      %784 = vmatprep.subr.bf16.mxu0 0
      %785 = vmatpush1.bf16.msra.mxu0 %v773
      %786 = vmatprep.subr.bf16.mxu0 0
      %787 = vmatpush1.bf16.msra.mxu0 0
      %788 = vmatprep.subr.bf16.mxu0 0
      %789 = vmatpush1.bf16.msra.mxu0 0
      %790 = vmatprep.subr.bf16.mxu0 0
      %791 = vmatpush1.bf16.msra.mxu0 0
      %792 = vmatprep.subr.bf16.mxu0 0
      %793 = vmatpush1.bf16.msra.mxu0 0
      %794 = vmatprep.subr.bf16.mxu0 0
      %795 = vmatpush1.bf16.msra.mxu0 0
      %796 = vmatprep.subr.bf16.mxu0 0
      %797 = vmatpush1.bf16.msra.mxu0 0
      %798 = vmatprep.subr.bf16.mxu0 0
      %799 = vmatpush1.bf16.msra.mxu0 0
      %800 = vmatprep.subr.bf16.mxu0 0
      %801 = vmatpush1.bf16.msra.mxu0 0
      %802 = vmatprep.subr.bf16.mxu0 0
      %803 = vmatpush1.bf16.msra.mxu0 0
      %804 = vmatprep.subr.bf16.mxu0 0
      %805 = vmatpush1.bf16.msra.mxu0 0
      %806 = vmatprep.subr.bf16.mxu0 0
      %807 = vmatpush1.bf16.msra.mxu0 0
      %808 = vmatprep.subr.bf16.mxu0 0
      %809 = vmatpush1.bf16.msra.mxu0 0
      %810 = vmatprep.mubr.bf16.mxu0 0
      %811 = vmatmul.mubr.bf16.gmra.mrb[0].mxu0 %v695
      %v812 = vpop.f32.mrb[0].mxu0
      %v813 = vadd.f32 %v752, %v812
      %v814 = vpop.f32.mrb[0].mxu0
      %v815 = vpop.f32.mrb[0].mxu0
      %v816 = vadd.f32 %v752, %v815
      %v817 = vpop.f32.mrb[0].mxu0
      %818 = vdwg.mxu0
      %v819 = vpack.c.bf16 %v816, %v813
      %v820 = vld [vmem:[%s7] sm:$0xf]
      %v821 = vld [vmem:[%s7 + $0x4] sm:$0xf]
      %v822 = vld [vmem:[%s7 + $0x8] sm:$0xf]
      %v823 = vld [vmem:[%s7 + $0xc] sm:$0xf]
      %v824 = vld [vmem:[%s7 + $0x10] sm:$0xf]
      %v825 = vld [vmem:[%s7 + $0x14] sm:$0xf]
      %v826 = vld [vmem:[%s7 + $0x18] sm:$0xf]
      %v827 = vld [vmem:[%s7 + $0x1c] sm:$0xf]
      %v828 = vld [vmem:[%s8] sm:$0x1]
      %v830 = vlaneseq
      %v831 = vshrl.u32 %v830, 7
      %v832 = vsub.s32 0, %v831
      %v833 = vrot.slane %v828, %v832
      %v843 = vunpack.c.l.b16 %v820
      %v844 = vunpack.c.l.b16 %v821
      %v845 = vunpack.c.l.b16 %v822
      %v846 = vunpack.c.l.b16 %v823
      %v847 = vunpack.c.l.b16 %v824
      %v848 = vunpack.c.l.b16 %v825
      %v849 = vunpack.c.l.b16 %v826
      %v850 = vunpack.c.l.b16 %v827
      %v851 = vpack.c.b16 %v844, %v843
      %v852 = vpack.c.b16 %v846, %v845
      %v853 = vpack.c.b16 %v848, %v847
      %v854 = vpack.c.b16 %v850, %v849
      %859 = vmatprep.subr.bf16.mxu0 0
      %860 = vmatpush1.bf16.msra.mxu0 %v851
      %861 = vmatprep.subr.bf16.mxu0 0
      %862 = vmatpush1.bf16.msra.mxu0 %v852
      %863 = vmatprep.subr.bf16.mxu0 0
      %864 = vmatpush1.bf16.msra.mxu0 %v853
      %865 = vmatprep.subr.bf16.mxu0 0
      %866 = vmatpush1.bf16.msra.mxu0 %v854
      %867 = vmatprep.subr.bf16.mxu0 0
      %868 = vmatpush1.bf16.msra.mxu0 0
      %869 = vmatprep.subr.bf16.mxu0 0
      %870 = vmatpush1.bf16.msra.mxu0 0
      %871 = vmatprep.subr.bf16.mxu0 0
      %872 = vmatpush1.bf16.msra.mxu0 0
      %873 = vmatprep.subr.bf16.mxu0 0
      %874 = vmatpush1.bf16.msra.mxu0 0
      %875 = vmatprep.subr.bf16.mxu0 0
      %876 = vmatpush1.bf16.msra.mxu0 0
      %877 = vmatprep.subr.bf16.mxu0 0
      %878 = vmatpush1.bf16.msra.mxu0 0
      %879 = vmatprep.subr.bf16.mxu0 0
      %880 = vmatpush1.bf16.msra.mxu0 0
      %881 = vmatprep.subr.bf16.mxu0 0
      %882 = vmatpush1.bf16.msra.mxu0 0
      %883 = vmatprep.subr.bf16.mxu0 0
      %884 = vmatpush1.bf16.msra.mxu0 0
      %885 = vmatprep.subr.bf16.mxu0 0
      %886 = vmatpush1.bf16.msra.mxu0 0
      %887 = vmatprep.subr.bf16.mxu0 0
      %888 = vmatpush1.bf16.msra.mxu0 0
      %889 = vmatprep.subr.bf16.mxu0 0
      %890 = vmatpush1.bf16.msra.mxu0 0
      %891 = vmatprep.mubr.bf16.mxu0 0
      %892 = vmatmul.mubr.bf16.gmra.mrb[0].mxu0 %v695
      %v893 = vpop.f32.mrb[0].mxu0
      %v894 = vadd.f32 %v833, %v893
      %v895 = vpop.f32.mrb[0].mxu0
      %v896 = vpop.f32.mrb[0].mxu0
      %v897 = vadd.f32 %v833, %v896
      %v898 = vpop.f32.mrb[0].mxu0
      %899 = vdwg.mxu0
      %v900 = vpack.c.bf16 %v897, %v894
      %v901 = vlaneseq
      %v902 = vand.u32 %v901, 127
      %vm903 = vcmp.lt.s32.totalorder %v902, 5
      %vm904 = vcmask 130048
      %v906 = vsel %vm904, %v738, 0
      %v909 = vsel %vm904, %v819, 0
      %911 = vmatprep.subr.bf16.mxu0 0
      %912 = vmatpush1.bf16.xpose.msra.mxu0 %v909
      %913 = vmatprep.subr.bf16.mxu0 0
      %914 = vmatpush1.bf16.xpose.msra.mxu0 0
      %915 = vmatprep.subr.bf16.mxu0 0
      %916 = vmatpush1.bf16.xpose.msra.mxu0 0
      %917 = vmatprep.subr.bf16.mxu0 0
      %918 = vmatpush1.bf16.xpose.msra.mxu0 0
      %919 = vmatprep.subr.bf16.mxu0 0
      %920 = vmatpush1.bf16.xpose.msra.mxu0 0
      %921 = vmatprep.subr.bf16.mxu0 0
      %922 = vmatpush1.bf16.xpose.msra.mxu0 0
      %923 = vmatprep.subr.bf16.mxu0 0
      %924 = vmatpush1.bf16.xpose.msra.mxu0 0
      %925 = vmatprep.subr.bf16.mxu0 0
      %926 = vmatpush1.bf16.xpose.msra.mxu0 0
      %927 = vmatprep.subr.bf16.mxu0 0
      %928 = vmatpush1.bf16.xpose.msra.mxu0 0
      %929 = vmatprep.subr.bf16.mxu0 0
      %930 = vmatpush1.bf16.xpose.msra.mxu0 0
      %931 = vmatprep.subr.bf16.mxu0 0
      %932 = vmatpush1.bf16.xpose.msra.mxu0 0
      %933 = vmatprep.subr.bf16.mxu0 0
      %934 = vmatpush1.bf16.xpose.msra.mxu0 0
      %935 = vmatprep.subr.bf16.mxu0 0
      %936 = vmatpush1.bf16.xpose.msra.mxu0 0
      %937 = vmatprep.subr.bf16.mxu0 0
      %938 = vmatpush1.bf16.xpose.msra.mxu0 0
      %939 = vmatprep.subr.bf16.mxu0 0
      %940 = vmatpush1.bf16.xpose.msra.mxu0 0
      %941 = vmatprep.subr.bf16.mxu0 0
      %942 = vmatpush1.bf16.xpose.msra.mxu0 0
      %943 = vmatprep.mubr.bf16.mxu0 0
      %944 = vmatmul.mubr.bf16.gmra.mrb[0].mxu0 %v906
      %v945 = vpop.f32.mrb[0].mxu0
      %v946 = vadd.f32 0.0, %v945
      %v947 = vpop.f32.mrb[0].mxu0
      %v948 = vpop.f32.mrb[0].mxu0
      %v949 = vadd.f32 0.0, %v948
      %v950 = vpop.f32.mrb[0].mxu0
      %951 = vdwg.mxu0
      %v952 = vsel %vm903, %v946, -1e+30
      %v953 = vsel %vm903, %v949, -1e+30
      %v954 = vsel %vm904, %v952, -inf
      %955 = vmax.xlane.f32.xlu0 %v954
      %v956 = vpop.xlane.xlu0 %955
      %v957 = vsel %vm904, %v953, -inf
      %958 = vmax.xlane.f32.xlu0 %v957
      %v959 = vpop.xlane.xlu0 %958
      %v960 = vsub.f32 %v952, %v956
      %v961 = vsub.f32 %v953, %v959
      %v962 = vmul.f32 %v960, 1.442695
      %v963 = vpow.pop %v962
      %v964 = vmul.f32 %v961, 1.442695
      %v965 = vpow.pop %v964
      %v966 = vsel %vm904, %v963, 0.0
      %967 = vadd.xlane.f32.xlu0 %v966
      %v968 = vpop.xlane.xlu0 %967
      %v969 = vsel %vm904, %v965, 0.0
      %970 = vadd.xlane.f32.xlu0 %v969
      %v971 = vpop.xlane.xlu0 %970
      %v972 = vrcp.pop %v968
      %v973 = vrcp.pop %v971
      %v974 = vmul.f32 %v963, %v972
      %v975 = vmul.f32 %v965, %v973
      %v976 = vpack.c.bf16 %v975, %v974
      %v978 = vsel %vm904, %v976, 0
      %980 = vmatprep.subr.bf16.mxu0 0
      %981 = vmatpush1.bf16.msra.mxu0 %v900
      %982 = vmatprep.subr.bf16.mxu0 0
      %983 = vmatpush1.bf16.msra.mxu0 0
      %984 = vmatprep.subr.bf16.mxu0 0
      %985 = vmatpush1.bf16.msra.mxu0 0
      %986 = vmatprep.subr.bf16.mxu0 0
      %987 = vmatpush1.bf16.msra.mxu0 0
      %988 = vmatprep.subr.bf16.mxu0 0
      %989 = vmatpush1.bf16.msra.mxu0 0
      %990 = vmatprep.subr.bf16.mxu0 0
      %991 = vmatpush1.bf16.msra.mxu0 0
      %992 = vmatprep.subr.bf16.mxu0 0
      %993 = vmatpush1.bf16.msra.mxu0 0
      %994 = vmatprep.subr.bf16.mxu0 0
      %995 = vmatpush1.bf16.msra.mxu0 0
      %996 = vmatprep.subr.bf16.mxu0 0
      %997 = vmatpush1.bf16.msra.mxu0 0
      %998 = vmatprep.subr.bf16.mxu0 0
      %999 = vmatpush1.bf16.msra.mxu0 0
      %1000 = vmatprep.subr.bf16.mxu0 0
      %1001 = vmatpush1.bf16.msra.mxu0 0
      %1002 = vmatprep.subr.bf16.mxu0 0
      %1003 = vmatpush1.bf16.msra.mxu0 0
      %1004 = vmatprep.subr.bf16.mxu0 0
      %1005 = vmatpush1.bf16.msra.mxu0 0
      %1006 = vmatprep.subr.bf16.mxu0 0
      %1007 = vmatpush1.bf16.msra.mxu0 0
      %1008 = vmatprep.subr.bf16.mxu0 0
      %1009 = vmatpush1.bf16.msra.mxu0 0
      %1010 = vmatprep.subr.bf16.mxu0 0
      %1011 = vmatpush1.bf16.msra.mxu0 0
      %1012 = vmatprep.mubr.bf16.mxu0 0
      %1013 = vmatmul.mubr.bf16.gmra.mrb[0].mxu0 %v978
      %v1014 = vpop.f32.mrb[0].mxu0
      %v1015 = vadd.f32 0.0, %v1014
      %v1016 = vpop.f32.mrb[0].mxu0
      %v1017 = vpop.f32.mrb[0].mxu0
      %v1018 = vadd.f32 0.0, %v1017
      %v1019 = vpop.f32.mrb[0].mxu0
      %1020 = vdwg.mxu0
      %v1021 = vpack.c.bf16 %v1018, %v1015
      %1022 = vst.msk [vmem:[#allocation2] sm:$0xff] %vm904, %v1021
      %1024 = vrot.lane.b32.xlu0 %v738, 112
      %v1025 = vpop.permute.xlu0 %1024
      %1027 = vrot.lane.b32.xlu0 %v819, 112
      %v1028 = vpop.permute.xlu0 %1027
      %v1030 = vsel %vm904, %v1025, 0
      %v1033 = vsel %vm904, %v1028, 0
      %1035 = vmatprep.subr.bf16.mxu0 0
      %1036 = vmatpush1.bf16.xpose.msra.mxu0 %v1033
      %1037 = vmatprep.subr.bf16.mxu0 0
      %1038 = vmatpush1.bf16.xpose.msra.mxu0 0
      %1039 = vmatprep.subr.bf16.mxu0 0
      %1040 = vmatpush1.bf16.xpose.msra.mxu0 0
      %1041 = vmatprep.subr.bf16.mxu0 0
      %1042 = vmatpush1.bf16.xpose.msra.mxu0 0
      %1043 = vmatprep.subr.bf16.mxu0 0
      %1044 = vmatpush1.bf16.xpose.msra.mxu0 0
      %1045 = vmatprep.subr.bf16.mxu0 0
      %1046 = vmatpush1.bf16.xpose.msra.mxu0 0
      %1047 = vmatprep.subr.bf16.mxu0 0
      %1048 = vmatpush1.bf16.xpose.msra.mxu0 0
      %1049 = vmatprep.subr.bf16.mxu0 0
      %1050 = vmatpush1.bf16.xpose.msra.mxu0 0
      %1051 = vmatprep.subr.bf16.mxu0 0
      %1052 = vmatpush1.bf16.xpose.msra.mxu0 0
      %1053 = vmatprep.subr.bf16.mxu0 0
      %1054 = vmatpush1.bf16.xpose.msra.mxu0 0
      %1055 = vmatprep.subr.bf16.mxu0 0
      %1056 = vmatpush1.bf16.xpose.msra.mxu0 0
      %1057 = vmatprep.subr.bf16.mxu0 0
      %1058 = vmatpush1.bf16.xpose.msra.mxu0 0
      %1059 = vmatprep.subr.bf16.mxu0 0
      %1060 = vmatpush1.bf16.xpose.msra.mxu0 0
      %1061 = vmatprep.subr.bf16.mxu0 0
      %1062 = vmatpush1.bf16.xpose.msra.mxu0 0
      %1063 = vmatprep.subr.bf16.mxu0 0
      %1064 = vmatpush1.bf16.xpose.msra.mxu0 0
      %1065 = vmatprep.subr.bf16.mxu0 0
      %1066 = vmatpush1.bf16.xpose.msra.mxu0 0
      %1067 = vmatprep.mubr.bf16.mxu0 0
      %1068 = vmatmul.mubr.bf16.gmra.mrb[0].mxu0 %v1030
      %v1069 = vpop.f32.mrb[0].mxu0
      %v1070 = vadd.f32 0.0, %v1069
      %v1071 = vpop.f32.mrb[0].mxu0
      %v1072 = vpop.f32.mrb[0].mxu0
      %v1073 = vadd.f32 0.0, %v1072
      %v1074 = vpop.f32.mrb[0].mxu0
      %1075 = vdwg.mxu0
      %v1076 = vsel %vm903, %v1070, -1e+30
      %v1077 = vsel %vm903, %v1073, -1e+30
      %v1078 = vsel %vm904, %v1076, -inf
      %1079 = vmax.xlane.f32.xlu0 %v1078
      %v1080 = vpop.xlane.xlu0 %1079
      %v1081 = vsel %vm904, %v1077, -inf
      %1082 = vmax.xlane.f32.xlu0 %v1081
      %v1083 = vpop.xlane.xlu0 %1082
      %v1084 = vsub.f32 %v1076, %v1080
      %v1085 = vsub.f32 %v1077, %v1083
      %v1086 = vmul.f32 %v1084, 1.442695
      %v1087 = vpow.pop %v1086
      %v1088 = vmul.f32 %v1085, 1.442695
      %v1089 = vpow.pop %v1088
      %v1090 = vsel %vm904, %v1087, 0.0
      %1091 = vadd.xlane.f32.xlu0 %v1090
      %v1092 = vpop.xlane.xlu0 %1091
      %v1093 = vsel %vm904, %v1089, 0.0
      %1094 = vadd.xlane.f32.xlu0 %v1093
      %v1095 = vpop.xlane.xlu0 %1094
      %v1096 = vrcp.pop %v1092
      %v1097 = vrcp.pop %v1095
      %v1098 = vmul.f32 %v1087, %v1096
      %v1099 = vmul.f32 %v1089, %v1097
      %v1100 = vpack.c.bf16 %v1099, %v1098
      %1102 = vrot.lane.b32.xlu0 %v900, 112
      %v1103 = vpop.permute.xlu0 %1102
      %v1106 = vsel %vm904, %v1100, 0
      %1108 = vmatprep.subr.bf16.mxu0 0
      %1109 = vmatpush1.bf16.msra.mxu0 %v1103
      %1110 = vmatprep.subr.bf16.mxu0 0
      %1111 = vmatpush1.bf16.msra.mxu0 0
      %1112 = vmatprep.subr.bf16.mxu0 0
      %1113 = vmatpush1.bf16.msra.mxu0 0
      %1114 = vmatprep.subr.bf16.mxu0 0
      %1115 = vmatpush1.bf16.msra.mxu0 0
      %1116 = vmatprep.subr.bf16.mxu0 0
      %1117 = vmatpush1.bf16.msra.mxu0 0
      %1118 = vmatprep.subr.bf16.mxu0 0
      %1119 = vmatpush1.bf16.msra.mxu0 0
      %1120 = vmatprep.subr.bf16.mxu0 0
      %1121 = vmatpush1.bf16.msra.mxu0 0
      %1122 = vmatprep.subr.bf16.mxu0 0
      %1123 = vmatpush1.bf16.msra.mxu0 0
      %1124 = vmatprep.subr.bf16.mxu0 0
      %1125 = vmatpush1.bf16.msra.mxu0 0
      %1126 = vmatprep.subr.bf16.mxu0 0
      %1127 = vmatpush1.bf16.msra.mxu0 0
      %1128 = vmatprep.subr.bf16.mxu0 0
      %1129 = vmatpush1.bf16.msra.mxu0 0
      %1130 = vmatprep.subr.bf16.mxu0 0
      %1131 = vmatpush1.bf16.msra.mxu0 0
      %1132 = vmatprep.subr.bf16.mxu0 0
      %1133 = vmatpush1.bf16.msra.mxu0 0
      %1134 = vmatprep.subr.bf16.mxu0 0
      %1135 = vmatpush1.bf16.msra.mxu0 0
      %1136 = vmatprep.subr.bf16.mxu0 0
      %1137 = vmatpush1.bf16.msra.mxu0 0
      %1138 = vmatprep.subr.bf16.mxu0 0
      %1139 = vmatpush1.bf16.msra.mxu0 0
      %1140 = vmatprep.mubr.bf16.mxu0 0
      %1141 = vmatmul.mubr.bf16.gmra.mrb[0].mxu0 %v1106
      %v1142 = vpop.f32.mrb[0].mxu0
      %v1143 = vadd.f32 0.0, %v1142
      %v1144 = vpop.f32.mrb[0].mxu0
      %v1145 = vpop.f32.mrb[0].mxu0
      %v1146 = vadd.f32 0.0, %v1145
      %v1147 = vpop.f32.mrb[0].mxu0
      %1148 = vdwg.mxu0
      %v1149 = vpack.c.bf16 %v1146, %v1143
      %1151 = vrot.lane.b32.xlu0 %v1149, 16
      %v1152 = vpop.permute.xlu0 %1151
      %vm1154 = vcmask 261248
      %1155 = vst.msk [vmem:[#allocation2] sm:$0xff] %vm1154, %v1152
      %1156 = vrot.lane.b32.xlu0 %v738, 96
      %v1157 = vpop.permute.xlu0 %1156
      %1158 = vrot.lane.b32.xlu0 %v819, 96
      %v1159 = vpop.permute.xlu0 %1158
      %v1161 = vsel %vm904, %v1157, 0
      %v1164 = vsel %vm904, %v1159, 0
      %1166 = vmatprep.subr.bf16.mxu0 0
      %1167 = vmatpush1.bf16.xpose.msra.mxu0 %v1164
      %1168 = vmatprep.subr.bf16.mxu0 0
      %1169 = vmatpush1.bf16.xpose.msra.mxu0 0
      %1170 = vmatprep.subr.bf16.mxu0 0
      %1171 = vmatpush1.bf16.xpose.msra.mxu0 0
      %1172 = vmatprep.subr.bf16.mxu0 0
      %1173 = vmatpush1.bf16.xpose.msra.mxu0 0
      %1174 = vmatprep.subr.bf16.mxu0 0
      %1175 = vmatpush1.bf16.xpose.msra.mxu0 0
      %1176 = vmatprep.subr.bf16.mxu0 0
      %1177 = vmatpush1.bf16.xpose.msra.mxu0 0
      %1178 = vmatprep.subr.bf16.mxu0 0
      %1179 = vmatpush1.bf16.xpose.msra.mxu0 0
      %1180 = vmatprep.subr.bf16.mxu0 0
      %1181 = vmatpush1.bf16.xpose.msra.mxu0 0
      %1182 = vmatprep.subr.bf16.mxu0 0
      %1183 = vmatpush1.bf16.xpose.msra.mxu0 0
      %1184 = vmatprep.subr.bf16.mxu0 0
      %1185 = vmatpush1.bf16.xpose.msra.mxu0 0
      %1186 = vmatprep.subr.bf16.mxu0 0
      %1187 = vmatpush1.bf16.xpose.msra.mxu0 0
      %1188 = vmatprep.subr.bf16.mxu0 0
      %1189 = vmatpush1.bf16.xpose.msra.mxu0 0
      %1190 = vmatprep.subr.bf16.mxu0 0
      %1191 = vmatpush1.bf16.xpose.msra.mxu0 0
      %1192 = vmatprep.subr.bf16.mxu0 0
      %1193 = vmatpush1.bf16.xpose.msra.mxu0 0
      %1194 = vmatprep.subr.bf16.mxu0 0
      %1195 = vmatpush1.bf16.xpose.msra.mxu0 0
      %1196 = vmatprep.subr.bf16.mxu0 0
      %1197 = vmatpush1.bf16.xpose.msra.mxu0 0
      %1198 = vmatprep.mubr.bf16.mxu0 0
      %1199 = vmatmul.mubr.bf16.gmra.mrb[0].mxu0 %v1161
      %v1200 = vpop.f32.mrb[0].mxu0
      %v1201 = vadd.f32 0.0, %v1200
      %v1202 = vpop.f32.mrb[0].mxu0
      %v1203 = vpop.f32.mrb[0].mxu0
      %v1204 = vadd.f32 0.0, %v1203
      %v1205 = vpop.f32.mrb[0].mxu0
      %1206 = vdwg.mxu0
      %v1207 = vsel %vm903, %v1201, -1e+30
      %v1208 = vsel %vm903, %v1204, -1e+30
      %v1209 = vsel %vm904, %v1207, -inf
      %1210 = vmax.xlane.f32.xlu0 %v1209
      %v1211 = vpop.xlane.xlu0 %1210
      %v1212 = vsel %vm904, %v1208, -inf
      %1213 = vmax.xlane.f32.xlu0 %v1212
      %v1214 = vpop.xlane.xlu0 %1213
      %v1215 = vsub.f32 %v1207, %v1211
      %v1216 = vsub.f32 %v1208, %v1214
      %v1217 = vmul.f32 %v1215, 1.442695
      %v1218 = vpow.pop %v1217
      %v1219 = vmul.f32 %v1216, 1.442695
      %v1220 = vpow.pop %v1219
      %v1221 = vsel %vm904, %v1218, 0.0
      %1222 = vadd.xlane.f32.xlu0 %v1221
      %v1223 = vpop.xlane.xlu0 %1222
      %v1224 = vsel %vm904, %v1220, 0.0
      %1225 = vadd.xlane.f32.xlu0 %v1224
      %v1226 = vpop.xlane.xlu0 %1225
      %v1227 = vrcp.pop %v1223
      %v1228 = vrcp.pop %v1226
      %v1229 = vmul.f32 %v1218, %v1227
      %v1230 = vmul.f32 %v1220, %v1228
      %v1231 = vpack.c.bf16 %v1230, %v1229
      %1232 = vrot.lane.b32.xlu0 %v900, 96
      %v1233 = vpop.permute.xlu0 %1232
      %v1236 = vsel %vm904, %v1231, 0
      %1238 = vmatprep.subr.bf16.mxu0 0
      %1239 = vmatpush1.bf16.msra.mxu0 %v1233
      %1240 = vmatprep.subr.bf16.mxu0 0
      %1241 = vmatpush1.bf16.msra.mxu0 0
      %1242 = vmatprep.subr.bf16.mxu0 0
      %1243 = vmatpush1.bf16.msra.mxu0 0
      %1244 = vmatprep.subr.bf16.mxu0 0
      %1245 = vmatpush1.bf16.msra.mxu0 0
      %1246 = vmatprep.subr.bf16.mxu0 0
      %1247 = vmatpush1.bf16.msra.mxu0 0
      %1248 = vmatprep.subr.bf16.mxu0 0
      %1249 = vmatpush1.bf16.msra.mxu0 0
      %1250 = vmatprep.subr.bf16.mxu0 0
      %1251 = vmatpush1.bf16.msra.mxu0 0
      %1252 = vmatprep.subr.bf16.mxu0 0
      %1253 = vmatpush1.bf16.msra.mxu0 0
      %1254 = vmatprep.subr.bf16.mxu0 0
      %1255 = vmatpush1.bf16.msra.mxu0 0
      %1256 = vmatprep.subr.bf16.mxu0 0
      %1257 = vmatpush1.bf16.msra.mxu0 0
      %1258 = vmatprep.subr.bf16.mxu0 0
      %1259 = vmatpush1.bf16.msra.mxu0 0
      %1260 = vmatprep.subr.bf16.mxu0 0
      %1261 = vmatpush1.bf16.msra.mxu0 0
      %1262 = vmatprep.subr.bf16.mxu0 0
      %1263 = vmatpush1.bf16.msra.mxu0 0
      %1264 = vmatprep.subr.bf16.mxu0 0
      %1265 = vmatpush1.bf16.msra.mxu0 0
      %1266 = vmatprep.subr.bf16.mxu0 0
      %1267 = vmatpush1.bf16.msra.mxu0 0
      %1268 = vmatprep.subr.bf16.mxu0 0
      %1269 = vmatpush1.bf16.msra.mxu0 0
      %1270 = vmatprep.mubr.bf16.mxu0 0
      %1271 = vmatmul.mubr.bf16.gmra.mrb[0].mxu0 %v1236
      %v1272 = vpop.f32.mrb[0].mxu0
      %v1273 = vadd.f32 0.0, %v1272
      %v1274 = vpop.f32.mrb[0].mxu0
      %v1275 = vpop.f32.mrb[0].mxu0
      %v1276 = vadd.f32 0.0, %v1275
      %v1277 = vpop.f32.mrb[0].mxu0
      %1278 = vdwg.mxu0
      %v1279 = vpack.c.bf16 %v1276, %v1273
      %1281 = vrot.lane.b32.xlu0 %v1279, 32
      %v1282 = vpop.permute.xlu0 %1281
      %vm1284 = vcmask 392448
      %1285 = vst.msk [vmem:[#allocation2] sm:$0xff] %vm1284, %v1282
      %1286 = vrot.lane.b32.xlu0 %v738, 80
      %v1287 = vpop.permute.xlu0 %1286
      %1288 = vrot.lane.b32.xlu0 %v819, 80
      %v1289 = vpop.permute.xlu0 %1288
      %v1291 = vsel %vm904, %v1287, 0
      %v1294 = vsel %vm904, %v1289, 0
      %1296 = vmatprep.subr.bf16.mxu0 0
      %1297 = vmatpush1.bf16.xpose.msra.mxu0 %v1294
      %1298 = vmatprep.subr.bf16.mxu0 0
      %1299 = vmatpush1.bf16.xpose.msra.mxu0 0
      %1300 = vmatprep.subr.bf16.mxu0 0
      %1301 = vmatpush1.bf16.xpose.msra.mxu0 0
      %1302 = vmatprep.subr.bf16.mxu0 0
      %1303 = vmatpush1.bf16.xpose.msra.mxu0 0
      %1304 = vmatprep.subr.bf16.mxu0 0
      %1305 = vmatpush1.bf16.xpose.msra.mxu0 0
      %1306 = vmatprep.subr.bf16.mxu0 0
      %1307 = vmatpush1.bf16.xpose.msra.mxu0 0
      %1308 = vmatprep.subr.bf16.mxu0 0
      %1309 = vmatpush1.bf16.xpose.msra.mxu0 0
      %1310 = vmatprep.subr.bf16.mxu0 0
      %1311 = vmatpush1.bf16.xpose.msra.mxu0 0
      %1312 = vmatprep.subr.bf16.mxu0 0
      %1313 = vmatpush1.bf16.xpose.msra.mxu0 0
      %1314 = vmatprep.subr.bf16.mxu0 0
      %1315 = vmatpush1.bf16.xpose.msra.mxu0 0
      %1316 = vmatprep.subr.bf16.mxu0 0
      %1317 = vmatpush1.bf16.xpose.msra.mxu0 0
      %1318 = vmatprep.subr.bf16.mxu0 0
      %1319 = vmatpush1.bf16.xpose.msra.mxu0 0
      %1320 = vmatprep.subr.bf16.mxu0 0
      %1321 = vmatpush1.bf16.xpose.msra.mxu0 0
      %1322 = vmatprep.subr.bf16.mxu0 0
      %1323 = vmatpush1.bf16.xpose.msra.mxu0 0
      %1324 = vmatprep.subr.bf16.mxu0 0
      %1325 = vmatpush1.bf16.xpose.msra.mxu0 0
      %1326 = vmatprep.subr.bf16.mxu0 0
      %1327 = vmatpush1.bf16.xpose.msra.mxu0 0
      %1328 = vmatprep.mubr.bf16.mxu0 0
      %1329 = vmatmul.mubr.bf16.gmra.mrb[0].mxu0 %v1291
      %v1330 = vpop.f32.mrb[0].mxu0
      %v1331 = vadd.f32 0.0, %v1330
      %v1332 = vpop.f32.mrb[0].mxu0
      %v1333 = vpop.f32.mrb[0].mxu0
      %v1334 = vadd.f32 0.0, %v1333
      %v1335 = vpop.f32.mrb[0].mxu0
      %1336 = vdwg.mxu0
      %v1337 = vsel %vm903, %v1331, -1e+30
      %v1338 = vsel %vm903, %v1334, -1e+30
      %v1339 = vsel %vm904, %v1337, -inf
      %1340 = vmax.xlane.f32.xlu0 %v1339
      %v1341 = vpop.xlane.xlu0 %1340
      %v1342 = vsel %vm904, %v1338, -inf
      %1343 = vmax.xlane.f32.xlu0 %v1342
      %v1344 = vpop.xlane.xlu0 %1343
      %v1345 = vsub.f32 %v1337, %v1341
      %v1346 = vsub.f32 %v1338, %v1344
      %v1347 = vmul.f32 %v1345, 1.442695
      %v1348 = vpow.pop %v1347
      %v1349 = vmul.f32 %v1346, 1.442695
      %v1350 = vpow.pop %v1349
      %v1351 = vsel %vm904, %v1348, 0.0
      %1352 = vadd.xlane.f32.xlu0 %v1351
      %v1353 = vpop.xlane.xlu0 %1352
      %v1354 = vsel %vm904, %v1350, 0.0
      %1355 = vadd.xlane.f32.xlu0 %v1354
      %v1356 = vpop.xlane.xlu0 %1355
      %v1357 = vrcp.pop %v1353
      %v1358 = vrcp.pop %v1356
      %v1359 = vmul.f32 %v1348, %v1357
      %v1360 = vmul.f32 %v1350, %v1358
      %v1361 = vpack.c.bf16 %v1360, %v1359
      %1362 = vrot.lane.b32.xlu0 %v900, 80
      %v1363 = vpop.permute.xlu0 %1362
      %v1366 = vsel %vm904, %v1361, 0
      %1368 = vmatprep.subr.bf16.mxu0 0
      %1369 = vmatpush1.bf16.msra.mxu0 %v1363
      %1370 = vmatprep.subr.bf16.mxu0 0
      %1371 = vmatpush1.bf16.msra.mxu0 0
      %1372 = vmatprep.subr.bf16.mxu0 0
      %1373 = vmatpush1.bf16.msra.mxu0 0
      %1374 = vmatprep.subr.bf16.mxu0 0
      %1375 = vmatpush1.bf16.msra.mxu0 0
      %1376 = vmatprep.subr.bf16.mxu0 0
      %1377 = vmatpush1.bf16.msra.mxu0 0
      %1378 = vmatprep.subr.bf16.mxu0 0
      %1379 = vmatpush1.bf16.msra.mxu0 0
      %1380 = vmatprep.subr.bf16.mxu0 0
      %1381 = vmatpush1.bf16.msra.mxu0 0
      %1382 = vmatprep.subr.bf16.mxu0 0
      %1383 = vmatpush1.bf16.msra.mxu0 0
      %1384 = vmatprep.subr.bf16.mxu0 0
      %1385 = vmatpush1.bf16.msra.mxu0 0
      %1386 = vmatprep.subr.bf16.mxu0 0
      %1387 = vmatpush1.bf16.msra.mxu0 0
      %1388 = vmatprep.subr.bf16.mxu0 0
      %1389 = vmatpush1.bf16.msra.mxu0 0
      %1390 = vmatprep.subr.bf16.mxu0 0
      %1391 = vmatpush1.bf16.msra.mxu0 0
      %1392 = vmatprep.subr.bf16.mxu0 0
      %1393 = vmatpush1.bf16.msra.mxu0 0
      %1394 = vmatprep.subr.bf16.mxu0 0
      %1395 = vmatpush1.bf16.msra.mxu0 0
      %1396 = vmatprep.subr.bf16.mxu0 0
      %1397 = vmatpush1.bf16.msra.mxu0 0
      %1398 = vmatprep.subr.bf16.mxu0 0
      %1399 = vmatpush1.bf16.msra.mxu0 0
      %1400 = vmatprep.mubr.bf16.mxu0 0
      %1401 = vmatmul.mubr.bf16.gmra.mrb[0].mxu0 %v1366
      %v1402 = vpop.f32.mrb[0].mxu0
      %v1403 = vadd.f32 0.0, %v1402
      %v1404 = vpop.f32.mrb[0].mxu0
      %v1405 = vpop.f32.mrb[0].mxu0
      %v1406 = vadd.f32 0.0, %v1405
      %v1407 = vpop.f32.mrb[0].mxu0
      %1408 = vdwg.mxu0
      %v1409 = vpack.c.bf16 %v1406, %v1403
      %1411 = vrot.lane.b32.xlu0 %v1409, 48
      %v1412 = vpop.permute.xlu0 %1411
      %vm1414 = vcmask 523648
      %1415 = vst.msk [vmem:[#allocation2] sm:$0xff] %vm1414, %v1412
      %v1416 = vld [vmem:[#allocation2] sm:$0xff]
      %v1417 = vld [vmem:[%s9] sm:$0xf]
      %v1418 = vld [vmem:[%s9 + $0x4] sm:$0xf]
      %v1419 = vld [vmem:[%s9 + $0x8] sm:$0xf]
      %v1420 = vld [vmem:[%s9 + $0xc] sm:$0xf]
      %v1421 = vld [vmem:[%s9 + $0x10] sm:$0xf]
      %v1422 = vld [vmem:[%s9 + $0x14] sm:$0xf]
      %v1423 = vld [vmem:[%s9 + $0x18] sm:$0xf]
      %v1424 = vld [vmem:[%s9 + $0x1c] sm:$0xf]
      %v1425 = vld [vmem:[%s10] sm:$0x1]
      %v1427 = vlaneseq
      %v1428 = vshrl.u32 %v1427, 7
      %v1429 = vsub.s32 0, %v1428
      %v1430 = vrot.slane %v1425, %v1429
      %v1440 = vunpack.c.l.b16 %v1417
      %v1441 = vunpack.c.l.b16 %v1418
      %v1442 = vunpack.c.l.b16 %v1419
      %v1443 = vunpack.c.l.b16 %v1420
      %v1444 = vunpack.c.l.b16 %v1421
      %v1445 = vunpack.c.l.b16 %v1422
      %v1446 = vunpack.c.l.b16 %v1423
      %v1447 = vunpack.c.l.b16 %v1424
      %v1448 = vpack.c.b16 %v1441, %v1440
      %v1449 = vpack.c.b16 %v1443, %v1442
      %v1450 = vpack.c.b16 %v1445, %v1444
      %v1451 = vpack.c.b16 %v1447, %v1446
      %v1457 = vsel %vm610, %v1416, 0
      %1459 = vmatprep.subr.bf16.mxu0 0
      %1460 = vmatpush1.bf16.msra.mxu0 %v1448
      %1461 = vmatprep.subr.bf16.mxu0 0
      %1462 = vmatpush1.bf16.msra.mxu0 %v1449
      %1463 = vmatprep.subr.bf16.mxu0 0
      %1464 = vmatpush1.bf16.msra.mxu0 %v1450
      %1465 = vmatprep.subr.bf16.mxu0 0
      %1466 = vmatpush1.bf16.msra.mxu0 %v1451
      %1467 = vmatprep.subr.bf16.mxu0 0
      %1468 = vmatpush1.bf16.msra.mxu0 0
      %1469 = vmatprep.subr.bf16.mxu0 0
      %1470 = vmatpush1.bf16.msra.mxu0 0
      %1471 = vmatprep.subr.bf16.mxu0 0
      %1472 = vmatpush1.bf16.msra.mxu0 0
      %1473 = vmatprep.subr.bf16.mxu0 0
      %1474 = vmatpush1.bf16.msra.mxu0 0
      %1475 = vmatprep.subr.bf16.mxu0 0
      %1476 = vmatpush1.bf16.msra.mxu0 0
      %1477 = vmatprep.subr.bf16.mxu0 0
      %1478 = vmatpush1.bf16.msra.mxu0 0
      %1479 = vmatprep.subr.bf16.mxu0 0
      %1480 = vmatpush1.bf16.msra.mxu0 0
      %1481 = vmatprep.subr.bf16.mxu0 0
      %1482 = vmatpush1.bf16.msra.mxu0 0
      %1483 = vmatprep.subr.bf16.mxu0 0
      %1484 = vmatpush1.bf16.msra.mxu0 0
      %1485 = vmatprep.subr.bf16.mxu0 0
      %1486 = vmatpush1.bf16.msra.mxu0 0
      %1487 = vmatprep.subr.bf16.mxu0 0
      %1488 = vmatpush1.bf16.msra.mxu0 0
      %1489 = vmatprep.subr.bf16.mxu0 0
      %1490 = vmatpush1.bf16.msra.mxu0 0
      %1491 = vmatprep.mubr.bf16.mxu0 0
      %1492 = vmatmul.mubr.bf16.gmra.mrb[0].mxu0 %v1457
      %v1493 = vpop.f32.mrb[0].mxu0
      %v1494 = vadd.f32 %v1430, %v1493
      %v1495 = vpop.f32.mrb[0].mxu0
      %v1496 = vpop.f32.mrb[0].mxu0
      %v1497 = vadd.f32 %v1430, %v1496
      %v1498 = vpop.f32.mrb[0].mxu0
      %1499 = vdwg.mxu0
      %v1500 = vadd.f32 %v606, %v1494
      %v1501 = vadd.f32 %v607, %v1497
      %v1502 = vld [vmem:[%s11] sm:$0x1]
      %v1503 = vld [vmem:[%s12] sm:$0x1]
      %v1504 = vsel %vm610, %v1500, 0.0
      %1505 = vadd.xlane.f32.xlu0 %v1504
      %v1506 = vpop.xlane.xlu0 %1505
      %v1507 = vsel %vm610, %v1501, 0.0
      %1508 = vadd.xlane.f32.xlu0 %v1507
      %v1509 = vpop.xlane.xlu0 %1508
      %v1510 = vmul.f32 %v1506, %v617
      %v1511 = vmul.f32 %v1509, %v617
      %v1512 = vsub.f32 %v1500, %v1510
      %v1513 = vsub.f32 %v1501, %v1511
      %v1514 = vmul.f32 %v1512, %v1512
      %v1515 = vmul.f32 %v1513, %v1513
      %v1516 = vsel %vm610, %v1514, 0.0
      %1517 = vadd.xlane.f32.xlu0 %v1516
      %v1518 = vpop.xlane.xlu0 %1517
      %v1519 = vsel %vm610, %v1515, 0.0
      %1520 = vadd.xlane.f32.xlu0 %v1519
      %v1521 = vpop.xlane.xlu0 %1520
      %v1522 = vmul.f32 %v1518, %v617
      %v1523 = vmul.f32 %v1521, %v617
      %v1524 = vadd.f32 %v1522, 1e-06
      %v1525 = vadd.f32 %v1523, 1e-06
      %v1526 = vrsqrt.pop %v1524
      %v1527 = vrsqrt.pop %v1525
      %v1528 = vmul.f32 %v1512, %v1526
      %v1529 = vmul.f32 %v1513, %v1527
      %v1531 = vlaneseq
      %v1532 = vshrl.u32 %v1531, 7
      %v1533 = vsub.s32 0, %v1532
      %v1534 = vrot.slane %v1502, %v1533
      %v1536 = vmul.f32 %v1528, %v1534
      %v1537 = vmul.f32 %v1529, %v1534
      %v1539 = vlaneseq
      %v1540 = vshrl.u32 %v1539, 7
      %v1541 = vsub.s32 0, %v1540
      %v1542 = vrot.slane %v1503, %v1541
      %v1544 = vadd.f32 %v1536, %v1542
      %v1545 = vadd.f32 %v1537, %v1542
      %v1546 = vpack.c.bf16 %v1545, %v1544
      %v1547 = vld [vmem:[%s13] sm:$0xff]
      %v1548 = vld [vmem:[%s13 + $0x8] sm:$0xff]
      %v1549 = vld [vmem:[%s13 + $0x10] sm:$0xff]
      %v1550 = vld [vmem:[%s13 + $0x18] sm:$0xff]
      %v1551 = vld [vmem:[%s13 + $0x20] sm:$0xff]
      %v1552 = vld [vmem:[%s13 + $0x28] sm:$0xff]
      %v1553 = vld [vmem:[%s13 + $0x30] sm:$0xff]
      %v1554 = vld [vmem:[%s13 + $0x38] sm:$0xff]
      %v1555 = vld [vmem:[%s14] sm:$0x3]
      %v1557 = vlaneseq
      %v1558 = vshrl.u32 %v1557, 7
      %v1559 = vsub.s32 0, %v1558
      %v1560 = vrot.slane %v1555, %v1559
      %v1561 = vlaneseq
      %v1562 = vshrl.u32 %v1561, 7
      %v1563 = vsub.s32 1, %v1562
      %v1564 = vrot.slane %v1555, %v1563
      %v1575 = vunpack.c.l.b16 %v1547
      %v1576 = vunpack.c.h.b16 %v1547
      %v1577 = vunpack.c.l.b16 %v1548
      %v1578 = vunpack.c.h.b16 %v1548
      %v1579 = vunpack.c.l.b16 %v1549
      %v1580 = vunpack.c.h.b16 %v1549
      %v1581 = vunpack.c.l.b16 %v1550
      %v1582 = vunpack.c.h.b16 %v1550
      %v1583 = vunpack.c.l.b16 %v1551
      %v1584 = vunpack.c.h.b16 %v1551
      %v1585 = vunpack.c.l.b16 %v1552
      %v1586 = vunpack.c.h.b16 %v1552
      %v1587 = vunpack.c.l.b16 %v1553
      %v1588 = vunpack.c.h.b16 %v1553
      %v1589 = vunpack.c.l.b16 %v1554
      %v1590 = vunpack.c.h.b16 %v1554
      %v1591 = vpack.c.b16 %v1577, %v1575
      %v1592 = vpack.c.b16 %v1578, %v1576
      %v1593 = vpack.c.b16 %v1581, %v1579
      %v1594 = vpack.c.b16 %v1582, %v1580
      %v1595 = vpack.c.b16 %v1585, %v1583
      %v1596 = vpack.c.b16 %v1586, %v1584
      %v1597 = vpack.c.b16 %v1589, %v1587
      %v1598 = vpack.c.b16 %v1590, %v1588
      %v1608 = vsel %vm610, %v1546, 0
      %1610 = vmatprep.subr.bf16.mxu0 %v1592
      %1611 = vmatpush1.bf16.msra.mxu0 %v1591
      %1612 = vmatprep.subr.bf16.mxu0 %v1594
      %1613 = vmatpush1.bf16.msra.mxu0 %v1593
      %1614 = vmatprep.subr.bf16.mxu0 %v1596
      %1615 = vmatpush1.bf16.msra.mxu0 %v1595
      %1616 = vmatprep.subr.bf16.mxu0 %v1598
      %1617 = vmatpush1.bf16.msra.mxu0 %v1597
      %1618 = vmatprep.subr.bf16.mxu0 0
      %1619 = vmatpush1.bf16.msra.mxu0 0
      %1620 = vmatprep.subr.bf16.mxu0 0
      %1621 = vmatpush1.bf16.msra.mxu0 0
      %1622 = vmatprep.subr.bf16.mxu0 0
      %1623 = vmatpush1.bf16.msra.mxu0 0
      %1624 = vmatprep.subr.bf16.mxu0 0
      %1625 = vmatpush1.bf16.msra.mxu0 0
      %1626 = vmatprep.subr.bf16.mxu0 0
      %1627 = vmatpush1.bf16.msra.mxu0 0
      %1628 = vmatprep.subr.bf16.mxu0 0
      %1629 = vmatpush1.bf16.msra.mxu0 0
      %1630 = vmatprep.subr.bf16.mxu0 0
      %1631 = vmatpush1.bf16.msra.mxu0 0
      %1632 = vmatprep.subr.bf16.mxu0 0
      %1633 = vmatpush1.bf16.msra.mxu0 0
      %1634 = vmatprep.subr.bf16.mxu0 0
      %1635 = vmatpush1.bf16.msra.mxu0 0
      %1636 = vmatprep.subr.bf16.mxu0 0
      %1637 = vmatpush1.bf16.msra.mxu0 0
      %1638 = vmatprep.subr.bf16.mxu0 0
      %1639 = vmatpush1.bf16.msra.mxu0 0
      %1640 = vmatprep.subr.bf16.mxu0 0
      %1641 = vmatpush1.bf16.msra.mxu0 0
      %1642 = vmatprep.mubr.bf16.mxu0 0
      %1643 = vmatmul.mubr.bf16.gmra.mrb[0].mxu0 %v1608
      %v1644 = vpop.f32.mrb[0].mxu0
      %v1645 = vadd.f32 %v1560, %v1644
      %v1646 = vpop.f32.mrb[0].mxu0
      %v1647 = vadd.f32 %v1564, %v1646
      %v1648 = vpop.f32.mrb[0].mxu0
      %v1649 = vadd.f32 %v1560, %v1648
      %v1650 = vpop.f32.mrb[0].mxu0
      %v1651 = vadd.f32 %v1564, %v1650
      %1652 = vdwg.mxu0
      %v1653 = vmul.f32 %v1645, 0.5
      %v1654 = vmul.f32 %v1647, 0.5
      %v1655 = vmul.f32 %v1649, 0.5
      %v1656 = vmul.f32 %v1651, 0.5
      %v1657 = vmul.f32 %v1645, 0.70710677
      %v1658 = vmul.f32 %v1647, 0.70710677
      %v1659 = vmul.f32 %v1649, 0.70710677
      %v1660 = vmul.f32 %v1651, 0.70710677
      %v1661 = verf.f32.pop %v1657
      %v1662 = verf.f32.pop %v1658
      %v1663 = verf.f32.pop %v1659
      %v1664 = verf.f32.pop %v1660
      %v1665 = vadd.f32 %v1661, 1.0
      %v1666 = vadd.f32 %v1662, 1.0
      %v1667 = vadd.f32 %v1663, 1.0
      %v1668 = vadd.f32 %v1664, 1.0
      %v1669 = vmul.f32 %v1653, %v1665
      %v1670 = vmul.f32 %v1654, %v1666
      %v1671 = vmul.f32 %v1655, %v1667
      %v1672 = vmul.f32 %v1656, %v1668
      %v1673 = vpack.c.bf16 %v1671, %v1669
      %v1674 = vpack.c.bf16 %v1672, %v1670
      %v1675 = vld [vmem:[%s15] sm:$0xf]
      %v1676 = vld [vmem:[%s15 + $0x4] sm:$0xf]
      %v1677 = vld [vmem:[%s15 + $0x8] sm:$0xf]
      %v1678 = vld [vmem:[%s15 + $0xc] sm:$0xf]
      %v1679 = vld [vmem:[%s15 + $0x10] sm:$0xf]
      %v1680 = vld [vmem:[%s15 + $0x14] sm:$0xf]
      %v1681 = vld [vmem:[%s15 + $0x18] sm:$0xf]
      %v1682 = vld [vmem:[%s15 + $0x1c] sm:$0xf]
      %v1683 = vld [vmem:[%s15 + $0x20] sm:$0xf]
      %v1684 = vld [vmem:[%s15 + $0x24] sm:$0xf]
      %v1685 = vld [vmem:[%s15 + $0x28] sm:$0xf]
      %v1686 = vld [vmem:[%s15 + $0x2c] sm:$0xf]
      %v1687 = vld [vmem:[%s15 + $0x30] sm:$0xf]
      %v1688 = vld [vmem:[%s15 + $0x34] sm:$0xf]
      %v1689 = vld [vmem:[%s15 + $0x38] sm:$0xf]
      %v1690 = vld [vmem:[%s15 + $0x3c] sm:$0xf]
      %v1691 = vld [vmem:[%s15 + $0x40] sm:$0xf]
      %v1692 = vld [vmem:[%s15 + $0x44] sm:$0xf]
      %v1693 = vld [vmem:[%s15 + $0x48] sm:$0xf]
      %v1694 = vld [vmem:[%s15 + $0x4c] sm:$0xf]
      %v1695 = vld [vmem:[%s15 + $0x50] sm:$0xf]
      %v1696 = vld [vmem:[%s15 + $0x54] sm:$0xf]
      %v1697 = vld [vmem:[%s15 + $0x58] sm:$0xf]
      %v1698 = vld [vmem:[%s15 + $0x5c] sm:$0xf]
      %v1699 = vld [vmem:[%s15 + $0x60] sm:$0xf]
      %v1700 = vld [vmem:[%s15 + $0x64] sm:$0xf]
      %v1701 = vld [vmem:[%s15 + $0x68] sm:$0xf]
      %v1702 = vld [vmem:[%s15 + $0x6c] sm:$0xf]
      %v1703 = vld [vmem:[%s15 + $0x70] sm:$0xf]
      %v1704 = vld [vmem:[%s15 + $0x74] sm:$0xf]
      %v1705 = vld [vmem:[%s15 + $0x78] sm:$0xf]
      %v1706 = vld [vmem:[%s15 + $0x7c] sm:$0xf]
      %v1707 = vld [vmem:[%s16] sm:$0x1]
      %v1709 = vlaneseq
      %v1710 = vshrl.u32 %v1709, 7
      %v1711 = vsub.s32 0, %v1710
      %v1712 = vrot.slane %v1707, %v1711
      %v1746 = vunpack.c.l.b16 %v1675
      %v1747 = vunpack.c.l.b16 %v1676
      %v1748 = vunpack.c.l.b16 %v1677
      %v1749 = vunpack.c.l.b16 %v1678
      %v1750 = vunpack.c.l.b16 %v1679
      %v1751 = vunpack.c.l.b16 %v1680
      %v1752 = vunpack.c.l.b16 %v1681
      %v1753 = vunpack.c.l.b16 %v1682
      %v1754 = vunpack.c.l.b16 %v1683
      %v1755 = vunpack.c.l.b16 %v1684
      %v1756 = vunpack.c.l.b16 %v1685
      %v1757 = vunpack.c.l.b16 %v1686
      %v1758 = vunpack.c.l.b16 %v1687
      %v1759 = vunpack.c.l.b16 %v1688
      %v1760 = vunpack.c.l.b16 %v1689
      %v1761 = vunpack.c.l.b16 %v1690
      %v1762 = vunpack.c.l.b16 %v1691
      %v1763 = vunpack.c.l.b16 %v1692
      %v1764 = vunpack.c.l.b16 %v1693
      %v1765 = vunpack.c.l.b16 %v1694
      %v1766 = vunpack.c.l.b16 %v1695
      %v1767 = vunpack.c.l.b16 %v1696
      %v1768 = vunpack.c.l.b16 %v1697
      %v1769 = vunpack.c.l.b16 %v1698
      %v1770 = vunpack.c.l.b16 %v1699
      %v1771 = vunpack.c.l.b16 %v1700
      %v1772 = vunpack.c.l.b16 %v1701
      %v1773 = vunpack.c.l.b16 %v1702
      %v1774 = vunpack.c.l.b16 %v1703
      %v1775 = vunpack.c.l.b16 %v1704
      %v1776 = vunpack.c.l.b16 %v1705
      %v1777 = vunpack.c.l.b16 %v1706
      %v1778 = vpack.c.b16 %v1747, %v1746
      %v1779 = vpack.c.b16 %v1749, %v1748
      %v1780 = vpack.c.b16 %v1751, %v1750
      %v1781 = vpack.c.b16 %v1753, %v1752
      %v1782 = vpack.c.b16 %v1755, %v1754
      %v1783 = vpack.c.b16 %v1757, %v1756
      %v1784 = vpack.c.b16 %v1759, %v1758
      %v1785 = vpack.c.b16 %v1761, %v1760
      %v1786 = vpack.c.b16 %v1763, %v1762
      %v1787 = vpack.c.b16 %v1765, %v1764
      %v1788 = vpack.c.b16 %v1767, %v1766
      %v1789 = vpack.c.b16 %v1769, %v1768
      %v1790 = vpack.c.b16 %v1771, %v1770
      %v1791 = vpack.c.b16 %v1773, %v1772
      %v1792 = vpack.c.b16 %v1775, %v1774
      %v1793 = vpack.c.b16 %v1777, %v1776
      %1810 = vmatprep.subr.bf16.mxu0 0
      %1811 = vmatpush1.bf16.msra.mxu0 %v1778
      %1812 = vmatprep.subr.bf16.mxu0 0
      %1813 = vmatpush1.bf16.msra.mxu0 %v1779
      %1814 = vmatprep.subr.bf16.mxu0 0
      %1815 = vmatpush1.bf16.msra.mxu0 %v1780
      %1816 = vmatprep.subr.bf16.mxu0 0
      %1817 = vmatpush1.bf16.msra.mxu0 %v1781
      %1818 = vmatprep.subr.bf16.mxu0 0
      %1819 = vmatpush1.bf16.msra.mxu0 %v1782
      %1820 = vmatprep.subr.bf16.mxu0 0
      %1821 = vmatpush1.bf16.msra.mxu0 %v1783
      %1822 = vmatprep.subr.bf16.mxu0 0
      %1823 = vmatpush1.bf16.msra.mxu0 %v1784
      %1824 = vmatprep.subr.bf16.mxu0 0
      %1825 = vmatpush1.bf16.msra.mxu0 %v1785
      %1826 = vmatprep.subr.bf16.mxu0 0
      %1827 = vmatpush1.bf16.msra.mxu0 %v1786
      %1828 = vmatprep.subr.bf16.mxu0 0
      %1829 = vmatpush1.bf16.msra.mxu0 %v1787
      %1830 = vmatprep.subr.bf16.mxu0 0
      %1831 = vmatpush1.bf16.msra.mxu0 %v1788
      %1832 = vmatprep.subr.bf16.mxu0 0
      %1833 = vmatpush1.bf16.msra.mxu0 %v1789
      %1834 = vmatprep.subr.bf16.mxu0 0
      %1835 = vmatpush1.bf16.msra.mxu0 %v1790
      %1836 = vmatprep.subr.bf16.mxu0 0
      %1837 = vmatpush1.bf16.msra.mxu0 %v1791
      %1838 = vmatprep.subr.bf16.mxu0 0
      %1839 = vmatpush1.bf16.msra.mxu0 %v1792
      %1840 = vmatprep.subr.bf16.mxu0 0
      %1841 = vmatpush1.bf16.msra.mxu0 %v1793
      %1842 = vmatprep.mubr.bf16.mxu0 %v1674
      %1843 = vmatmul.mubr.bf16.gmra.mrb[0].mxu0 %v1673
      %v1844 = vpop.f32.mrb[0].mxu0
      %v1845 = vadd.f32 %v1712, %v1844
      %v1846 = vpop.f32.mrb[0].mxu0
      %v1847 = vpop.f32.mrb[0].mxu0
      %v1848 = vadd.f32 %v1712, %v1847
      %v1849 = vpop.f32.mrb[0].mxu0
      %1850 = vdwg.mxu0
      %v1851 = vadd.f32 %v1500, %v1845
      %v1852 = vadd.f32 %v1501, %v1848
      %v1853 = vld [vmem:[%s17] sm:$0x1]
      %v1854 = vld [vmem:[%s18] sm:$0x1]
      %v1855 = vsel %vm610, %v1851, 0.0
      %1856 = vadd.xlane.f32.xlu0 %v1855
      %v1857 = vpop.xlane.xlu0 %1856
      %v1858 = vsel %vm610, %v1852, 0.0
      %1859 = vadd.xlane.f32.xlu0 %v1858
      %v1860 = vpop.xlane.xlu0 %1859
      %v1861 = vmul.f32 %v1857, %v617
      %v1862 = vmul.f32 %v1860, %v617
      %v1863 = vsub.f32 %v1851, %v1861
      %v1864 = vsub.f32 %v1852, %v1862
      %v1865 = vmul.f32 %v1863, %v1863
      %v1866 = vmul.f32 %v1864, %v1864
      %v1867 = vsel %vm610, %v1865, 0.0
      %1868 = vadd.xlane.f32.xlu0 %v1867
      %v1869 = vpop.xlane.xlu0 %1868
      %v1870 = vsel %vm610, %v1866, 0.0
      %1871 = vadd.xlane.f32.xlu0 %v1870
      %v1872 = vpop.xlane.xlu0 %1871
      %v1873 = vmul.f32 %v1869, %v617
      %v1874 = vmul.f32 %v1872, %v617
      %v1875 = vadd.f32 %v1873, 1e-06
      %v1876 = vadd.f32 %v1874, 1e-06
      %v1877 = vrsqrt.pop %v1875
      %v1878 = vrsqrt.pop %v1876
      %v1879 = vmul.f32 %v1863, %v1877
      %v1880 = vmul.f32 %v1864, %v1878
      %v1882 = vlaneseq
      %v1883 = vshrl.u32 %v1882, 7
      %v1884 = vsub.s32 0, %v1883
      %v1885 = vrot.slane %v1853, %v1884
      %v1887 = vmul.f32 %v1879, %v1885
      %v1888 = vmul.f32 %v1880, %v1885
      %v1890 = vlaneseq
      %v1891 = vshrl.u32 %v1890, 7
      %v1892 = vsub.s32 0, %v1891
      %v1893 = vrot.slane %v1854, %v1892
      %v1895 = vadd.f32 %v1887, %v1893
      %v1896 = vadd.f32 %v1888, %v1893
      %v1897 = vpack.c.bf16 %v1896, %v1895
      %v1899 = vunpack.c.l.b16 %v1897
      %v1900 = vunpack.c.h.b16 %v1897
      %v1901 = vpack.c.b16 %v1899, %v1899
      %v1902 = vpack.c.b16 %v1900, %v1900
      %vm1905 = vcmask 519168
      %1906 = vst.msk [vmem:[%s602] sm:$0xf] %vm1905, %v1901
      %1907 = vst.msk [vmem:[%s602 + $0x4] sm:$0xf] %vm1905, %v1902
      %p1908 = scmp.lt.s32.totalorder %s30, 1
      %s1909 = scalar_select %p1908, %s30, 1
      %s1910 = smul.addr %s1909, 2
      %s1911 = smul.addr %s1910, 4
      %s1912 = scalar_lea.vmem %s19, %s1911
      // Predicated region
      $region97: #{_lambda_.5} parent=95 // pred_check
        %p1913 = pneg %p452
      $region98: #{_lambda_.5} parent=95 // pred_check_branch
        %1915 = sbr.rel (%p1913) target = $region100
      $region99: #{_lambda_.5} parent=95 // pred_region
        _
      $region100: #{_lambda_.5} parent=95 // pred_fallthru
        _
    $region96: #{_lambda_.5} parent=5 // pred_fallthru
      _
    %p1916 = scmp.le.s32.totalorder 2, %s25
    // Predicated region
    $region101: #{_lambda_.5} parent=5 // pred_check
      %p1917 = pneg %p1916
    $region102: #{_lambda_.5} parent=5 // pred_check_branch
      %1919 = sbr.rel (%p1917) target = $region104
    $region103: #{_lambda_.5} parent=5 // pred_region
      %s1920 = ssub.s32 %s25, 2
      // Predicated region
      $region105: #{_lambda_.5} parent=103 // pred_check
        %p1921 = pneg %p458
      $region106: #{_lambda_.5} parent=103 // pred_check_branch
        %1923 = sbr.rel (%p1921) target = $region108
      $region107: #{_lambda_.5} parent=103 // pred_region
        %p1924 = scmp.lt.s32.totalorder %s31, 1
        %s1925 = scalar_select %p1924, %s31, 1
        %s1926 = smul.addr %s1925, 2
        %s1927 = smul.addr %s1926, 4
        %s1928 = scalar_lea.vmem %s19, %s1927
      $region108: #{_lambda_.5} parent=103 // pred_fallthru
        _
    $region104: #{_lambda_.5} parent=5 // pred_fallthru
      _
  $region6: #{_lambda_.5} parent=0 // loop_footer
    %s29 = sadd.s32 1, %s25
  $region7: #{_lambda_.5} parent=0 // loop_footer_branch
    %24 = sbr.rel target = $region3
  $region8: #{_lambda_.5} parent=0 // loop_exit
    _

</llo_original>
